<compile_context>
chip_gen: v7x
topology: tpu7x:2x2x1
jax: 0.10.0
libtpu: 0.0.40
codegen_flags: <defaults>
</compile_context>

<pallas_src>
import functools

import jax
import jax.numpy as jnp
from jax import lax
from jax.experimental import pallas as pl
from jax.experimental.pallas import tpu as pltpu


def _decoder_kernel(enc_ref, yh_ref,
                    aw1_ref, ab1_ref, aw2r_ref,
                    fcw_ref, fcb_ref,
                    wih_ref, whh_ref, lb_ref,
                    ffhT_ref, ffcT_ref, ffb_ref,
                    out_ref,
                    encp_ref, gpre_ref,
                    *, B):
    TB, E = enc_ref.shape
    T = TB // B
    O = yh_ref.shape[1]
    D = whh_ref.shape[0]
    single_out = (O == 1)

    # ---------------- hoisted parameter loads / one-time folds ----------------
    aw1 = aw1_ref[...]                        # (2D+E, E)
    aw1_hc = aw1[:2 * D, :]                   # (2D, E)  acts on the [h|c] carry
    aw1_e = aw1[2 * D:, :]                    # (E, E)
    ab1 = ab1_ref[...]                        # (1, E)
    aw2_row = aw2r_ref[...]                   # (1, E)   pre-transposed attn-score row

    fcw = fcw_ref[...]                        # (E+O, O)
    fcw_ctx = fcw[:E, :]                      # (E, O)
    fcw_y = fcw[E:, :]                        # (O, O)
    fcb = fcb_ref[...]                        # (1, O)
    wih = wih_ref[...]                        # (O, 4D)
    whh = whh_ref[...]                        # (D, 4D)
    lb = lb_ref[...]                          # (1, 4D)

    # Fold fc into the LSTM input weights (exact in real arithmetic):
    #   gates = (ctx@fcw_ctx + yh@fcw_y + fcb)@wih + h@whh + lb
    #         =  ctx@W_ctx   + yh@W_y   + b'    + h@whh
    w_ctx = jnp.dot(fcw_ctx, wih, preferred_element_type=jnp.float32)   # (E, 4D)
    w_y = jnp.dot(fcw_y, wih, preferred_element_type=jnp.float32)       # (O, 4D)
    b_g = jnp.dot(fcb, wih, preferred_element_type=jnp.float32) + lb    # (1, 4D)

    ffw_hT = ffhT_ref[...]                    # (O, D)  fc_final hidden rows (transposed)
    ffw_cT = ffcT_ref[...]                    # (O, E)  fc_final context rows (transposed)
    ffb = ffb_ref[...]                        # (1, O)

    # -------- recurrence-independent precompute, batched over all T ----------
    # a1_pre = enc @ aw1_e + ab1 ; gates_pre = yh @ W_y + b'   (off the serial path)
    encp_ref[...] = (jnp.dot(enc_ref[...], aw1_e,
                             preferred_element_type=jnp.float32) + ab1)      # (T*B, E)
    gpre_ref[...] = (jnp.dot(yh_ref[...], w_y,
                             preferred_element_type=jnp.float32) + b_g)      # (T*B, 4D)

    lane_ids = lax.broadcasted_iota(jnp.int32, (B, T), 1) if single_out else None

    # ------------------------------ recurrence --------------------------------
    def step(t, carry):
        if single_out:
            hc, out_acc = carry               # hc: (B, 2D) register-resident
        else:
            hc = carry
        row0 = pl.multiple_of(t * B, B)
        enc_t = enc_ref[pl.ds(row0, B), :]    # (B, E)
        a1_pre = encp_ref[pl.ds(row0, B), :]  # (B, E)
        g_pre = gpre_ref[pl.ds(row0, B), :]   # (B, 4D)

        # attention hidden: single matmul on the [h|c] carry + precomputed enc part
        a1 = jnp.tanh(jnp.dot(hc, aw1_hc, preferred_element_type=jnp.float32) + a1_pre)
        # score: VPU multiply + lane reduce (ab2 dropped - cancels under softmax)
        score = jnp.sum(a1 * aw2_row, axis=1, keepdims=True)                 # (B, 1)

        # softmax across the B axis (reference: view(1, B), softmax dim=1)
        m = jnp.max(score, axis=0, keepdims=True)
        p = jnp.exp(score - m)
        p = p / jnp.sum(p, axis=0, keepdims=True)

        # context = attn_weights @ input_encoded[t]   -> (1, E)
        ctx = jnp.sum(p * enc_t, axis=0, keepdims=True)

        # LSTM gates (fc folded): one ctx matmul + one recurrent matmul
        h = hc[:, :D]
        c = hc[:, D:]
        gates = (g_pre
                 + jnp.dot(ctx, w_ctx, preferred_element_type=jnp.float32)
                 + jnp.dot(h, whh, preferred_element_type=jnp.float32))      # (B, 4D)
        sig = jax.nn.sigmoid(gates)                                          # full width
        g_g = jnp.tanh(gates[:, 2 * D:3 * D])                                # tanh on g only
        i_g = sig[:, :D]
        f_g = sig[:, D:2 * D]
        o_g = sig[:, 3 * D:]
        c_new = f_g * c + i_g * g_g
        h_new = o_g * jnp.tanh(c_new)
        hc_new = jnp.concatenate([h_new, c_new], axis=1)                     # (B, 2D)

        # final_output[t] = h_new @ ffw_h + ctx @ ffw_ctx + ffb
        if single_out:
            o_h = jnp.sum(h_new * ffw_hT, axis=1, keepdims=True)             # (B, 1)
            o_c = jnp.sum(ctx * ffw_cT, axis=1, keepdims=True) + ffb         # (1, 1)
            out_t = o_h + o_c
            out_acc = jnp.where(lane_ids == t, out_t, out_acc)               # column t
            return hc_new, out_acc
        else:
            o_h = lax.dot_general(h_new, ffw_hT, (((1,), (1,)), ((), ())),
                                  preferred_element_type=jnp.float32)        # (B, O)
            o_c = lax.dot_general(ctx, ffw_cT, (((1,), (1,)), ((), ())),
                                  preferred_element_type=jnp.float32) + ffb  # (1, O)
            out_ref[t] = o_h + o_c
            return hc_new

    hc0 = jnp.zeros((B, 2 * D), jnp.float32)
    if single_out:
        out0 = jnp.zeros((B, T), jnp.float32)
        _, out_fin = lax.fori_loop(0, T, step, (hc0, out0), unroll=True)
        out_ref[...] = out_fin                # single lane-dense store after the loop
    else:
        lax.fori_loop(0, T, step, hc0, unroll=True)


def decoder_pallas(input_encoded, y_history, params):
    T, B, E = input_encoded.shape
    O = params["fcw"].shape[1]
    D = params["whh"].shape[0]

    # Layout plumbing only (no compute): flatten time into the sublane axis and
    # pre-transpose tiny (., O) weight blocks into rows.
    enc2 = input_encoded.reshape(T * B, E)
    yh2 = y_history.reshape(T * B, O)
    aw2_row = params["aw2"].reshape(1, E)
    ffw_hT = params["ffw"][:D, :].T            # (O, D)
    ffw_cT = params["ffw"][D:, :].T            # (O, E)

    vmem = pl.BlockSpec(memory_space=pltpu.MemorySpace.VMEM)
    single_out = (O == 1)
    out_shape = (jax.ShapeDtypeStruct((B, T), jnp.float32) if single_out
                 else jax.ShapeDtypeStruct((T, B, O), jnp.float32))

    out = pl.pallas_call(
        functools.partial(_decoder_kernel, B=B),
        out_shape=out_shape,
        in_specs=[vmem] * 13,
        out_specs=vmem,
        scratch_shapes=[pltpu.VMEM((T * B, E), jnp.float32),
                        pltpu.VMEM((T * B, 4 * D), jnp.float32)],
    )(enc2, yh2,
      params["aw1"], params["ab1"], aw2_row,
      params["fcw"], params["fcb"],
      params["wih"], params["whh"], params["lb"],
      ffw_hT, ffw_cT, params["ffb"])

    if single_out:
        return out.T[:, :, None]               # (T, B, 1)
    return out


def decoder_reference(input_encoded, y_history, params):
    """Pure-JAX reference mirroring the PyTorch forward, for validation."""
    T, B, E = input_encoded.shape
    D = params["whh"].shape[0]
    h = jnp.zeros((B, D), jnp.float32)
    c = jnp.zeros((B, D), jnp.float32)
    outs = []
    for t in range(T):
        x = jnp.concatenate([h, c, input_encoded[t]], axis=1)
        a1 = jnp.tanh(x @ params["aw1"] + params["ab1"])
        s = a1 @ params["aw2"] + params["ab2"]                      # (B, 1)
        p = jax.nn.softmax(s.reshape(1, B), axis=1)                 # softmax over B
        ctx = p @ input_encoded[t]                                  # (1, E)
        ctx_rep = jnp.broadcast_to(ctx, (B, E))
        y_tilde = (jnp.concatenate([ctx_rep, y_history[t]], axis=1)
                   @ params["fcw"] + params["fcb"])
        gates = y_tilde @ params["wih"] + h @ params["whh"] + params["lb"]
        i_g = jax.nn.sigmoid(gates[:, :D])
        f_g = jax.nn.sigmoid(gates[:, D:2 * D])
        g_g = jnp.tanh(gates[:, 2 * D:3 * D])
        o_g = jax.nn.sigmoid(gates[:, 3 * D:])
        c = f_g * c + i_g * g_g
        h = o_g * jnp.tanh(c)
        out = jnp.concatenate([h, ctx_rep], axis=1) @ params["ffw"] + params["ffb"]
        outs.append(out)
    return jnp.stack(outs, axis=0)


def init_params(key, encoder_hidden_size, decoder_hidden_size, out_feats):
    E, D, O = encoder_hidden_size, decoder_hidden_size, out_feats
    ks = jax.random.split(key, 11)
    scale = 0.1
    return {
        # attn_layer: Linear(2D+E, E) -> Tanh -> Linear(E, 1)
        "aw1": scale * jax.random.normal(ks[0], (2 * D + E, E), jnp.float32),
        "ab1": scale * jax.random.normal(ks[1], (1, E), jnp.float32),
        "aw2": scale * jax.random.normal(ks[2], (E, 1), jnp.float32),
        "ab2": scale * jax.random.normal(ks[3], (1, 1), jnp.float32),
        # fc: Linear(E + out_feats, out_feats), weight ~ normal() per reference
        "fcw": jax.random.normal(ks[4], (E + O, O), jnp.float32),
        "fcb": scale * jax.random.normal(ks[5], (1, O), jnp.float32),
        # lstm: W_ih (O, 4D), W_hh (D, 4D), combined bias (1, 4D); gate order i,f,g,o
        "wih": scale * jax.random.normal(ks[6], (O, 4 * D), jnp.float32),
        "whh": scale * jax.random.normal(ks[7], (D, 4 * D), jnp.float32),
        "lb":  scale * jax.random.normal(ks[8], (1, 4 * D), jnp.float32),
        # fc_final: Linear(D + E, out_feats)
        "ffw": scale * jax.random.normal(ks[9], (D + E, O), jnp.float32),
        "ffb": scale * jax.random.normal(ks[10], (1, O), jnp.float32),
    }


if __name__ == "__main__":
    T_steps = 8          # time steps (recurrence length)
    B = 8                # input_encoded.shape[1] ("batch" axis of the decoder state)
    E = 16               # encoder_hidden_size
    D = 32               # decoder_hidden_size
    OUT = 1              # out_feats

    key = jax.random.PRNGKey(0)
    kp, ke, ky = jax.random.split(key, 3)
    params = init_params(kp, E, D, OUT)

    input_encoded = jax.random.normal(ke, (T_steps, B, E), jnp.float32)
    y_history = jax.random.normal(ky, (T_steps, B, OUT), jnp.float32)

    out = decoder_pallas(input_encoded, y_history, params)
    out = jax.block_until_ready(out)

    ref = decoder_reference(input_encoded, y_history, params)
    assert out.shape == (T_steps, B, OUT)
    assert jnp.allclose(out, ref, rtol=2e-3, atol=2e-3), \
        f"max abs err {jnp.max(jnp.abs(out - ref))}"

    print("KERNEL_OK")
</pallas_src>

<mosaic_0001>
module attributes {stable_mosaic.version = 11 : i64} {
  func.func @_decoder_kernel(%arg0: memref<64x16xf32, #tpu.memory_space<vmem>>, %arg1: memref<64x1xf32, #tpu.memory_space<vmem>>, %arg2: memref<80x16xf32, #tpu.memory_space<vmem>>, %arg3: memref<1x16xf32, #tpu.memory_space<vmem>>, %arg4: memref<1x16xf32, #tpu.memory_space<vmem>>, %arg5: memref<17x1xf32, #tpu.memory_space<vmem>>, %arg6: memref<1x1xf32, #tpu.memory_space<vmem>>, %arg7: memref<1x128xf32, #tpu.memory_space<vmem>>, %arg8: memref<32x128xf32, #tpu.memory_space<vmem>>, %arg9: memref<1x128xf32, #tpu.memory_space<vmem>>, %arg10: memref<1x32xf32, #tpu.memory_space<vmem>>, %arg11: memref<1x16xf32, #tpu.memory_space<vmem>>, %arg12: memref<1x1xf32, #tpu.memory_space<vmem>>, %arg13: memref<8x8xf32, #tpu.memory_space<vmem>>, %arg14: memref<64x16xf32, #tpu.memory_space<vmem>>, %arg15: memref<64x128xf32, #tpu.memory_space<vmem>>) attributes {dimension_semantics = [], scalar_prefetch = 0 : i64, scratch_operands = 2 : i64, tpu.core_type = #tpu.core_type<tc>} {
    %c0 = arith.constant 0 : index
    %c0_0 = arith.constant 0 : index
    %0 = vector.load %arg2[%c0, %c0_0] : memref<80x16xf32, #tpu.memory_space<vmem>>, vector<80x16xf32>
    %1 = vector.extract_strided_slice %0 {offsets = [0, 0], sizes = [64, 16], strides = [1, 1]} : vector<80x16xf32> to vector<64x16xf32>
    %2 = vector.extract_strided_slice %0 {offsets = [64, 0], sizes = [16, 16], strides = [1, 1]} : vector<80x16xf32> to vector<16x16xf32>
    %c0_1 = arith.constant 0 : index
    %c0_2 = arith.constant 0 : index
    %3 = vector.load %arg3[%c0_1, %c0_2] : memref<1x16xf32, #tpu.memory_space<vmem>>, vector<1x16xf32>
    %c0_3 = arith.constant 0 : index
    %c0_4 = arith.constant 0 : index
    %4 = vector.load %arg4[%c0_3, %c0_4] : memref<1x16xf32, #tpu.memory_space<vmem>>, vector<1x16xf32>
    %c0_5 = arith.constant 0 : index
    %c0_6 = arith.constant 0 : index
    %5 = vector.load %arg5[%c0_5, %c0_6] : memref<17x1xf32, #tpu.memory_space<vmem>>, vector<17x1xf32>
    %6 = vector.extract_strided_slice %5 {offsets = [0, 0], sizes = [16, 1], strides = [1, 1]} : vector<17x1xf32> to vector<16x1xf32>
    %7 = vector.extract_strided_slice %5 {offsets = [16, 0], sizes = [1, 1], strides = [1, 1]} : vector<17x1xf32> to vector<1x1xf32>
    %c0_7 = arith.constant 0 : index
    %c0_8 = arith.constant 0 : index
    %8 = vector.load %arg6[%c0_7, %c0_8] : memref<1x1xf32, #tpu.memory_space<vmem>>, vector<1x1xf32>
    %c0_9 = arith.constant 0 : index
    %c0_10 = arith.constant 0 : index
    %9 = vector.load %arg7[%c0_9, %c0_10] : memref<1x128xf32, #tpu.memory_space<vmem>>, vector<1x128xf32>
    %c0_11 = arith.constant 0 : index
    %c0_12 = arith.constant 0 : index
    %10 = vector.load %arg8[%c0_11, %c0_12] : memref<32x128xf32, #tpu.memory_space<vmem>>, vector<32x128xf32>
    %c0_13 = arith.constant 0 : index
    %c0_14 = arith.constant 0 : index
    %11 = vector.load %arg9[%c0_13, %c0_14] : memref<1x128xf32, #tpu.memory_space<vmem>>, vector<1x128xf32>
    %cst = arith.constant dense<0.000000e+00> : vector<16x128xf32>
    %12 = tpu.matmul %6, %9, %cst {dimension_numbers = #tpu.dot_dimension_numbers<[1], [0], [0], [1], [0, 0, 1, 1], [], []>} : vector<16x1xf32>, vector<1x128xf32>, vector<16x128xf32> -> vector<16x128xf32>
    %cst_15 = arith.constant dense<0.000000e+00> : vector<1x128xf32>
    %13 = tpu.matmul %7, %9, %cst_15 {dimension_numbers = #tpu.dot_dimension_numbers<[1], [0], [0], [1], [0, 0, 1, 1], [], []>} : vector<1x1xf32>, vector<1x128xf32>, vector<1x128xf32> -> vector<1x128xf32>
    %cst_16 = arith.constant dense<0.000000e+00> : vector<1x128xf32>
    %14 = tpu.matmul %8, %9, %cst_16 {dimension_numbers = #tpu.dot_dimension_numbers<[1], [0], [0], [1], [0, 0, 1, 1], [], []>} : vector<1x1xf32>, vector<1x128xf32>, vector<1x128xf32> -> vector<1x128xf32>
    %15 = arith.addf %14, %11 : vector<1x128xf32>
    %c0_17 = arith.constant 0 : index
    %c0_18 = arith.constant 0 : index
    %16 = vector.load %arg10[%c0_17, %c0_18] : memref<1x32xf32, #tpu.memory_space<vmem>>, vector<1x32xf32>
    %c0_19 = arith.constant 0 : index
    %c0_20 = arith.constant 0 : index
    %17 = vector.load %arg11[%c0_19, %c0_20] : memref<1x16xf32, #tpu.memory_space<vmem>>, vector<1x16xf32>
    %c0_21 = arith.constant 0 : index
    %c0_22 = arith.constant 0 : index
    %18 = vector.load %arg12[%c0_21, %c0_22] : memref<1x1xf32, #tpu.memory_space<vmem>>, vector<1x1xf32>
    %c0_23 = arith.constant 0 : index
    %c0_24 = arith.constant 0 : index
    %19 = vector.load %arg0[%c0_23, %c0_24] : memref<64x16xf32, #tpu.memory_space<vmem>>, vector<64x16xf32>
    %cst_25 = arith.constant dense<0.000000e+00> : vector<64x16xf32>
    %20 = tpu.matmul %19, %2, %cst_25 {dimension_numbers = #tpu.dot_dimension_numbers<[1], [0], [0], [1], [0, 0, 1, 1], [], []>} : vector<64x16xf32>, vector<16x16xf32>, vector<64x16xf32> -> vector<64x16xf32>
    %21 = vector.broadcast %3 : vector<1x16xf32> to vector<64x16xf32>
    %22 = arith.addf %20, %21 : vector<64x16xf32>
    %c0_26 = arith.constant 0 : index
    %c0_27 = arith.constant 0 : index
    %23 = vector.load %arg14[%c0_26, %c0_27] : memref<64x16xf32, #tpu.memory_space<vmem>>, vector<64x16xf32>
    tpu.vector_store %arg14[%c0_26, %c0_27], %22 {strides = array<i32>} : memref<64x16xf32, #tpu.memory_space<vmem>>, vector<64x16xf32>,
    %c0_28 = arith.constant 0 : index
    %c0_29 = arith.constant 0 : index
    %24 = vector.load %arg1[%c0_28, %c0_29] : memref<64x1xf32, #tpu.memory_space<vmem>>, vector<64x1xf32>
    %cst_30 = arith.constant dense<0.000000e+00> : vector<64x128xf32>
    %25 = tpu.matmul %24, %13, %cst_30 {dimension_numbers = #tpu.dot_dimension_numbers<[1], [0], [0], [1], [0, 0, 1, 1], [], []>} : vector<64x1xf32>, vector<1x128xf32>, vector<64x128xf32> -> vector<64x128xf32>
    %26 = vector.broadcast %15 : vector<1x128xf32> to vector<64x128xf32>
    %27 = arith.addf %25, %26 : vector<64x128xf32>
    %c0_31 = arith.constant 0 : index
    %c0_32 = arith.constant 0 : index
    %28 = vector.load %arg15[%c0_31, %c0_32] : memref<64x128xf32, #tpu.memory_space<vmem>>, vector<64x128xf32>
    tpu.vector_store %arg15[%c0_31, %c0_32], %27 {strides = array<i32>} : memref<64x128xf32, #tpu.memory_space<vmem>>, vector<64x128xf32>,
    %29 = tpu.iota {dimensions = array<i32: 1>} : vector<8x8xi32>
    %cst_33 = arith.constant 0.000000e+00 : f32
    %30 = vector.broadcast %cst_33 : f32 to vector<8x64xf32>
    %cst_34 = arith.constant 0.000000e+00 : f32
    %31 = vector.broadcast %cst_34 : f32 to vector<8x8xf32>
    %c0_i32 = arith.constant 0 : i32
    %c8_i32 = arith.constant 8 : i32
    %32 = arith.muli %c0_i32, %c8_i32 : i32
    %33 = tpu.assume_multiple %32, 8 : i32
    %34 = arith.index_cast %33 : i32 to index
    %c0_35 = arith.constant 0 : index
    %35 = vector.load %arg0[%34, %c0_35] : memref<64x16xf32, #tpu.memory_space<vmem>>, vector<8x16xf32>
    %36 = arith.index_cast %33 : i32 to index
    %c0_36 = arith.constant 0 : index
    %37 = vector.load %arg14[%36, %c0_36] : memref<64x16xf32, #tpu.memory_space<vmem>>, vector<8x16xf32>
    %38 = arith.index_cast %33 : i32 to index
    %c0_37 = arith.constant 0 : index
    %39 = vector.load %arg15[%38, %c0_37] : memref<64x128xf32, #tpu.memory_space<vmem>>, vector<8x128xf32>
    %cst_38 = arith.constant dense<0.000000e+00> : vector<8x16xf32>
    %40 = tpu.matmul %30, %1, %cst_38 {dimension_numbers = #tpu.dot_dimension_numbers<[1], [0], [0], [1], [0, 0, 1, 1], [], []>} : vector<8x64xf32>, vector<64x16xf32>, vector<8x16xf32> -> vector<8x16xf32>
    %41 = arith.addf %40, %37 : vector<8x16xf32>
    %42 = math.tanh %41 : vector<8x16xf32>
    %43 = vector.broadcast %4 : vector<1x16xf32> to vector<8x16xf32>
    %44 = arith.mulf %42, %43 : vector<8x16xf32>
    %cst_39 = arith.constant dense<0.000000e+00> : vector<8xf32>
    %45 = vector.multi_reduction <add>, %44, %cst_39 [1] : vector<8x16xf32> to vector<8xf32>
    %46 = vector.shape_cast %45 : vector<8xf32> to vector<8x1xf32>
    %cst_40 = arith.constant dense<0xFF800000> : vector<1xf32>
    %47 = vector.multi_reduction <maximumf>, %46, %cst_40 [0] : vector<8x1xf32> to vector<1xf32>
    %48 = vector.shape_cast %47 : vector<1xf32> to vector<1x1xf32>
    %49 = vector.broadcast %48 : vector<1x1xf32> to vector<8x1xf32>
    %50 = arith.subf %46, %49 : vector<8x1xf32>
    %51 = math.exp %50 : vector<8x1xf32>
    %cst_41 = arith.constant dense<0.000000e+00> : vector<1xf32>
    %52 = vector.multi_reduction <add>, %51, %cst_41 [0] : vector<8x1xf32> to vector<1xf32>
    %53 = vector.shape_cast %52 : vector<1xf32> to vector<1x1xf32>
    %54 = vector.broadcast %53 : vector<1x1xf32> to vector<8x1xf32>
    %55 = arith.divf %51, %54 : vector<8x1xf32>
    %56 = vector.broadcast %55 : vector<8x1xf32> to vector<8x16xf32>
    %57 = arith.mulf %56, %35 : vector<8x16xf32>
    %cst_42 = arith.constant dense<0.000000e+00> : vector<16xf32>
    %58 = vector.multi_reduction <add>, %57, %cst_42 [0] : vector<8x16xf32> to vector<16xf32>
    %59 = vector.shape_cast %58 : vector<16xf32> to vector<1x16xf32>
    %60 = vector.extract_strided_slice %30 {offsets = [0, 0], sizes = [8, 32], strides = [1, 1]} : vector<8x64xf32> to vector<8x32xf32>
    %61 = vector.extract_strided_slice %30 {offsets = [0, 32], sizes = [8, 32], strides = [1, 1]} : vector<8x64xf32> to vector<8x32xf32>
    %cst_43 = arith.constant dense<0.000000e+00> : vector<1x128xf32>
    %62 = tpu.matmul %59, %12, %cst_43 {dimension_numbers = #tpu.dot_dimension_numbers<[1], [0], [0], [1], [0, 0, 1, 1], [], []>} : vector<1x16xf32>, vector<16x128xf32>, vector<1x128xf32> -> vector<1x128xf32>
    %63 = vector.broadcast %62 : vector<1x128xf32> to vector<8x128xf32>
    %64 = arith.addf %39, %63 : vector<8x128xf32>
    %cst_44 = arith.constant dense<0.000000e+00> : vector<8x128xf32>
    %65 = tpu.matmul %60, %10, %cst_44 {dimension_numbers = #tpu.dot_dimension_numbers<[1], [0], [0], [1], [0, 0, 1, 1], [], []>} : vector<8x32xf32>, vector<32x128xf32>, vector<8x128xf32> -> vector<8x128xf32>
    %66 = arith.addf %64, %65 : vector<8x128xf32>
    %67 = arith.negf %66 : vector<8x128xf32>
    %68 = math.exp %67 : vector<8x128xf32>
    %cst_45 = arith.constant 1.000000e+00 : f32
    %69 = vector.broadcast %cst_45 : f32 to vector<8x128xf32>
    %70 = arith.addf %69, %68 : vector<8x128xf32>
    %71 = arith.divf %69, %70 : vector<8x128xf32>
    %72 = vector.extract_strided_slice %66 {offsets = [0, 64], sizes = [8, 32], strides = [1, 1]} : vector<8x128xf32> to vector<8x32xf32>
    %73 = math.tanh %72 : vector<8x32xf32>
    %74 = vector.extract_strided_slice %71 {offsets = [0, 0], sizes = [8, 32], strides = [1, 1]} : vector<8x128xf32> to vector<8x32xf32>
    %75 = vector.extract_strided_slice %71 {offsets = [0, 32], sizes = [8, 32], strides = [1, 1]} : vector<8x128xf32> to vector<8x32xf32>
    %76 = vector.extract_strided_slice %71 {offsets = [0, 96], sizes = [8, 32], strides = [1, 1]} : vector<8x128xf32> to vector<8x32xf32>
    %77 = arith.mulf %75, %61 : vector<8x32xf32>
    %78 = arith.mulf %74, %73 : vector<8x32xf32>
    %79 = arith.addf %77, %78 : vector<8x32xf32>
    %80 = math.tanh %79 : vector<8x32xf32>
    %81 = arith.mulf %76, %80 : vector<8x32xf32>
    %82 = tpu.concatenate %81, %79 in 1 : vector<8x32xf32>, vector<8x32xf32> -> vector<8x64xf32>
    %83 = vector.broadcast %16 : vector<1x32xf32> to vector<8x32xf32>
    %84 = arith.mulf %81, %83 : vector<8x32xf32>
    %cst_46 = arith.constant dense<0.000000e+00> : vector<8xf32>
    %85 = vector.multi_reduction <add>, %84, %cst_46 [1] : vector<8x32xf32> to vector<8xf32>
    %86 = vector.shape_cast %85 : vector<8xf32> to vector<8x1xf32>
    %87 = arith.mulf %59, %17 : vector<1x16xf32>
    %cst_47 = arith.constant dense<0.000000e+00> : vector<1xf32>
    %88 = vector.multi_reduction <add>, %87, %cst_47 [1] : vector<1x16xf32> to vector<1xf32>
    %89 = vector.shape_cast %88 : vector<1xf32> to vector<1x1xf32>
    %90 = arith.addf %89, %18 : vector<1x1xf32>
    %91 = vector.broadcast %90 : vector<1x1xf32> to vector<8x1xf32>
    %92 = arith.addf %86, %91 : vector<8x1xf32>
    %93 = vector.broadcast %c0_i32 : i32 to vector<8x8xi32>
    %94 = arith.cmpi eq, %29, %93 : vector<8x8xi32>
    %95 = vector.shape_cast %92 : vector<8x1xf32> to vector<8x1xf32>
    %96 = vector.broadcast %95 : vector<8x1xf32> to vector<8x8xf32>
    %97 = arith.select %94, %96, %31 : vector<8x8xi1>, vector<8x8xf32>
    %c1_i32 = arith.constant 1 : i32
    %c8_i32_48 = arith.constant 8 : i32
    %98 = arith.muli %c1_i32, %c8_i32_48 : i32
    %99 = tpu.assume_multiple %98, 8 : i32
    %100 = arith.index_cast %99 : i32 to index
    %c0_49 = arith.constant 0 : index
    %101 = vector.load %arg0[%100, %c0_49] : memref<64x16xf32, #tpu.memory_space<vmem>>, vector<8x16xf32>
    %102 = arith.index_cast %99 : i32 to index
    %c0_50 = arith.constant 0 : index
    %103 = vector.load %arg14[%102, %c0_50] : memref<64x16xf32, #tpu.memory_space<vmem>>, vector<8x16xf32>
    %104 = arith.index_cast %99 : i32 to index
    %c0_51 = arith.constant 0 : index
    %105 = vector.load %arg15[%104, %c0_51] : memref<64x128xf32, #tpu.memory_space<vmem>>, vector<8x128xf32>
    %cst_52 = arith.constant dense<0.000000e+00> : vector<8x16xf32>
    %106 = tpu.matmul %82, %1, %cst_52 {dimension_numbers = #tpu.dot_dimension_numbers<[1], [0], [0], [1], [0, 0, 1, 1], [], []>} : vector<8x64xf32>, vector<64x16xf32>, vector<8x16xf32> -> vector<8x16xf32>
    %107 = arith.addf %106, %103 : vector<8x16xf32>
    %108 = math.tanh %107 : vector<8x16xf32>
    %109 = vector.broadcast %4 : vector<1x16xf32> to vector<8x16xf32>
    %110 = arith.mulf %108, %109 : vector<8x16xf32>
    %cst_53 = arith.constant dense<0.000000e+00> : vector<8xf32>
    %111 = vector.multi_reduction <add>, %110, %cst_53 [1] : vector<8x16xf32> to vector<8xf32>
    %112 = vector.shape_cast %111 : vector<8xf32> to vector<8x1xf32>
    %cst_54 = arith.constant dense<0xFF800000> : vector<1xf32>
    %113 = vector.multi_reduction <maximumf>, %112, %cst_54 [0] : vector<8x1xf32> to vector<1xf32>
    %114 = vector.shape_cast %113 : vector<1xf32> to vector<1x1xf32>
    %115 = vector.broadcast %114 : vector<1x1xf32> to vector<8x1xf32>
    %116 = arith.subf %112, %115 : vector<8x1xf32>
    %117 = math.exp %116 : vector<8x1xf32>
    %cst_55 = arith.constant dense<0.000000e+00> : vector<1xf32>
    %118 = vector.multi_reduction <add>, %117, %cst_55 [0] : vector<8x1xf32> to vector<1xf32>
    %119 = vector.shape_cast %118 : vector<1xf32> to vector<1x1xf32>
    %120 = vector.broadcast %119 : vector<1x1xf32> to vector<8x1xf32>
    %121 = arith.divf %117, %120 : vector<8x1xf32>
    %122 = vector.broadcast %121 : vector<8x1xf32> to vector<8x16xf32>
    %123 = arith.mulf %122, %101 : vector<8x16xf32>
    %cst_56 = arith.constant dense<0.000000e+00> : vector<16xf32>
    %124 = vector.multi_reduction <add>, %123, %cst_56 [0] : vector<8x16xf32> to vector<16xf32>
    %125 = vector.shape_cast %124 : vector<16xf32> to vector<1x16xf32>
    %126 = vector.extract_strided_slice %82 {offsets = [0, 0], sizes = [8, 32], strides = [1, 1]} : vector<8x64xf32> to vector<8x32xf32>
    %127 = vector.extract_strided_slice %82 {offsets = [0, 32], sizes = [8, 32], strides = [1, 1]} : vector<8x64xf32> to vector<8x32xf32>
    %cst_57 = arith.constant dense<0.000000e+00> : vector<1x128xf32>
    %128 = tpu.matmul %125, %12, %cst_57 {dimension_numbers = #tpu.dot_dimension_numbers<[1], [0], [0], [1], [0, 0, 1, 1], [], []>} : vector<1x16xf32>, vector<16x128xf32>, vector<1x128xf32> -> vector<1x128xf32>
    %129 = vector.broadcast %128 : vector<1x128xf32> to vector<8x128xf32>
    %130 = arith.addf %105, %129 : vector<8x128xf32>
    %cst_58 = arith.constant dense<0.000000e+00> : vector<8x128xf32>
    %131 = tpu.matmul %126, %10, %cst_58 {dimension_numbers = #tpu.dot_dimension_numbers<[1], [0], [0], [1], [0, 0, 1, 1], [], []>} : vector<8x32xf32>, vector<32x128xf32>, vector<8x128xf32> -> vector<8x128xf32>
    %132 = arith.addf %130, %131 : vector<8x128xf32>
    %133 = arith.negf %132 : vector<8x128xf32>
    %134 = math.exp %133 : vector<8x128xf32>
    %cst_59 = arith.constant 1.000000e+00 : f32
    %135 = vector.broadcast %cst_59 : f32 to vector<8x128xf32>
    %136 = arith.addf %135, %134 : vector<8x128xf32>
    %137 = arith.divf %135, %136 : vector<8x128xf32>
    %138 = vector.extract_strided_slice %132 {offsets = [0, 64], sizes = [8, 32], strides = [1, 1]} : vector<8x128xf32> to vector<8x32xf32>
    %139 = math.tanh %138 : vector<8x32xf32>
    %140 = vector.extract_strided_slice %137 {offsets = [0, 0], sizes = [8, 32], strides = [1, 1]} : vector<8x128xf32> to vector<8x32xf32>
    %141 = vector.extract_strided_slice %137 {offsets = [0, 32], sizes = [8, 32], strides = [1, 1]} : vector<8x128xf32> to vector<8x32xf32>
    %142 = vector.extract_strided_slice %137 {offsets = [0, 96], sizes = [8, 32], strides = [1, 1]} : vector<8x128xf32> to vector<8x32xf32>
    %143 = arith.mulf %141, %127 : vector<8x32xf32>
    %144 = arith.mulf %140, %139 : vector<8x32xf32>
    %145 = arith.addf %143, %144 : vector<8x32xf32>
    %146 = math.tanh %145 : vector<8x32xf32>
    %147 = arith.mulf %142, %146 : vector<8x32xf32>
    %148 = tpu.concatenate %147, %145 in 1 : vector<8x32xf32>, vector<8x32xf32> -> vector<8x64xf32>
    %149 = vector.broadcast %16 : vector<1x32xf32> to vector<8x32xf32>
    %150 = arith.mulf %147, %149 : vector<8x32xf32>
    %cst_60 = arith.constant dense<0.000000e+00> : vector<8xf32>
    %151 = vector.multi_reduction <add>, %150, %cst_60 [1] : vector<8x32xf32> to vector<8xf32>
    %152 = vector.shape_cast %151 : vector<8xf32> to vector<8x1xf32>
    %153 = arith.mulf %125, %17 : vector<1x16xf32>
    %cst_61 = arith.constant dense<0.000000e+00> : vector<1xf32>
    %154 = vector.multi_reduction <add>, %153, %cst_61 [1] : vector<1x16xf32> to vector<1xf32>
    %155 = vector.shape_cast %154 : vector<1xf32> to vector<1x1xf32>
    %156 = arith.addf %155, %18 : vector<1x1xf32>
    %157 = vector.broadcast %156 : vector<1x1xf32> to vector<8x1xf32>
    %158 = arith.addf %152, %157 : vector<8x1xf32>
    %159 = vector.broadcast %c1_i32 : i32 to vector<8x8xi32>
    %160 = arith.cmpi eq, %29, %159 : vector<8x8xi32>
    %161 = vector.shape_cast %158 : vector<8x1xf32> to vector<8x1xf32>
    %162 = vector.broadcast %161 : vector<8x1xf32> to vector<8x8xf32>
    %163 = arith.select %160, %162, %97 : vector<8x8xi1>, vector<8x8xf32>
    %c2_i32 = arith.constant 2 : i32
    %c8_i32_62 = arith.constant 8 : i32
    %164 = arith.muli %c2_i32, %c8_i32_62 : i32
    %165 = tpu.assume_multiple %164, 8 : i32
    %166 = arith.index_cast %165 : i32 to index
    %c0_63 = arith.constant 0 : index
    %167 = vector.load %arg0[%166, %c0_63] : memref<64x16xf32, #tpu.memory_space<vmem>>, vector<8x16xf32>
    %168 = arith.index_cast %165 : i32 to index
    %c0_64 = arith.constant 0 : index
    %169 = vector.load %arg14[%168, %c0_64] : memref<64x16xf32, #tpu.memory_space<vmem>>, vector<8x16xf32>
    %170 = arith.index_cast %165 : i32 to index
    %c0_65 = arith.constant 0 : index
    %171 = vector.load %arg15[%170, %c0_65] : memref<64x128xf32, #tpu.memory_space<vmem>>, vector<8x128xf32>
    %cst_66 = arith.constant dense<0.000000e+00> : vector<8x16xf32>
    %172 = tpu.matmul %148, %1, %cst_66 {dimension_numbers = #tpu.dot_dimension_numbers<[1], [0], [0], [1], [0, 0, 1, 1], [], []>} : vector<8x64xf32>, vector<64x16xf32>, vector<8x16xf32> -> vector<8x16xf32>
    %173 = arith.addf %172, %169 : vector<8x16xf32>
    %174 = math.tanh %173 : vector<8x16xf32>
    %175 = vector.broadcast %4 : vector<1x16xf32> to vector<8x16xf32>
    %176 = arith.mulf %174, %175 : vector<8x16xf32>
    %cst_67 = arith.constant dense<0.000000e+00> : vector<8xf32>
    %177 = vector.multi_reduction <add>, %176, %cst_67 [1] : vector<8x16xf32> to vector<8xf32>
    %178 = vector.shape_cast %177 : vector<8xf32> to vector<8x1xf32>
    %cst_68 = arith.constant dense<0xFF800000> : vector<1xf32>
    %179 = vector.multi_reduction <maximumf>, %178, %cst_68 [0] : vector<8x1xf32> to vector<1xf32>
    %180 = vector.shape_cast %179 : vector<1xf32> to vector<1x1xf32>
    %181 = vector.broadcast %180 : vector<1x1xf32> to vector<8x1xf32>
    %182 = arith.subf %178, %181 : vector<8x1xf32>
    %183 = math.exp %182 : vector<8x1xf32>
    %cst_69 = arith.constant dense<0.000000e+00> : vector<1xf32>
    %184 = vector.multi_reduction <add>, %183, %cst_69 [0] : vector<8x1xf32> to vector<1xf32>
    %185 = vector.shape_cast %184 : vector<1xf32> to vector<1x1xf32>
    %186 = vector.broadcast %185 : vector<1x1xf32> to vector<8x1xf32>
    %187 = arith.divf %183, %186 : vector<8x1xf32>
    %188 = vector.broadcast %187 : vector<8x1xf32> to vector<8x16xf32>
    %189 = arith.mulf %188, %167 : vector<8x16xf32>
    %cst_70 = arith.constant dense<0.000000e+00> : vector<16xf32>
    %190 = vector.multi_reduction <add>, %189, %cst_70 [0] : vector<8x16xf32> to vector<16xf32>
    %191 = vector.shape_cast %190 : vector<16xf32> to vector<1x16xf32>
    %192 = vector.extract_strided_slice %148 {offsets = [0, 0], sizes = [8, 32], strides = [1, 1]} : vector<8x64xf32> to vector<8x32xf32>
    %193 = vector.extract_strided_slice %148 {offsets = [0, 32], sizes = [8, 32], strides = [1, 1]} : vector<8x64xf32> to vector<8x32xf32>
    %cst_71 = arith.constant dense<0.000000e+00> : vector<1x128xf32>
    %194 = tpu.matmul %191, %12, %cst_71 {dimension_numbers = #tpu.dot_dimension_numbers<[1], [0], [0], [1], [0, 0, 1, 1], [], []>} : vector<1x16xf32>, vector<16x128xf32>, vector<1x128xf32> -> vector<1x128xf32>
    %195 = vector.broadcast %194 : vector<1x128xf32> to vector<8x128xf32>
    %196 = arith.addf %171, %195 : vector<8x128xf32>
    %cst_72 = arith.constant dense<0.000000e+00> : vector<8x128xf32>
    %197 = tpu.matmul %192, %10, %cst_72 {dimension_numbers = #tpu.dot_dimension_numbers<[1], [0], [0], [1], [0, 0, 1, 1], [], []>} : vector<8x32xf32>, vector<32x128xf32>, vector<8x128xf32> -> vector<8x128xf32>
    %198 = arith.addf %196, %197 : vector<8x128xf32>
    %199 = arith.negf %198 : vector<8x128xf32>
    %200 = math.exp %199 : vector<8x128xf32>
    %cst_73 = arith.constant 1.000000e+00 : f32
    %201 = vector.broadcast %cst_73 : f32 to vector<8x128xf32>
    %202 = arith.addf %201, %200 : vector<8x128xf32>
    %203 = arith.divf %201, %202 : vector<8x128xf32>
    %204 = vector.extract_strided_slice %198 {offsets = [0, 64], sizes = [8, 32], strides = [1, 1]} : vector<8x128xf32> to vector<8x32xf32>
    %205 = math.tanh %204 : vector<8x32xf32>
    %206 = vector.extract_strided_slice %203 {offsets = [0, 0], sizes = [8, 32], strides = [1, 1]} : vector<8x128xf32> to vector<8x32xf32>
    %207 = vector.extract_strided_slice %203 {offsets = [0, 32], sizes = [8, 32], strides = [1, 1]} : vector<8x128xf32> to vector<8x32xf32>
    %208 = vector.extract_strided_slice %203 {offsets = [0, 96], sizes = [8, 32], strides = [1, 1]} : vector<8x128xf32> to vector<8x32xf32>
    %209 = arith.mulf %207, %193 : vector<8x32xf32>
    %210 = arith.mulf %206, %205 : vector<8x32xf32>
    %211 = arith.addf %209, %210 : vector<8x32xf32>
    %212 = math.tanh %211 : vector<8x32xf32>
    %213 = arith.mulf %208, %212 : vector<8x32xf32>
    %214 = tpu.concatenate %213, %211 in 1 : vector<8x32xf32>, vector<8x32xf32> -> vector<8x64xf32>
    %215 = vector.broadcast %16 : vector<1x32xf32> to vector<8x32xf32>
    %216 = arith.mulf %213, %215 : vector<8x32xf32>
    %cst_74 = arith.constant dense<0.000000e+00> : vector<8xf32>
    %217 = vector.multi_reduction <add>, %216, %cst_74 [1] : vector<8x32xf32> to vector<8xf32>
    %218 = vector.shape_cast %217 : vector<8xf32> to vector<8x1xf32>
    %219 = arith.mulf %191, %17 : vector<1x16xf32>
    %cst_75 = arith.constant dense<0.000000e+00> : vector<1xf32>
    %220 = vector.multi_reduction <add>, %219, %cst_75 [1] : vector<1x16xf32> to vector<1xf32>
    %221 = vector.shape_cast %220 : vector<1xf32> to vector<1x1xf32>
    %222 = arith.addf %221, %18 : vector<1x1xf32>
    %223 = vector.broadcast %222 : vector<1x1xf32> to vector<8x1xf32>
    %224 = arith.addf %218, %223 : vector<8x1xf32>
    %225 = vector.broadcast %c2_i32 : i32 to vector<8x8xi32>
    %226 = arith.cmpi eq, %29, %225 : vector<8x8xi32>
    %227 = vector.shape_cast %224 : vector<8x1xf32> to vector<8x1xf32>
    %228 = vector.broadcast %227 : vector<8x1xf32> to vector<8x8xf32>
    %229 = arith.select %226, %228, %163 : vector<8x8xi1>, vector<8x8xf32>
    %c3_i32 = arith.constant 3 : i32
    %c8_i32_76 = arith.constant 8 : i32
    %230 = arith.muli %c3_i32, %c8_i32_76 : i32
    %231 = tpu.assume_multiple %230, 8 : i32
    %232 = arith.index_cast %231 : i32 to index
    %c0_77 = arith.constant 0 : index
    %233 = vector.load %arg0[%232, %c0_77] : memref<64x16xf32, #tpu.memory_space<vmem>>, vector<8x16xf32>
    %234 = arith.index_cast %231 : i32 to index
    %c0_78 = arith.constant 0 : index
    %235 = vector.load %arg14[%234, %c0_78] : memref<64x16xf32, #tpu.memory_space<vmem>>, vector<8x16xf32>
    %236 = arith.index_cast %231 : i32 to index
    %c0_79 = arith.constant 0 : index
    %237 = vector.load %arg15[%236, %c0_79] : memref<64x128xf32, #tpu.memory_space<vmem>>, vector<8x128xf32>
    %cst_80 = arith.constant dense<0.000000e+00> : vector<8x16xf32>
    %238 = tpu.matmul %214, %1, %cst_80 {dimension_numbers = #tpu.dot_dimension_numbers<[1], [0], [0], [1], [0, 0, 1, 1], [], []>} : vector<8x64xf32>, vector<64x16xf32>, vector<8x16xf32> -> vector<8x16xf32>
    %239 = arith.addf %238, %235 : vector<8x16xf32>
    %240 = math.tanh %239 : vector<8x16xf32>
    %241 = vector.broadcast %4 : vector<1x16xf32> to vector<8x16xf32>
    %242 = arith.mulf %240, %241 : vector<8x16xf32>
    %cst_81 = arith.constant dense<0.000000e+00> : vector<8xf32>
    %243 = vector.multi_reduction <add>, %242, %cst_81 [1] : vector<8x16xf32> to vector<8xf32>
    %244 = vector.shape_cast %243 : vector<8xf32> to vector<8x1xf32>
    %cst_82 = arith.constant dense<0xFF800000> : vector<1xf32>
    %245 = vector.multi_reduction <maximumf>, %244, %cst_82 [0] : vector<8x1xf32> to vector<1xf32>
    %246 = vector.shape_cast %245 : vector<1xf32> to vector<1x1xf32>
    %247 = vector.broadcast %246 : vector<1x1xf32> to vector<8x1xf32>
    %248 = arith.subf %244, %247 : vector<8x1xf32>
    %249 = math.exp %248 : vector<8x1xf32>
    %cst_83 = arith.constant dense<0.000000e+00> : vector<1xf32>
    %250 = vector.multi_reduction <add>, %249, %cst_83 [0] : vector<8x1xf32> to vector<1xf32>
    %251 = vector.shape_cast %250 : vector<1xf32> to vector<1x1xf32>
    %252 = vector.broadcast %251 : vector<1x1xf32> to vector<8x1xf32>
    %253 = arith.divf %249, %252 : vector<8x1xf32>
    %254 = vector.broadcast %253 : vector<8x1xf32> to vector<8x16xf32>
    %255 = arith.mulf %254, %233 : vector<8x16xf32>
    %cst_84 = arith.constant dense<0.000000e+00> : vector<16xf32>
    %256 = vector.multi_reduction <add>, %255, %cst_84 [0] : vector<8x16xf32> to vector<16xf32>
    %257 = vector.shape_cast %256 : vector<16xf32> to vector<1x16xf32>
    %258 = vector.extract_strided_slice %214 {offsets = [0, 0], sizes = [8, 32], strides = [1, 1]} : vector<8x64xf32> to vector<8x32xf32>
    %259 = vector.extract_strided_slice %214 {offsets = [0, 32], sizes = [8, 32], strides = [1, 1]} : vector<8x64xf32> to vector<8x32xf32>
    %cst_85 = arith.constant dense<0.000000e+00> : vector<1x128xf32>
    %260 = tpu.matmul %257, %12, %cst_85 {dimension_numbers = #tpu.dot_dimension_numbers<[1], [0], [0], [1], [0, 0, 1, 1], [], []>} : vector<1x16xf32>, vector<16x128xf32>, vector<1x128xf32> -> vector<1x128xf32>
    %261 = vector.broadcast %260 : vector<1x128xf32> to vector<8x128xf32>
    %262 = arith.addf %237, %261 : vector<8x128xf32>
    %cst_86 = arith.constant dense<0.000000e+00> : vector<8x128xf32>
    %263 = tpu.matmul %258, %10, %cst_86 {dimension_numbers = #tpu.dot_dimension_numbers<[1], [0], [0], [1], [0, 0, 1, 1], [], []>} : vector<8x32xf32>, vector<32x128xf32>, vector<8x128xf32> -> vector<8x128xf32>
    %264 = arith.addf %262, %263 : vector<8x128xf32>
    %265 = arith.negf %264 : vector<8x128xf32>
    %266 = math.exp %265 : vector<8x128xf32>
    %cst_87 = arith.constant 1.000000e+00 : f32
    %267 = vector.broadcast %cst_87 : f32 to vector<8x128xf32>
    %268 = arith.addf %267, %266 : vector<8x128xf32>
    %269 = arith.divf %267, %268 : vector<8x128xf32>
    %270 = vector.extract_strided_slice %264 {offsets = [0, 64], sizes = [8, 32], strides = [1, 1]} : vector<8x128xf32> to vector<8x32xf32>
    %271 = math.tanh %270 : vector<8x32xf32>
    %272 = vector.extract_strided_slice %269 {offsets = [0, 0], sizes = [8, 32], strides = [1, 1]} : vector<8x128xf32> to vector<8x32xf32>
    %273 = vector.extract_strided_slice %269 {offsets = [0, 32], sizes = [8, 32], strides = [1, 1]} : vector<8x128xf32> to vector<8x32xf32>
    %274 = vector.extract_strided_slice %269 {offsets = [0, 96], sizes = [8, 32], strides = [1, 1]} : vector<8x128xf32> to vector<8x32xf32>
    %275 = arith.mulf %273, %259 : vector<8x32xf32>
    %276 = arith.mulf %272, %271 : vector<8x32xf32>
    %277 = arith.addf %275, %276 : vector<8x32xf32>
    %278 = math.tanh %277 : vector<8x32xf32>
    %279 = arith.mulf %274, %278 : vector<8x32xf32>
    %280 = tpu.concatenate %279, %277 in 1 : vector<8x32xf32>, vector<8x32xf32> -> vector<8x64xf32>
    %281 = vector.broadcast %16 : vector<1x32xf32> to vector<8x32xf32>
    %282 = arith.mulf %279, %281 : vector<8x32xf32>
    %cst_88 = arith.constant dense<0.000000e+00> : vector<8xf32>
    %283 = vector.multi_reduction <add>, %282, %cst_88 [1] : vector<8x32xf32> to vector<8xf32>
    %284 = vector.shape_cast %283 : vector<8xf32> to vector<8x1xf32>
    %285 = arith.mulf %257, %17 : vector<1x16xf32>
    %cst_89 = arith.constant dense<0.000000e+00> : vector<1xf32>
    %286 = vector.multi_reduction <add>, %285, %cst_89 [1] : vector<1x16xf32> to vector<1xf32>
    %287 = vector.shape_cast %286 : vector<1xf32> to vector<1x1xf32>
    %288 = arith.addf %287, %18 : vector<1x1xf32>
    %289 = vector.broadcast %288 : vector<1x1xf32> to vector<8x1xf32>
    %290 = arith.addf %284, %289 : vector<8x1xf32>
    %291 = vector.broadcast %c3_i32 : i32 to vector<8x8xi32>
    %292 = arith.cmpi eq, %29, %291 : vector<8x8xi32>
    %293 = vector.shape_cast %290 : vector<8x1xf32> to vector<8x1xf32>
    %294 = vector.broadcast %293 : vector<8x1xf32> to vector<8x8xf32>
    %295 = arith.select %292, %294, %229 : vector<8x8xi1>, vector<8x8xf32>
    %c4_i32 = arith.constant 4 : i32
    %c8_i32_90 = arith.constant 8 : i32
    %296 = arith.muli %c4_i32, %c8_i32_90 : i32
    %297 = tpu.assume_multiple %296, 8 : i32
    %298 = arith.index_cast %297 : i32 to index
    %c0_91 = arith.constant 0 : index
    %299 = vector.load %arg0[%298, %c0_91] : memref<64x16xf32, #tpu.memory_space<vmem>>, vector<8x16xf32>
    %300 = arith.index_cast %297 : i32 to index
    %c0_92 = arith.constant 0 : index
    %301 = vector.load %arg14[%300, %c0_92] : memref<64x16xf32, #tpu.memory_space<vmem>>, vector<8x16xf32>
    %302 = arith.index_cast %297 : i32 to index
    %c0_93 = arith.constant 0 : index
    %303 = vector.load %arg15[%302, %c0_93] : memref<64x128xf32, #tpu.memory_space<vmem>>, vector<8x128xf32>
    %cst_94 = arith.constant dense<0.000000e+00> : vector<8x16xf32>
    %304 = tpu.matmul %280, %1, %cst_94 {dimension_numbers = #tpu.dot_dimension_numbers<[1], [0], [0], [1], [0, 0, 1, 1], [], []>} : vector<8x64xf32>, vector<64x16xf32>, vector<8x16xf32> -> vector<8x16xf32>
    %305 = arith.addf %304, %301 : vector<8x16xf32>
    %306 = math.tanh %305 : vector<8x16xf32>
    %307 = vector.broadcast %4 : vector<1x16xf32> to vector<8x16xf32>
    %308 = arith.mulf %306, %307 : vector<8x16xf32>
    %cst_95 = arith.constant dense<0.000000e+00> : vector<8xf32>
    %309 = vector.multi_reduction <add>, %308, %cst_95 [1] : vector<8x16xf32> to vector<8xf32>
    %310 = vector.shape_cast %309 : vector<8xf32> to vector<8x1xf32>
    %cst_96 = arith.constant dense<0xFF800000> : vector<1xf32>
    %311 = vector.multi_reduction <maximumf>, %310, %cst_96 [0] : vector<8x1xf32> to vector<1xf32>
    %312 = vector.shape_cast %311 : vector<1xf32> to vector<1x1xf32>
    %313 = vector.broadcast %312 : vector<1x1xf32> to vector<8x1xf32>
    %314 = arith.subf %310, %313 : vector<8x1xf32>
    %315 = math.exp %314 : vector<8x1xf32>
    %cst_97 = arith.constant dense<0.000000e+00> : vector<1xf32>
    %316 = vector.multi_reduction <add>, %315, %cst_97 [0] : vector<8x1xf32> to vector<1xf32>
    %317 = vector.shape_cast %316 : vector<1xf32> to vector<1x1xf32>
    %318 = vector.broadcast %317 : vector<1x1xf32> to vector<8x1xf32>
    %319 = arith.divf %315, %318 : vector<8x1xf32>
    %320 = vector.broadcast %319 : vector<8x1xf32> to vector<8x16xf32>
    %321 = arith.mulf %320, %299 : vector<8x16xf32>
    %cst_98 = arith.constant dense<0.000000e+00> : vector<16xf32>
    %322 = vector.multi_reduction <add>, %321, %cst_98 [0] : vector<8x16xf32> to vector<16xf32>
    %323 = vector.shape_cast %322 : vector<16xf32> to vector<1x16xf32>
    %324 = vector.extract_strided_slice %280 {offsets = [0, 0], sizes = [8, 32], strides = [1, 1]} : vector<8x64xf32> to vector<8x32xf32>
    %325 = vector.extract_strided_slice %280 {offsets = [0, 32], sizes = [8, 32], strides = [1, 1]} : vector<8x64xf32> to vector<8x32xf32>
    %cst_99 = arith.constant dense<0.000000e+00> : vector<1x128xf32>
    %326 = tpu.matmul %323, %12, %cst_99 {dimension_numbers = #tpu.dot_dimension_numbers<[1], [0], [0], [1], [0, 0, 1, 1], [], []>} : vector<1x16xf32>, vector<16x128xf32>, vector<1x128xf32> -> vector<1x128xf32>
    %327 = vector.broadcast %326 : vector<1x128xf32> to vector<8x128xf32>
    %328 = arith.addf %303, %327 : vector<8x128xf32>
    %cst_100 = arith.constant dense<0.000000e+00> : vector<8x128xf32>
    %329 = tpu.matmul %324, %10, %cst_100 {dimension_numbers = #tpu.dot_dimension_numbers<[1], [0], [0], [1], [0, 0, 1, 1], [], []>} : vector<8x32xf32>, vector<32x128xf32>, vector<8x128xf32> -> vector<8x128xf32>
    %330 = arith.addf %328, %329 : vector<8x128xf32>
    %331 = arith.negf %330 : vector<8x128xf32>
    %332 = math.exp %331 : vector<8x128xf32>
    %cst_101 = arith.constant 1.000000e+00 : f32
    %333 = vector.broadcast %cst_101 : f32 to vector<8x128xf32>
    %334 = arith.addf %333, %332 : vector<8x128xf32>
    %335 = arith.divf %333, %334 : vector<8x128xf32>
    %336 = vector.extract_strided_slice %330 {offsets = [0, 64], sizes = [8, 32], strides = [1, 1]} : vector<8x128xf32> to vector<8x32xf32>
    %337 = math.tanh %336 : vector<8x32xf32>
    %338 = vector.extract_strided_slice %335 {offsets = [0, 0], sizes = [8, 32], strides = [1, 1]} : vector<8x128xf32> to vector<8x32xf32>
    %339 = vector.extract_strided_slice %335 {offsets = [0, 32], sizes = [8, 32], strides = [1, 1]} : vector<8x128xf32> to vector<8x32xf32>
    %340 = vector.extract_strided_slice %335 {offsets = [0, 96], sizes = [8, 32], strides = [1, 1]} : vector<8x128xf32> to vector<8x32xf32>
    %341 = arith.mulf %339, %325 : vector<8x32xf32>
    %342 = arith.mulf %338, %337 : vector<8x32xf32>
    %343 = arith.addf %341, %342 : vector<8x32xf32>
    %344 = math.tanh %343 : vector<8x32xf32>
    %345 = arith.mulf %340, %344 : vector<8x32xf32>
    %346 = tpu.concatenate %345, %343 in 1 : vector<8x32xf32>, vector<8x32xf32> -> vector<8x64xf32>
    %347 = vector.broadcast %16 : vector<1x32xf32> to vector<8x32xf32>
    %348 = arith.mulf %345, %347 : vector<8x32xf32>
    %cst_102 = arith.constant dense<0.000000e+00> : vector<8xf32>
    %349 = vector.multi_reduction <add>, %348, %cst_102 [1] : vector<8x32xf32> to vector<8xf32>
    %350 = vector.shape_cast %349 : vector<8xf32> to vector<8x1xf32>
    %351 = arith.mulf %323, %17 : vector<1x16xf32>
    %cst_103 = arith.constant dense<0.000000e+00> : vector<1xf32>
    %352 = vector.multi_reduction <add>, %351, %cst_103 [1] : vector<1x16xf32> to vector<1xf32>
    %353 = vector.shape_cast %352 : vector<1xf32> to vector<1x1xf32>
    %354 = arith.addf %353, %18 : vector<1x1xf32>
    %355 = vector.broadcast %354 : vector<1x1xf32> to vector<8x1xf32>
    %356 = arith.addf %350, %355 : vector<8x1xf32>
    %357 = vector.broadcast %c4_i32 : i32 to vector<8x8xi32>
    %358 = arith.cmpi eq, %29, %357 : vector<8x8xi32>
    %359 = vector.shape_cast %356 : vector<8x1xf32> to vector<8x1xf32>
    %360 = vector.broadcast %359 : vector<8x1xf32> to vector<8x8xf32>
    %361 = arith.select %358, %360, %295 : vector<8x8xi1>, vector<8x8xf32>
    %c5_i32 = arith.constant 5 : i32
    %c8_i32_104 = arith.constant 8 : i32
    %362 = arith.muli %c5_i32, %c8_i32_104 : i32
    %363 = tpu.assume_multiple %362, 8 : i32
    %364 = arith.index_cast %363 : i32 to index
    %c0_105 = arith.constant 0 : index
    %365 = vector.load %arg0[%364, %c0_105] : memref<64x16xf32, #tpu.memory_space<vmem>>, vector<8x16xf32>
    %366 = arith.index_cast %363 : i32 to index
    %c0_106 = arith.constant 0 : index
    %367 = vector.load %arg14[%366, %c0_106] : memref<64x16xf32, #tpu.memory_space<vmem>>, vector<8x16xf32>
    %368 = arith.index_cast %363 : i32 to index
    %c0_107 = arith.constant 0 : index
    %369 = vector.load %arg15[%368, %c0_107] : memref<64x128xf32, #tpu.memory_space<vmem>>, vector<8x128xf32>
    %cst_108 = arith.constant dense<0.000000e+00> : vector<8x16xf32>
    %370 = tpu.matmul %346, %1, %cst_108 {dimension_numbers = #tpu.dot_dimension_numbers<[1], [0], [0], [1], [0, 0, 1, 1], [], []>} : vector<8x64xf32>, vector<64x16xf32>, vector<8x16xf32> -> vector<8x16xf32>
    %371 = arith.addf %370, %367 : vector<8x16xf32>
    %372 = math.tanh %371 : vector<8x16xf32>
    %373 = vector.broadcast %4 : vector<1x16xf32> to vector<8x16xf32>
    %374 = arith.mulf %372, %373 : vector<8x16xf32>
    %cst_109 = arith.constant dense<0.000000e+00> : vector<8xf32>
    %375 = vector.multi_reduction <add>, %374, %cst_109 [1] : vector<8x16xf32> to vector<8xf32>
    %376 = vector.shape_cast %375 : vector<8xf32> to vector<8x1xf32>
    %cst_110 = arith.constant dense<0xFF800000> : vector<1xf32>
    %377 = vector.multi_reduction <maximumf>, %376, %cst_110 [0] : vector<8x1xf32> to vector<1xf32>
    %378 = vector.shape_cast %377 : vector<1xf32> to vector<1x1xf32>
    %379 = vector.broadcast %378 : vector<1x1xf32> to vector<8x1xf32>
    %380 = arith.subf %376, %379 : vector<8x1xf32>
    %381 = math.exp %380 : vector<8x1xf32>
    %cst_111 = arith.constant dense<0.000000e+00> : vector<1xf32>
    %382 = vector.multi_reduction <add>, %381, %cst_111 [0] : vector<8x1xf32> to vector<1xf32>
    %383 = vector.shape_cast %382 : vector<1xf32> to vector<1x1xf32>
    %384 = vector.broadcast %383 : vector<1x1xf32> to vector<8x1xf32>
    %385 = arith.divf %381, %384 : vector<8x1xf32>
    %386 = vector.broadcast %385 : vector<8x1xf32> to vector<8x16xf32>
    %387 = arith.mulf %386, %365 : vector<8x16xf32>
    %cst_112 = arith.constant dense<0.000000e+00> : vector<16xf32>
    %388 = vector.multi_reduction <add>, %387, %cst_112 [0] : vector<8x16xf32> to vector<16xf32>
    %389 = vector.shape_cast %388 : vector<16xf32> to vector<1x16xf32>
    %390 = vector.extract_strided_slice %346 {offsets = [0, 0], sizes = [8, 32], strides = [1, 1]} : vector<8x64xf32> to vector<8x32xf32>
    %391 = vector.extract_strided_slice %346 {offsets = [0, 32], sizes = [8, 32], strides = [1, 1]} : vector<8x64xf32> to vector<8x32xf32>
    %cst_113 = arith.constant dense<0.000000e+00> : vector<1x128xf32>
    %392 = tpu.matmul %389, %12, %cst_113 {dimension_numbers = #tpu.dot_dimension_numbers<[1], [0], [0], [1], [0, 0, 1, 1], [], []>} : vector<1x16xf32>, vector<16x128xf32>, vector<1x128xf32> -> vector<1x128xf32>
    %393 = vector.broadcast %392 : vector<1x128xf32> to vector<8x128xf32>
    %394 = arith.addf %369, %393 : vector<8x128xf32>
    %cst_114 = arith.constant dense<0.000000e+00> : vector<8x128xf32>
    %395 = tpu.matmul %390, %10, %cst_114 {dimension_numbers = #tpu.dot_dimension_numbers<[1], [0], [0], [1], [0, 0, 1, 1], [], []>} : vector<8x32xf32>, vector<32x128xf32>, vector<8x128xf32> -> vector<8x128xf32>
    %396 = arith.addf %394, %395 : vector<8x128xf32>
    %397 = arith.negf %396 : vector<8x128xf32>
    %398 = math.exp %397 : vector<8x128xf32>
    %cst_115 = arith.constant 1.000000e+00 : f32
    %399 = vector.broadcast %cst_115 : f32 to vector<8x128xf32>
    %400 = arith.addf %399, %398 : vector<8x128xf32>
    %401 = arith.divf %399, %400 : vector<8x128xf32>
    %402 = vector.extract_strided_slice %396 {offsets = [0, 64], sizes = [8, 32], strides = [1, 1]} : vector<8x128xf32> to vector<8x32xf32>
    %403 = math.tanh %402 : vector<8x32xf32>
    %404 = vector.extract_strided_slice %401 {offsets = [0, 0], sizes = [8, 32], strides = [1, 1]} : vector<8x128xf32> to vector<8x32xf32>
    %405 = vector.extract_strided_slice %401 {offsets = [0, 32], sizes = [8, 32], strides = [1, 1]} : vector<8x128xf32> to vector<8x32xf32>
    %406 = vector.extract_strided_slice %401 {offsets = [0, 96], sizes = [8, 32], strides = [1, 1]} : vector<8x128xf32> to vector<8x32xf32>
    %407 = arith.mulf %405, %391 : vector<8x32xf32>
    %408 = arith.mulf %404, %403 : vector<8x32xf32>
    %409 = arith.addf %407, %408 : vector<8x32xf32>
    %410 = math.tanh %409 : vector<8x32xf32>
    %411 = arith.mulf %406, %410 : vector<8x32xf32>
    %412 = tpu.concatenate %411, %409 in 1 : vector<8x32xf32>, vector<8x32xf32> -> vector<8x64xf32>
    %413 = vector.broadcast %16 : vector<1x32xf32> to vector<8x32xf32>
    %414 = arith.mulf %411, %413 : vector<8x32xf32>
    %cst_116 = arith.constant dense<0.000000e+00> : vector<8xf32>
    %415 = vector.multi_reduction <add>, %414, %cst_116 [1] : vector<8x32xf32> to vector<8xf32>
    %416 = vector.shape_cast %415 : vector<8xf32> to vector<8x1xf32>
    %417 = arith.mulf %389, %17 : vector<1x16xf32>
    %cst_117 = arith.constant dense<0.000000e+00> : vector<1xf32>
    %418 = vector.multi_reduction <add>, %417, %cst_117 [1] : vector<1x16xf32> to vector<1xf32>
    %419 = vector.shape_cast %418 : vector<1xf32> to vector<1x1xf32>
    %420 = arith.addf %419, %18 : vector<1x1xf32>
    %421 = vector.broadcast %420 : vector<1x1xf32> to vector<8x1xf32>
    %422 = arith.addf %416, %421 : vector<8x1xf32>
    %423 = vector.broadcast %c5_i32 : i32 to vector<8x8xi32>
    %424 = arith.cmpi eq, %29, %423 : vector<8x8xi32>
    %425 = vector.shape_cast %422 : vector<8x1xf32> to vector<8x1xf32>
    %426 = vector.broadcast %425 : vector<8x1xf32> to vector<8x8xf32>
    %427 = arith.select %424, %426, %361 : vector<8x8xi1>, vector<8x8xf32>
    %c6_i32 = arith.constant 6 : i32
    %c8_i32_118 = arith.constant 8 : i32
    %428 = arith.muli %c6_i32, %c8_i32_118 : i32
    %429 = tpu.assume_multiple %428, 8 : i32
    %430 = arith.index_cast %429 : i32 to index
    %c0_119 = arith.constant 0 : index
    %431 = vector.load %arg0[%430, %c0_119] : memref<64x16xf32, #tpu.memory_space<vmem>>, vector<8x16xf32>
    %432 = arith.index_cast %429 : i32 to index
    %c0_120 = arith.constant 0 : index
    %433 = vector.load %arg14[%432, %c0_120] : memref<64x16xf32, #tpu.memory_space<vmem>>, vector<8x16xf32>
    %434 = arith.index_cast %429 : i32 to index
    %c0_121 = arith.constant 0 : index
    %435 = vector.load %arg15[%434, %c0_121] : memref<64x128xf32, #tpu.memory_space<vmem>>, vector<8x128xf32>
    %cst_122 = arith.constant dense<0.000000e+00> : vector<8x16xf32>
    %436 = tpu.matmul %412, %1, %cst_122 {dimension_numbers = #tpu.dot_dimension_numbers<[1], [0], [0], [1], [0, 0, 1, 1], [], []>} : vector<8x64xf32>, vector<64x16xf32>, vector<8x16xf32> -> vector<8x16xf32>
    %437 = arith.addf %436, %433 : vector<8x16xf32>
    %438 = math.tanh %437 : vector<8x16xf32>
    %439 = vector.broadcast %4 : vector<1x16xf32> to vector<8x16xf32>
    %440 = arith.mulf %438, %439 : vector<8x16xf32>
    %cst_123 = arith.constant dense<0.000000e+00> : vector<8xf32>
    %441 = vector.multi_reduction <add>, %440, %cst_123 [1] : vector<8x16xf32> to vector<8xf32>
    %442 = vector.shape_cast %441 : vector<8xf32> to vector<8x1xf32>
    %cst_124 = arith.constant dense<0xFF800000> : vector<1xf32>
    %443 = vector.multi_reduction <maximumf>, %442, %cst_124 [0] : vector<8x1xf32> to vector<1xf32>
    %444 = vector.shape_cast %443 : vector<1xf32> to vector<1x1xf32>
    %445 = vector.broadcast %444 : vector<1x1xf32> to vector<8x1xf32>
    %446 = arith.subf %442, %445 : vector<8x1xf32>
    %447 = math.exp %446 : vector<8x1xf32>
    %cst_125 = arith.constant dense<0.000000e+00> : vector<1xf32>
    %448 = vector.multi_reduction <add>, %447, %cst_125 [0] : vector<8x1xf32> to vector<1xf32>
    %449 = vector.shape_cast %448 : vector<1xf32> to vector<1x1xf32>
    %450 = vector.broadcast %449 : vector<1x1xf32> to vector<8x1xf32>
    %451 = arith.divf %447, %450 : vector<8x1xf32>
    %452 = vector.broadcast %451 : vector<8x1xf32> to vector<8x16xf32>
    %453 = arith.mulf %452, %431 : vector<8x16xf32>
    %cst_126 = arith.constant dense<0.000000e+00> : vector<16xf32>
    %454 = vector.multi_reduction <add>, %453, %cst_126 [0] : vector<8x16xf32> to vector<16xf32>
    %455 = vector.shape_cast %454 : vector<16xf32> to vector<1x16xf32>
    %456 = vector.extract_strided_slice %412 {offsets = [0, 0], sizes = [8, 32], strides = [1, 1]} : vector<8x64xf32> to vector<8x32xf32>
    %457 = vector.extract_strided_slice %412 {offsets = [0, 32], sizes = [8, 32], strides = [1, 1]} : vector<8x64xf32> to vector<8x32xf32>
    %cst_127 = arith.constant dense<0.000000e+00> : vector<1x128xf32>
    %458 = tpu.matmul %455, %12, %cst_127 {dimension_numbers = #tpu.dot_dimension_numbers<[1], [0], [0], [1], [0, 0, 1, 1], [], []>} : vector<1x16xf32>, vector<16x128xf32>, vector<1x128xf32> -> vector<1x128xf32>
    %459 = vector.broadcast %458 : vector<1x128xf32> to vector<8x128xf32>
    %460 = arith.addf %435, %459 : vector<8x128xf32>
    %cst_128 = arith.constant dense<0.000000e+00> : vector<8x128xf32>
    %461 = tpu.matmul %456, %10, %cst_128 {dimension_numbers = #tpu.dot_dimension_numbers<[1], [0], [0], [1], [0, 0, 1, 1], [], []>} : vector<8x32xf32>, vector<32x128xf32>, vector<8x128xf32> -> vector<8x128xf32>
    %462 = arith.addf %460, %461 : vector<8x128xf32>
    %463 = arith.negf %462 : vector<8x128xf32>
    %464 = math.exp %463 : vector<8x128xf32>
    %cst_129 = arith.constant 1.000000e+00 : f32
    %465 = vector.broadcast %cst_129 : f32 to vector<8x128xf32>
    %466 = arith.addf %465, %464 : vector<8x128xf32>
    %467 = arith.divf %465, %466 : vector<8x128xf32>
    %468 = vector.extract_strided_slice %462 {offsets = [0, 64], sizes = [8, 32], strides = [1, 1]} : vector<8x128xf32> to vector<8x32xf32>
    %469 = math.tanh %468 : vector<8x32xf32>
    %470 = vector.extract_strided_slice %467 {offsets = [0, 0], sizes = [8, 32], strides = [1, 1]} : vector<8x128xf32> to vector<8x32xf32>
    %471 = vector.extract_strided_slice %467 {offsets = [0, 32], sizes = [8, 32], strides = [1, 1]} : vector<8x128xf32> to vector<8x32xf32>
    %472 = vector.extract_strided_slice %467 {offsets = [0, 96], sizes = [8, 32], strides = [1, 1]} : vector<8x128xf32> to vector<8x32xf32>
    %473 = arith.mulf %471, %457 : vector<8x32xf32>
    %474 = arith.mulf %470, %469 : vector<8x32xf32>
    %475 = arith.addf %473, %474 : vector<8x32xf32>
    %476 = math.tanh %475 : vector<8x32xf32>
    %477 = arith.mulf %472, %476 : vector<8x32xf32>
    %478 = tpu.concatenate %477, %475 in 1 : vector<8x32xf32>, vector<8x32xf32> -> vector<8x64xf32>
    %479 = vector.broadcast %16 : vector<1x32xf32> to vector<8x32xf32>
    %480 = arith.mulf %477, %479 : vector<8x32xf32>
    %cst_130 = arith.constant dense<0.000000e+00> : vector<8xf32>
    %481 = vector.multi_reduction <add>, %480, %cst_130 [1] : vector<8x32xf32> to vector<8xf32>
    %482 = vector.shape_cast %481 : vector<8xf32> to vector<8x1xf32>
    %483 = arith.mulf %455, %17 : vector<1x16xf32>
    %cst_131 = arith.constant dense<0.000000e+00> : vector<1xf32>
    %484 = vector.multi_reduction <add>, %483, %cst_131 [1] : vector<1x16xf32> to vector<1xf32>
    %485 = vector.shape_cast %484 : vector<1xf32> to vector<1x1xf32>
    %486 = arith.addf %485, %18 : vector<1x1xf32>
    %487 = vector.broadcast %486 : vector<1x1xf32> to vector<8x1xf32>
    %488 = arith.addf %482, %487 : vector<8x1xf32>
    %489 = vector.broadcast %c6_i32 : i32 to vector<8x8xi32>
    %490 = arith.cmpi eq, %29, %489 : vector<8x8xi32>
    %491 = vector.shape_cast %488 : vector<8x1xf32> to vector<8x1xf32>
    %492 = vector.broadcast %491 : vector<8x1xf32> to vector<8x8xf32>
    %493 = arith.select %490, %492, %427 : vector<8x8xi1>, vector<8x8xf32>
    %c7_i32 = arith.constant 7 : i32
    %c8_i32_132 = arith.constant 8 : i32
    %494 = arith.muli %c7_i32, %c8_i32_132 : i32
    %495 = tpu.assume_multiple %494, 8 : i32
    %496 = arith.index_cast %495 : i32 to index
    %c0_133 = arith.constant 0 : index
    %497 = vector.load %arg0[%496, %c0_133] : memref<64x16xf32, #tpu.memory_space<vmem>>, vector<8x16xf32>
    %498 = arith.index_cast %495 : i32 to index
    %c0_134 = arith.constant 0 : index
    %499 = vector.load %arg14[%498, %c0_134] : memref<64x16xf32, #tpu.memory_space<vmem>>, vector<8x16xf32>
    %500 = arith.index_cast %495 : i32 to index
    %c0_135 = arith.constant 0 : index
    %501 = vector.load %arg15[%500, %c0_135] : memref<64x128xf32, #tpu.memory_space<vmem>>, vector<8x128xf32>
    %cst_136 = arith.constant dense<0.000000e+00> : vector<8x16xf32>
    %502 = tpu.matmul %478, %1, %cst_136 {dimension_numbers = #tpu.dot_dimension_numbers<[1], [0], [0], [1], [0, 0, 1, 1], [], []>} : vector<8x64xf32>, vector<64x16xf32>, vector<8x16xf32> -> vector<8x16xf32>
    %503 = arith.addf %502, %499 : vector<8x16xf32>
    %504 = math.tanh %503 : vector<8x16xf32>
    %505 = vector.broadcast %4 : vector<1x16xf32> to vector<8x16xf32>
    %506 = arith.mulf %504, %505 : vector<8x16xf32>
    %cst_137 = arith.constant dense<0.000000e+00> : vector<8xf32>
    %507 = vector.multi_reduction <add>, %506, %cst_137 [1] : vector<8x16xf32> to vector<8xf32>
    %508 = vector.shape_cast %507 : vector<8xf32> to vector<8x1xf32>
    %cst_138 = arith.constant dense<0xFF800000> : vector<1xf32>
    %509 = vector.multi_reduction <maximumf>, %508, %cst_138 [0] : vector<8x1xf32> to vector<1xf32>
    %510 = vector.shape_cast %509 : vector<1xf32> to vector<1x1xf32>
    %511 = vector.broadcast %510 : vector<1x1xf32> to vector<8x1xf32>
    %512 = arith.subf %508, %511 : vector<8x1xf32>
    %513 = math.exp %512 : vector<8x1xf32>
    %cst_139 = arith.constant dense<0.000000e+00> : vector<1xf32>
    %514 = vector.multi_reduction <add>, %513, %cst_139 [0] : vector<8x1xf32> to vector<1xf32>
    %515 = vector.shape_cast %514 : vector<1xf32> to vector<1x1xf32>
    %516 = vector.broadcast %515 : vector<1x1xf32> to vector<8x1xf32>
    %517 = arith.divf %513, %516 : vector<8x1xf32>
    %518 = vector.broadcast %517 : vector<8x1xf32> to vector<8x16xf32>
    %519 = arith.mulf %518, %497 : vector<8x16xf32>
    %cst_140 = arith.constant dense<0.000000e+00> : vector<16xf32>
    %520 = vector.multi_reduction <add>, %519, %cst_140 [0] : vector<8x16xf32> to vector<16xf32>
    %521 = vector.shape_cast %520 : vector<16xf32> to vector<1x16xf32>
    %522 = vector.extract_strided_slice %478 {offsets = [0, 0], sizes = [8, 32], strides = [1, 1]} : vector<8x64xf32> to vector<8x32xf32>
    %523 = vector.extract_strided_slice %478 {offsets = [0, 32], sizes = [8, 32], strides = [1, 1]} : vector<8x64xf32> to vector<8x32xf32>
    %cst_141 = arith.constant dense<0.000000e+00> : vector<1x128xf32>
    %524 = tpu.matmul %521, %12, %cst_141 {dimension_numbers = #tpu.dot_dimension_numbers<[1], [0], [0], [1], [0, 0, 1, 1], [], []>} : vector<1x16xf32>, vector<16x128xf32>, vector<1x128xf32> -> vector<1x128xf32>
    %525 = vector.broadcast %524 : vector<1x128xf32> to vector<8x128xf32>
    %526 = arith.addf %501, %525 : vector<8x128xf32>
    %cst_142 = arith.constant dense<0.000000e+00> : vector<8x128xf32>
    %527 = tpu.matmul %522, %10, %cst_142 {dimension_numbers = #tpu.dot_dimension_numbers<[1], [0], [0], [1], [0, 0, 1, 1], [], []>} : vector<8x32xf32>, vector<32x128xf32>, vector<8x128xf32> -> vector<8x128xf32>
    %528 = arith.addf %526, %527 : vector<8x128xf32>
    %529 = arith.negf %528 : vector<8x128xf32>
    %530 = math.exp %529 : vector<8x128xf32>
    %cst_143 = arith.constant 1.000000e+00 : f32
    %531 = vector.broadcast %cst_143 : f32 to vector<8x128xf32>
    %532 = arith.addf %531, %530 : vector<8x128xf32>
    %533 = arith.divf %531, %532 : vector<8x128xf32>
    %534 = vector.extract_strided_slice %528 {offsets = [0, 64], sizes = [8, 32], strides = [1, 1]} : vector<8x128xf32> to vector<8x32xf32>
    %535 = math.tanh %534 : vector<8x32xf32>
    %536 = vector.extract_strided_slice %533 {offsets = [0, 0], sizes = [8, 32], strides = [1, 1]} : vector<8x128xf32> to vector<8x32xf32>
    %537 = vector.extract_strided_slice %533 {offsets = [0, 32], sizes = [8, 32], strides = [1, 1]} : vector<8x128xf32> to vector<8x32xf32>
    %538 = vector.extract_strided_slice %533 {offsets = [0, 96], sizes = [8, 32], strides = [1, 1]} : vector<8x128xf32> to vector<8x32xf32>
    %539 = arith.mulf %537, %523 : vector<8x32xf32>
    %540 = arith.mulf %536, %535 : vector<8x32xf32>
    %541 = arith.addf %539, %540 : vector<8x32xf32>
    %542 = math.tanh %541 : vector<8x32xf32>
    %543 = arith.mulf %538, %542 : vector<8x32xf32>
    %544 = tpu.concatenate %543, %541 in 1 : vector<8x32xf32>, vector<8x32xf32> -> vector<8x64xf32>
    %545 = vector.broadcast %16 : vector<1x32xf32> to vector<8x32xf32>
    %546 = arith.mulf %543, %545 : vector<8x32xf32>
    %cst_144 = arith.constant dense<0.000000e+00> : vector<8xf32>
    %547 = vector.multi_reduction <add>, %546, %cst_144 [1] : vector<8x32xf32> to vector<8xf32>
    %548 = vector.shape_cast %547 : vector<8xf32> to vector<8x1xf32>
    %549 = arith.mulf %521, %17 : vector<1x16xf32>
    %cst_145 = arith.constant dense<0.000000e+00> : vector<1xf32>
    %550 = vector.multi_reduction <add>, %549, %cst_145 [1] : vector<1x16xf32> to vector<1xf32>
    %551 = vector.shape_cast %550 : vector<1xf32> to vector<1x1xf32>
    %552 = arith.addf %551, %18 : vector<1x1xf32>
    %553 = vector.broadcast %552 : vector<1x1xf32> to vector<8x1xf32>
    %554 = arith.addf %548, %553 : vector<8x1xf32>
    %555 = vector.broadcast %c7_i32 : i32 to vector<8x8xi32>
    %556 = arith.cmpi eq, %29, %555 : vector<8x8xi32>
    %557 = vector.shape_cast %554 : vector<8x1xf32> to vector<8x1xf32>
    %558 = vector.broadcast %557 : vector<8x1xf32> to vector<8x8xf32>
    %559 = arith.select %556, %558, %493 : vector<8x8xi1>, vector<8x8xf32>
    %c8_i32_146 = arith.constant 8 : i32
    %c0_147 = arith.constant 0 : index
    %c0_148 = arith.constant 0 : index
    %560 = vector.load %arg13[%c0_147, %c0_148] : memref<8x8xf32, #tpu.memory_space<vmem>>, vector<8x8xf32>
    tpu.vector_store %arg13[%c0_147, %c0_148], %559 {strides = array<i32>} : memref<8x8xf32, #tpu.memory_space<vmem>>, vector<8x8xf32>,
    return
  }
}

</mosaic_0001>

<llo_original>
// kernel: tpu_custom_call.1
$region0: #{tpu_custom_call.1}
  #allocation0 [shape = 'u32[]', space=smem, size = 0x4, offset = 0x4, fixed_abs, tag = 'smem constant byte address 0x4 - core index']
  #allocation1 [shape = 'u32[144,128]{1,0:T(1,128)}', space=vmem, size = 0x12000, scoped, tag = 'internal scratch']
  #allocation2 [shape = 'f32[64,16]{1,0:T(8,128)}', space=vmem, size = 0x8000, scoped, tag = 'scratch operand']
  #allocation3 [shape = 'f32[64,128]{1,0:T(8,128)}', space=vmem, size = 0x8000, scoped, tag = 'scratch operand']
  #allocation4 [shape = 'f32[1,1]{1,0:T(1,128)S(1)}', space=vmem, size = 0x200, scoped, tag = 'scoped memory for tpu_custom_call.1']
  #allocation5 [shape = 'f32[1,1]{1,0:T(1,128)S(1)}', space=vmem, size = 0x200, scoped, tag = 'scoped memory for tpu_custom_call.1']
  %s0 = inlined_call_operand.vmem [shape: f32[64,16], index: 0, kind: input, shape index: {}]
  %s1 = inlined_call_operand.vmem [shape: f32[64,1], index: 1, kind: input, shape index: {}]
  %s2 = inlined_call_operand.vmem [shape: f32[80,16], index: 2, kind: input, shape index: {}]
  %s3 = inlined_call_operand.vmem [shape: f32[1,16], index: 3, kind: input, shape index: {}]
  %s4 = inlined_call_operand.vmem [shape: f32[1,16], index: 4, kind: input, shape index: {}]
  %s5 = inlined_call_operand.vmem [shape: f32[17,1], index: 5, kind: input, shape index: {}]
  %s6 = inlined_call_operand.<no memory space> [shape: f32[1,1], index: 6, kind: input, shape index: {}]
  %s7 = inlined_call_operand.vmem [shape: f32[1,128], index: 7, kind: input, shape index: {}]
  %s8 = inlined_call_operand.vmem [shape: f32[32,128], index: 8, kind: input, shape index: {}]
  %s9 = inlined_call_operand.vmem [shape: f32[1,128], index: 9, kind: input, shape index: {}]
  %s10 = inlined_call_operand.vmem [shape: f32[1,32], index: 10, kind: input, shape index: {}]
  %s11 = inlined_call_operand.vmem [shape: f32[1,16], index: 11, kind: input, shape index: {}]
  %s12 = inlined_call_operand.<no memory space> [shape: f32[1,1], index: 12, kind: input, shape index: {}]
  %s13 = inlined_call_operand.hbm [shape: f32[8,8], index: 13, kind: output, shape index: {}]
  %s14 = sld [smem:[#allocation0]]
  $region62: #{tpu_custom_call.1} parent=0
    _
  %s16 = ssub.s32 1, %s14
  %s17 = scalar_select 0, %s16, %s14
  %v18 = vstv %s6
  %19 = vst [vmem:[#allocation4] sm:$0x1] %v18
  %v20 = vstv %s12
  %21 = vst [vmem:[#allocation5] sm:$0x1] %v20
  $region1: #{tpu_custom_call.1} parent=0
    #allocation6 [shape = 'u8[4096]{0}', space=vmem, size = 0x1000, scoped, tag = 'output window, operand 0, single buffered']
    #allocation7 [shape = 's32[1]{0}', space=sflag, size = 0x4, scoped, tag = 'scoped memory for tpu_custom_call.1']
    %22 = vsyncpa [#allocation7], 0
    // Predicated region
    $region2: #{tpu_custom_call.1} parent=1 // pred_check
      _
    $region3: #{tpu_custom_call.1} parent=1 // pred_check_branch
      %24 = sbr.rel (0) target = $region5
    $region4: #{tpu_custom_call.1} parent=1 // pred_region
      _
    $region5: #{tpu_custom_call.1} parent=1 // pred_fallthru
      _
    // Predicated region
    $region6: #{tpu_custom_call.1} parent=1 // pred_check
      _
    $region7: #{tpu_custom_call.1} parent=1 // pred_check_branch
      %26 = sbr.rel (0) target = $region9
    $region8: #{tpu_custom_call.1} parent=1 // pred_region
      _
    $region9: #{tpu_custom_call.1} parent=1 // pred_fallthru
      _
    // Predicated region
    $region10: #{tpu_custom_call.1} parent=1 // pred_check
      _
    $region11: #{tpu_custom_call.1} parent=1 // pred_check_branch
      %28 = sbr.rel (0) target = $region13
    $region12: #{tpu_custom_call.1} parent=1 // pred_region
      _
    $region13: #{tpu_custom_call.1} parent=1 // pred_fallthru
      _
    // Predicated region
    $region14: #{tpu_custom_call.1} parent=1 // pred_check
      _
    $region15: #{tpu_custom_call.1} parent=1 // pred_check_branch
      %30 = sbr.rel (0) target = $region17
    $region16: #{tpu_custom_call.1} parent=1 // pred_region
      _
    $region17: #{tpu_custom_call.1} parent=1 // pred_fallthru
      _
    // Predicated region
    $region18: #{tpu_custom_call.1} parent=1 // pred_check
      _
    $region19: #{tpu_custom_call.1} parent=1 // pred_check_branch
      %32 = sbr.rel (0) target = $region21
    $region20: #{tpu_custom_call.1} parent=1 // pred_region
      _
    $region21: #{tpu_custom_call.1} parent=1 // pred_fallthru
      _
    // Predicated region
    $region22: #{tpu_custom_call.1} parent=1 // pred_check
      _
    $region23: #{tpu_custom_call.1} parent=1 // pred_check_branch
      %34 = sbr.rel (0) target = $region25
    $region24: #{tpu_custom_call.1} parent=1 // pred_region
      _
    $region25: #{tpu_custom_call.1} parent=1 // pred_fallthru
      _
    // Predicated region
    $region26: #{tpu_custom_call.1} parent=1 // pred_check
      _
    $region27: #{tpu_custom_call.1} parent=1 // pred_check_branch
      %36 = sbr.rel (0) target = $region29
    $region28: #{tpu_custom_call.1} parent=1 // pred_region
      _
    $region29: #{tpu_custom_call.1} parent=1 // pred_fallthru
      _
    // Predicated region
    $region30: #{tpu_custom_call.1} parent=1 // pred_check
      _
    $region31: #{tpu_custom_call.1} parent=1 // pred_check_branch
      %38 = sbr.rel (0) target = $region33
    $region32: #{tpu_custom_call.1} parent=1 // pred_region
      _
    $region33: #{tpu_custom_call.1} parent=1 // pred_fallthru
      _
    // Predicated region
    $region34: #{tpu_custom_call.1} parent=1 // pred_check
      _
    $region35: #{tpu_custom_call.1} parent=1 // pred_check_branch
      %40 = sbr.rel (0) target = $region37
    $region36: #{tpu_custom_call.1} parent=1 // pred_region
      _
    $region37: #{tpu_custom_call.1} parent=1 // pred_fallthru
      _
    // Predicated region
    $region38: #{tpu_custom_call.1} parent=1 // pred_check
      _
    $region39: #{tpu_custom_call.1} parent=1 // pred_check_branch
      %42 = sbr.rel (0) target = $region41
    $region40: #{tpu_custom_call.1} parent=1 // pred_region
      _
    $region41: #{tpu_custom_call.1} parent=1 // pred_fallthru
      _
    // Predicated region
    $region42: #{tpu_custom_call.1} parent=1 // pred_check
      _
    $region43: #{tpu_custom_call.1} parent=1 // pred_check_branch
      %44 = sbr.rel (0) target = $region45
    $region44: #{tpu_custom_call.1} parent=1 // pred_region
      _
    $region45: #{tpu_custom_call.1} parent=1 // pred_fallthru
      _
    // Predicated region
    $region46: #{tpu_custom_call.1} parent=1 // pred_check
      _
    $region47: #{tpu_custom_call.1} parent=1 // pred_check_branch
      %46 = sbr.rel (0) target = $region49
    $region48: #{tpu_custom_call.1} parent=1 // pred_region
      _
    $region49: #{tpu_custom_call.1} parent=1 // pred_fallthru
      _
    // Predicated region
    $region50: #{tpu_custom_call.1} parent=1 // pred_check
      _
    $region51: #{tpu_custom_call.1} parent=1 // pred_check_branch
      %48 = sbr.rel (0) target = $region53
    $region52: #{tpu_custom_call.1} parent=1 // pred_region
      _
    $region53: #{tpu_custom_call.1} parent=1 // pred_fallthru
      _
    %v49 = vld [vmem:[%s2] sm:$0xff]
    %v50 = vld [vmem:[%s2 + $0x8] sm:$0xff]
    %v51 = vld [vmem:[%s2 + $0x10] sm:$0xff]
    %v52 = vld [vmem:[%s2 + $0x18] sm:$0xff]
    %v53 = vld [vmem:[%s2 + $0x20] sm:$0xff]
    %v54 = vld [vmem:[%s2 + $0x28] sm:$0xff]
    %v55 = vld [vmem:[%s2 + $0x30] sm:$0xff]
    %v56 = vld [vmem:[%s2 + $0x38] sm:$0xff]
    %v57 = vld [vmem:[%s2 + $0x40] sm:$0xff]
    %v58 = vld [vmem:[%s2 + $0x48] sm:$0xff]
    %v59 = vld [vmem:[%s3] sm:$0x1]
    %v60 = vld [vmem:[%s4] sm:$0x1]
    %v61 = vld [vmem:[%s5] sm:$0xff]
    %v62 = vld [vmem:[%s5 + $0x8] sm:$0xff]
    %v63 = vld [vmem:[%s5 + $0x10] sm:$0x1]
    %v64 = vld [vmem:[#allocation4] sm:$0x1]
    %v65 = vld [vmem:[%s7] sm:$0x1]
    %v66 = vld [vmem:[%s8] sm:$0xff]
    %v67 = vld [vmem:[%s8 + $0x8] sm:$0xff]
    %v68 = vld [vmem:[%s8 + $0x10] sm:$0xff]
    %v69 = vld [vmem:[%s8 + $0x18] sm:$0xff]
    %v70 = vld [vmem:[%s9] sm:$0x1]
    %vm71 = vcmask 7168
    %v73 = vsel %vm71, %v61, 0
    %v76 = vsel %vm71, %v62, 0
    %vm78 = vcmask 1040384
    %v80 = vsel %vm78, %v65, 0
    %82 = vmatprep.subr.mxu0 0.0
    %83 = vmatpush1.msra.mxu0 %v80
    %84 = vmatprep.subr.mxu0 0.0
    %85 = vmatpush1.msra.mxu0 0.0
    %86 = vmatprep.subr.mxu0 0.0
    %87 = vmatpush1.msra.mxu0 0.0
    %88 = vmatprep.subr.mxu0 0.0
    %89 = vmatpush1.msra.mxu0 0.0
    %90 = vmatprep.subr.mxu0 0.0
    %91 = vmatpush1.msra.mxu0 0.0
    %92 = vmatprep.subr.mxu0 0.0
    %93 = vmatpush1.msra.mxu0 0.0
    %94 = vmatprep.subr.mxu0 0.0
    %95 = vmatpush1.msra.mxu0 0.0
    %96 = vmatprep.subr.mxu0 0.0
    %97 = vmatpush1.msra.mxu0 0.0
    %98 = vmatprep.subr.mxu0 0.0
    %99 = vmatpush1.msra.mxu0 0.0
    %100 = vmatprep.subr.mxu0 0.0
    %101 = vmatpush1.msra.mxu0 0.0
    %102 = vmatprep.subr.mxu0 0.0
    %103 = vmatpush1.msra.mxu0 0.0
    %104 = vmatprep.subr.mxu0 0.0
    %105 = vmatpush1.msra.mxu0 0.0
    %106 = vmatprep.subr.mxu0 0.0
    %107 = vmatpush1.msra.mxu0 0.0
    %108 = vmatprep.subr.mxu0 0.0
    %109 = vmatpush1.msra.mxu0 0.0
    %110 = vmatprep.subr.mxu0 0.0
    %111 = vmatpush1.msra.mxu0 0.0
    %112 = vmatprep.subr.mxu0 0.0
    %113 = vmatpush1.msra.mxu0 0.0
    %114 = vmatprep.subr.mxu0 0.0
    %115 = vmatpush1.msra.mxu0 0.0
    %116 = vmatprep.subr.mxu0 0.0
    %117 = vmatpush1.msra.mxu0 0.0
    %118 = vmatprep.subr.mxu0 0.0
    %119 = vmatpush1.msra.mxu0 0.0
    %120 = vmatprep.subr.mxu0 0.0
    %121 = vmatpush1.msra.mxu0 0.0
    %122 = vmatprep.subr.mxu0 0.0
    %123 = vmatpush1.msra.mxu0 0.0
    %124 = vmatprep.subr.mxu0 0.0
    %125 = vmatpush1.msra.mxu0 0.0
    %126 = vmatprep.subr.mxu0 0.0
    %127 = vmatpush1.msra.mxu0 0.0
    %128 = vmatprep.subr.mxu0 0.0
    %129 = vmatpush1.msra.mxu0 0.0
    %130 = vmatprep.subr.mxu0 0.0
    %131 = vmatpush1.msra.mxu0 0.0
    %132 = vmatprep.subr.mxu0 0.0
    %133 = vmatpush1.msra.mxu0 0.0
    %134 = vmatprep.subr.mxu0 0.0
    %135 = vmatpush1.msra.mxu0 0.0
    %136 = vmatprep.subr.mxu0 0.0
    %137 = vmatpush1.msra.mxu0 0.0
    %138 = vmatprep.subr.mxu0 0.0
    %139 = vmatpush1.msra.mxu0 0.0
    %140 = vmatprep.subr.mxu0 0.0
    %141 = vmatpush1.msra.mxu0 0.0
    %142 = vmatprep.subr.mxu0 0.0
    %143 = vmatpush1.msra.mxu0 0.0
    %144 = vmatprep.subr.mxu0 0.0
    %145 = vmatpush1.msra.mxu0 0.0
    %146 = vmatprep.mubr.f32.mxu0 0.0
    %147 = vmatmul.mubr.f32.gmra.mrb[0].mxu0 %v73
    %v148 = vpop.f32.mrb[0].mxu0
    %v149 = vadd.f32 0.0, %v148
    %v150 = vpop.f32.mrb[0].mxu0
    %151 = vmatprep.mubr.f32.mxu0 0.0
    %152 = vmatmul.mubr.f32.gmra.mrb[0].mxu0 %v76
    %v153 = vpop.f32.mrb[0].mxu0
    %v154 = vadd.f32 0.0, %v153
    %v155 = vpop.f32.mrb[0].mxu0
    %156 = vdwg.mxu0
    %v158 = vsel %vm71, %v63, 0
    %160 = vmatprep.subr.mxu0 0.0
    %161 = vmatpush1.msra.mxu0 %v80
    %162 = vmatprep.subr.mxu0 0.0
    %163 = vmatpush1.msra.mxu0 0.0
    %164 = vmatprep.subr.mxu0 0.0
    %165 = vmatpush1.msra.mxu0 0.0
    %166 = vmatprep.subr.mxu0 0.0
    %167 = vmatpush1.msra.mxu0 0.0
    %168 = vmatprep.subr.mxu0 0.0
    %169 = vmatpush1.msra.mxu0 0.0
    %170 = vmatprep.subr.mxu0 0.0
    %171 = vmatpush1.msra.mxu0 0.0
    %172 = vmatprep.subr.mxu0 0.0
    %173 = vmatpush1.msra.mxu0 0.0
    %174 = vmatprep.subr.mxu0 0.0
    %175 = vmatpush1.msra.mxu0 0.0
    %176 = vmatprep.subr.mxu0 0.0
    %177 = vmatpush1.msra.mxu0 0.0
    %178 = vmatprep.subr.mxu0 0.0
    %179 = vmatpush1.msra.mxu0 0.0
    %180 = vmatprep.subr.mxu0 0.0
    %181 = vmatpush1.msra.mxu0 0.0
    %182 = vmatprep.subr.mxu0 0.0
    %183 = vmatpush1.msra.mxu0 0.0
    %184 = vmatprep.subr.mxu0 0.0
    %185 = vmatpush1.msra.mxu0 0.0
    %186 = vmatprep.subr.mxu0 0.0
    %187 = vmatpush1.msra.mxu0 0.0
    %188 = vmatprep.subr.mxu0 0.0
    %189 = vmatpush1.msra.mxu0 0.0
    %190 = vmatprep.subr.mxu0 0.0
    %191 = vmatpush1.msra.mxu0 0.0
    %192 = vmatprep.subr.mxu0 0.0
    %193 = vmatpush1.msra.mxu0 0.0
    %194 = vmatprep.subr.mxu0 0.0
    %195 = vmatpush1.msra.mxu0 0.0
    %196 = vmatprep.subr.mxu0 0.0
    %197 = vmatpush1.msra.mxu0 0.0
    %198 = vmatprep.subr.mxu0 0.0
    %199 = vmatpush1.msra.mxu0 0.0
    %200 = vmatprep.subr.mxu0 0.0
    %201 = vmatpush1.msra.mxu0 0.0
    %202 = vmatprep.subr.mxu0 0.0
    %203 = vmatpush1.msra.mxu0 0.0
    %204 = vmatprep.subr.mxu0 0.0
    %205 = vmatpush1.msra.mxu0 0.0
    %206 = vmatprep.subr.mxu0 0.0
    %207 = vmatpush1.msra.mxu0 0.0
    %208 = vmatprep.subr.mxu0 0.0
    %209 = vmatpush1.msra.mxu0 0.0
    %210 = vmatprep.subr.mxu0 0.0
    %211 = vmatpush1.msra.mxu0 0.0
    %212 = vmatprep.subr.mxu0 0.0
    %213 = vmatpush1.msra.mxu0 0.0
    %214 = vmatprep.subr.mxu0 0.0
    %215 = vmatpush1.msra.mxu0 0.0
    %216 = vmatprep.subr.mxu0 0.0
    %217 = vmatpush1.msra.mxu0 0.0
    %218 = vmatprep.subr.mxu0 0.0
    %219 = vmatpush1.msra.mxu0 0.0
    %220 = vmatprep.subr.mxu0 0.0
    %221 = vmatpush1.msra.mxu0 0.0
    %222 = vmatprep.subr.mxu0 0.0
    %223 = vmatpush1.msra.mxu0 0.0
    %224 = vmatprep.mubr.f32.mxu0 0.0
    %225 = vmatmul.mubr.f32.gmra.mrb[0].mxu0 %v158
    %v226 = vpop.f32.mrb[0].mxu0
    %v227 = vadd.f32 0.0, %v226
    %v228 = vpop.f32.mrb[0].mxu0
    %229 = vdwg.mxu0
    %v231 = vsel %vm71, %v64, 0
    %233 = vmatprep.subr.mxu0 0.0
    %234 = vmatpush1.msra.mxu0 %v80
    %235 = vmatprep.subr.mxu0 0.0
    %236 = vmatpush1.msra.mxu0 0.0
    %237 = vmatprep.subr.mxu0 0.0
    %238 = vmatpush1.msra.mxu0 0.0
    %239 = vmatprep.subr.mxu0 0.0
    %240 = vmatpush1.msra.mxu0 0.0
    %241 = vmatprep.subr.mxu0 0.0
    %242 = vmatpush1.msra.mxu0 0.0
    %243 = vmatprep.subr.mxu0 0.0
    %244 = vmatpush1.msra.mxu0 0.0
    %245 = vmatprep.subr.mxu0 0.0
    %246 = vmatpush1.msra.mxu0 0.0
    %247 = vmatprep.subr.mxu0 0.0
    %248 = vmatpush1.msra.mxu0 0.0
    %249 = vmatprep.subr.mxu0 0.0
    %250 = vmatpush1.msra.mxu0 0.0
    %251 = vmatprep.subr.mxu0 0.0
    %252 = vmatpush1.msra.mxu0 0.0
    %253 = vmatprep.subr.mxu0 0.0
    %254 = vmatpush1.msra.mxu0 0.0
    %255 = vmatprep.subr.mxu0 0.0
    %256 = vmatpush1.msra.mxu0 0.0
    %257 = vmatprep.subr.mxu0 0.0
    %258 = vmatpush1.msra.mxu0 0.0
    %259 = vmatprep.subr.mxu0 0.0
    %260 = vmatpush1.msra.mxu0 0.0
    %261 = vmatprep.subr.mxu0 0.0
    %262 = vmatpush1.msra.mxu0 0.0
    %263 = vmatprep.subr.mxu0 0.0
    %264 = vmatpush1.msra.mxu0 0.0
    %265 = vmatprep.subr.mxu0 0.0
    %266 = vmatpush1.msra.mxu0 0.0
    %267 = vmatprep.subr.mxu0 0.0
    %268 = vmatpush1.msra.mxu0 0.0
    %269 = vmatprep.subr.mxu0 0.0
    %270 = vmatpush1.msra.mxu0 0.0
    %271 = vmatprep.subr.mxu0 0.0
    %272 = vmatpush1.msra.mxu0 0.0
    %273 = vmatprep.subr.mxu0 0.0
    %274 = vmatpush1.msra.mxu0 0.0
    %275 = vmatprep.subr.mxu0 0.0
    %276 = vmatpush1.msra.mxu0 0.0
    %277 = vmatprep.subr.mxu0 0.0
    %278 = vmatpush1.msra.mxu0 0.0
    %279 = vmatprep.subr.mxu0 0.0
    %280 = vmatpush1.msra.mxu0 0.0
    %281 = vmatprep.subr.mxu0 0.0
    %282 = vmatpush1.msra.mxu0 0.0
    %283 = vmatprep.subr.mxu0 0.0
    %284 = vmatpush1.msra.mxu0 0.0
    %285 = vmatprep.subr.mxu0 0.0
    %286 = vmatpush1.msra.mxu0 0.0
    %287 = vmatprep.subr.mxu0 0.0
    %288 = vmatpush1.msra.mxu0 0.0
    %289 = vmatprep.subr.mxu0 0.0
    %290 = vmatpush1.msra.mxu0 0.0
    %291 = vmatprep.subr.mxu0 0.0
    %292 = vmatpush1.msra.mxu0 0.0
    %293 = vmatprep.subr.mxu0 0.0
    %294 = vmatpush1.msra.mxu0 0.0
    %295 = vmatprep.subr.mxu0 0.0
    %296 = vmatpush1.msra.mxu0 0.0
    %297 = vmatprep.mubr.f32.mxu0 0.0
    %298 = vmatmul.mubr.f32.gmra.mrb[0].mxu0 %v231
    %v299 = vpop.f32.mrb[0].mxu0
    %v300 = vadd.f32 %v70, %v299
    %v301 = vpop.f32.mrb[0].mxu0
    %302 = vdwg.mxu0
    %v303 = vld [vmem:[%s10] sm:$0x1]
    %v304 = vld [vmem:[%s11] sm:$0x1]
    %v305 = vld [vmem:[#allocation5] sm:$0x1]
    %v306 = vld [vmem:[%s0] sm:$0xff]
    %v307 = vld [vmem:[%s0 + $0x8] sm:$0xff]
    %v308 = vld [vmem:[%s0 + $0x10] sm:$0xff]
    %v309 = vld [vmem:[%s0 + $0x18] sm:$0xff]
    %v310 = vld [vmem:[%s0 + $0x20] sm:$0xff]
    %v311 = vld [vmem:[%s0 + $0x28] sm:$0xff]
    %v312 = vld [vmem:[%s0 + $0x30] sm:$0xff]
    %v313 = vld [vmem:[%s0 + $0x38] sm:$0xff]
    %v315 = vlaneseq
    %v316 = vshrl.u32 %v315, 7
    %v317 = vsub.s32 0, %v316
    %v318 = vrot.slane %v59, %v317
    %vm320 = vcmask 130048
    %v322 = vsel %vm320, %v306, 0
    %v325 = vsel %vm320, %v307, 0
    %v328 = vsel %vm320, %v308, 0
    %v331 = vsel %vm320, %v309, 0
    %v334 = vsel %vm320, %v310, 0
    %v337 = vsel %vm320, %v311, 0
    %v340 = vsel %vm320, %v312, 0
    %v343 = vsel %vm320, %v313, 0
    %345 = vmatprep.subr.mxu0 0.0
    %346 = vmatpush1.msra.mxu0 %v57
    %347 = vmatprep.subr.mxu0 0.0
    %348 = vmatpush1.msra.mxu0 %v58
    %349 = vmatprep.subr.mxu0 0.0
    %350 = vmatpush1.msra.mxu0 0.0
    %351 = vmatprep.subr.mxu0 0.0
    %352 = vmatpush1.msra.mxu0 0.0
    %353 = vmatprep.subr.mxu0 0.0
    %354 = vmatpush1.msra.mxu0 0.0
    %355 = vmatprep.subr.mxu0 0.0
    %356 = vmatpush1.msra.mxu0 0.0
    %357 = vmatprep.subr.mxu0 0.0
    %358 = vmatpush1.msra.mxu0 0.0
    %359 = vmatprep.subr.mxu0 0.0
    %360 = vmatpush1.msra.mxu0 0.0
    %361 = vmatprep.subr.mxu0 0.0
    %362 = vmatpush1.msra.mxu0 0.0
    %363 = vmatprep.subr.mxu0 0.0
    %364 = vmatpush1.msra.mxu0 0.0
    %365 = vmatprep.subr.mxu0 0.0
    %366 = vmatpush1.msra.mxu0 0.0
    %367 = vmatprep.subr.mxu0 0.0
    %368 = vmatpush1.msra.mxu0 0.0
    %369 = vmatprep.subr.mxu0 0.0
    %370 = vmatpush1.msra.mxu0 0.0
    %371 = vmatprep.subr.mxu0 0.0
    %372 = vmatpush1.msra.mxu0 0.0
    %373 = vmatprep.subr.mxu0 0.0
    %374 = vmatpush1.msra.mxu0 0.0
    %375 = vmatprep.subr.mxu0 0.0
    %376 = vmatpush1.msra.mxu0 0.0
    %377 = vmatprep.subr.mxu0 0.0
    %378 = vmatpush1.msra.mxu0 0.0
    %379 = vmatprep.subr.mxu0 0.0
    %380 = vmatpush1.msra.mxu0 0.0
    %381 = vmatprep.subr.mxu0 0.0
    %382 = vmatpush1.msra.mxu0 0.0
    %383 = vmatprep.subr.mxu0 0.0
    %384 = vmatpush1.msra.mxu0 0.0
    %385 = vmatprep.subr.mxu0 0.0
    %386 = vmatpush1.msra.mxu0 0.0
    %387 = vmatprep.subr.mxu0 0.0
    %388 = vmatpush1.msra.mxu0 0.0
    %389 = vmatprep.subr.mxu0 0.0
    %390 = vmatpush1.msra.mxu0 0.0
    %391 = vmatprep.subr.mxu0 0.0
    %392 = vmatpush1.msra.mxu0 0.0
    %393 = vmatprep.subr.mxu0 0.0
    %394 = vmatpush1.msra.mxu0 0.0
    %395 = vmatprep.subr.mxu0 0.0
    %396 = vmatpush1.msra.mxu0 0.0
    %397 = vmatprep.subr.mxu0 0.0
    %398 = vmatpush1.msra.mxu0 0.0
    %399 = vmatprep.subr.mxu0 0.0
    %400 = vmatpush1.msra.mxu0 0.0
    %401 = vmatprep.subr.mxu0 0.0
    %402 = vmatpush1.msra.mxu0 0.0
    %403 = vmatprep.subr.mxu0 0.0
    %404 = vmatpush1.msra.mxu0 0.0
    %405 = vmatprep.subr.mxu0 0.0
    %406 = vmatpush1.msra.mxu0 0.0
    %407 = vmatprep.subr.mxu0 0.0
    %408 = vmatpush1.msra.mxu0 0.0
    %409 = vmatprep.mubr.f32.mxu0 0.0
    %410 = vmatmul.mubr.f32.gmra.mrb[0].mxu0 %v322
    %v411 = vpop.f32.mrb[0].mxu0
    %v412 = vadd.f32 %v318, %v411
    %v413 = vpop.f32.mrb[0].mxu0
    %414 = vmatprep.mubr.f32.mxu0 0.0
    %415 = vmatmul.mubr.f32.gmra.mrb[0].mxu0 %v325
    %v416 = vpop.f32.mrb[0].mxu0
    %v417 = vadd.f32 %v318, %v416
    %v418 = vpop.f32.mrb[0].mxu0
    %419 = vmatprep.mubr.f32.mxu0 0.0
    %420 = vmatmul.mubr.f32.gmra.mrb[0].mxu0 %v328
    %v421 = vpop.f32.mrb[0].mxu0
    %v422 = vadd.f32 %v318, %v421
    %v423 = vpop.f32.mrb[0].mxu0
    %424 = vmatprep.mubr.f32.mxu0 0.0
    %425 = vmatmul.mubr.f32.gmra.mrb[0].mxu0 %v331
    %v426 = vpop.f32.mrb[0].mxu0
    %v427 = vadd.f32 %v318, %v426
    %v428 = vpop.f32.mrb[0].mxu0
    %429 = vmatprep.mubr.f32.mxu0 0.0
    %430 = vmatmul.mubr.f32.gmra.mrb[0].mxu0 %v334
    %v431 = vpop.f32.mrb[0].mxu0
    %v432 = vadd.f32 %v318, %v431
    %v433 = vpop.f32.mrb[0].mxu0
    %434 = vmatprep.mubr.f32.mxu0 0.0
    %435 = vmatmul.mubr.f32.gmra.mrb[0].mxu0 %v337
    %v436 = vpop.f32.mrb[0].mxu0
    %v437 = vadd.f32 %v318, %v436
    %v438 = vpop.f32.mrb[0].mxu0
    %439 = vmatprep.mubr.f32.mxu0 0.0
    %440 = vmatmul.mubr.f32.gmra.mrb[0].mxu0 %v340
    %v441 = vpop.f32.mrb[0].mxu0
    %v442 = vadd.f32 %v318, %v441
    %v443 = vpop.f32.mrb[0].mxu0
    %444 = vmatprep.mubr.f32.mxu0 0.0
    %445 = vmatmul.mubr.f32.gmra.mrb[0].mxu0 %v343
    %v446 = vpop.f32.mrb[0].mxu0
    %v447 = vadd.f32 %v318, %v446
    %v448 = vpop.f32.mrb[0].mxu0
    %449 = vdwg.mxu0
    %450 = vst.msk [vmem:[#allocation2] sm:$0xff] %vm320, %v412
    %451 = vst.msk [vmem:[#allocation2 + $0x8] sm:$0xff] %vm320, %v417
    %452 = vst.msk [vmem:[#allocation2 + $0x10] sm:$0xff] %vm320, %v422
    %453 = vst.msk [vmem:[#allocation2 + $0x18] sm:$0xff] %vm320, %v427
    %454 = vst.msk [vmem:[#allocation2 + $0x20] sm:$0xff] %vm320, %v432
    %455 = vst.msk [vmem:[#allocation2 + $0x28] sm:$0xff] %vm320, %v437
    %456 = vst.msk [vmem:[#allocation2 + $0x30] sm:$0xff] %vm320, %v442
    %457 = vst.msk [vmem:[#allocation2 + $0x38] sm:$0xff] %vm320, %v447
    %v458 = vld [vmem:[%s1] sm:$0xff]
    %v459 = vld [vmem:[%s1 + $0x8] sm:$0xff]
    %v460 = vld [vmem:[%s1 + $0x10] sm:$0xff]
    %v461 = vld [vmem:[%s1 + $0x18] sm:$0xff]
    %v462 = vld [vmem:[%s1 + $0x20] sm:$0xff]
    %v463 = vld [vmem:[%s1 + $0x28] sm:$0xff]
    %v464 = vld [vmem:[%s1 + $0x30] sm:$0xff]
    %v465 = vld [vmem:[%s1 + $0x38] sm:$0xff]
    %v466 = vlaneseq
    %v467 = vshrl.u32 %v466, 7
    %v468 = vsub.s32 0, %v467
    %v469 = vrot.slane %v300, %v468
    %v471 = vsel %vm71, %v458, 0
    %v474 = vsel %vm71, %v459, 0
    %v477 = vsel %vm71, %v460, 0
    %v480 = vsel %vm71, %v461, 0
    %v483 = vsel %vm71, %v462, 0
    %v486 = vsel %vm71, %v463, 0
    %v489 = vsel %vm71, %v464, 0
    %v492 = vsel %vm71, %v465, 0
    %v495 = vsel %vm78, %v227, 0
    %497 = vmatprep.subr.mxu0 0.0
    %498 = vmatpush1.msra.mxu0 %v495
    %499 = vmatprep.subr.mxu0 0.0
    %500 = vmatpush1.msra.mxu0 0.0
    %501 = vmatprep.subr.mxu0 0.0
    %502 = vmatpush1.msra.mxu0 0.0
    %503 = vmatprep.subr.mxu0 0.0
    %504 = vmatpush1.msra.mxu0 0.0
    %505 = vmatprep.subr.mxu0 0.0
    %506 = vmatpush1.msra.mxu0 0.0
    %507 = vmatprep.subr.mxu0 0.0
    %508 = vmatpush1.msra.mxu0 0.0
    %509 = vmatprep.subr.mxu0 0.0
    %510 = vmatpush1.msra.mxu0 0.0
    %511 = vmatprep.subr.mxu0 0.0
    %512 = vmatpush1.msra.mxu0 0.0
    %513 = vmatprep.subr.mxu0 0.0
    %514 = vmatpush1.msra.mxu0 0.0
    %515 = vmatprep.subr.mxu0 0.0
    %516 = vmatpush1.msra.mxu0 0.0
    %517 = vmatprep.subr.mxu0 0.0
    %518 = vmatpush1.msra.mxu0 0.0
    %519 = vmatprep.subr.mxu0 0.0
    %520 = vmatpush1.msra.mxu0 0.0
    %521 = vmatprep.subr.mxu0 0.0
    %522 = vmatpush1.msra.mxu0 0.0
    %523 = vmatprep.subr.mxu0 0.0
    %524 = vmatpush1.msra.mxu0 0.0
    %525 = vmatprep.subr.mxu0 0.0
    %526 = vmatpush1.msra.mxu0 0.0
    %527 = vmatprep.subr.mxu0 0.0
    %528 = vmatpush1.msra.mxu0 0.0
    %529 = vmatprep.subr.mxu0 0.0
    %530 = vmatpush1.msra.mxu0 0.0
    %531 = vmatprep.subr.mxu0 0.0
    %532 = vmatpush1.msra.mxu0 0.0
    %533 = vmatprep.subr.mxu0 0.0
    %534 = vmatpush1.msra.mxu0 0.0
    %535 = vmatprep.subr.mxu0 0.0
    %536 = vmatpush1.msra.mxu0 0.0
    %537 = vmatprep.subr.mxu0 0.0
    %538 = vmatpush1.msra.mxu0 0.0
    %539 = vmatprep.subr.mxu0 0.0
    %540 = vmatpush1.msra.mxu0 0.0
    %541 = vmatprep.subr.mxu0 0.0
    %542 = vmatpush1.msra.mxu0 0.0
    %543 = vmatprep.subr.mxu0 0.0
    %544 = vmatpush1.msra.mxu0 0.0
    %545 = vmatprep.subr.mxu0 0.0
    %546 = vmatpush1.msra.mxu0 0.0
    %547 = vmatprep.subr.mxu0 0.0
    %548 = vmatpush1.msra.mxu0 0.0
    %549 = vmatprep.subr.mxu0 0.0
    %550 = vmatpush1.msra.mxu0 0.0
    %551 = vmatprep.subr.mxu0 0.0
    %552 = vmatpush1.msra.mxu0 0.0
    %553 = vmatprep.subr.mxu0 0.0
    %554 = vmatpush1.msra.mxu0 0.0
    %555 = vmatprep.subr.mxu0 0.0
    %556 = vmatpush1.msra.mxu0 0.0
    %557 = vmatprep.subr.mxu0 0.0
    %558 = vmatpush1.msra.mxu0 0.0
    %559 = vmatprep.subr.mxu0 0.0
    %560 = vmatpush1.msra.mxu0 0.0
    %561 = vmatprep.mubr.f32.mxu0 0.0
    %562 = vmatmul.mubr.f32.gmra.mrb[0].mxu0 %v471
    %v563 = vpop.f32.mrb[0].mxu0
    %v564 = vadd.f32 %v469, %v563
    %v565 = vpop.f32.mrb[0].mxu0
    %566 = vmatprep.mubr.f32.mxu0 0.0
    %567 = vmatmul.mubr.f32.gmra.mrb[0].mxu0 %v474
    %v568 = vpop.f32.mrb[0].mxu0
    %v569 = vadd.f32 %v469, %v568
    %v570 = vpop.f32.mrb[0].mxu0
    %571 = vmatprep.mubr.f32.mxu0 0.0
    %572 = vmatmul.mubr.f32.gmra.mrb[0].mxu0 %v477
    %v573 = vpop.f32.mrb[0].mxu0
    %v574 = vadd.f32 %v469, %v573
    %v575 = vpop.f32.mrb[0].mxu0
    %576 = vmatprep.mubr.f32.mxu0 0.0
    %577 = vmatmul.mubr.f32.gmra.mrb[0].mxu0 %v480
    %v578 = vpop.f32.mrb[0].mxu0
    %v579 = vadd.f32 %v469, %v578
    %v580 = vpop.f32.mrb[0].mxu0
    %581 = vmatprep.mubr.f32.mxu0 0.0
    %582 = vmatmul.mubr.f32.gmra.mrb[0].mxu0 %v483
    %v583 = vpop.f32.mrb[0].mxu0
    %v584 = vadd.f32 %v469, %v583
    %v585 = vpop.f32.mrb[0].mxu0
    %586 = vmatprep.mubr.f32.mxu0 0.0
    %587 = vmatmul.mubr.f32.gmra.mrb[0].mxu0 %v486
    %v588 = vpop.f32.mrb[0].mxu0
    %v589 = vadd.f32 %v469, %v588
    %v590 = vpop.f32.mrb[0].mxu0
    %591 = vmatprep.mubr.f32.mxu0 0.0
    %592 = vmatmul.mubr.f32.gmra.mrb[0].mxu0 %v489
    %v593 = vpop.f32.mrb[0].mxu0
    %v594 = vadd.f32 %v469, %v593
    %v595 = vpop.f32.mrb[0].mxu0
    %596 = vmatprep.mubr.f32.mxu0 0.0
    %597 = vmatmul.mubr.f32.gmra.mrb[0].mxu0 %v492
    %v598 = vpop.f32.mrb[0].mxu0
    %v599 = vadd.f32 %v469, %v598
    %v600 = vpop.f32.mrb[0].mxu0
    %601 = vdwg.mxu0
    %602 = vst [vmem:[#allocation3] sm:$0xff] %v564
    %603 = vst [vmem:[#allocation3 + $0x8] sm:$0xff] %v569
    %604 = vst [vmem:[#allocation3 + $0x10] sm:$0xff] %v574
    %605 = vst [vmem:[#allocation3 + $0x18] sm:$0xff] %v579
    %606 = vst [vmem:[#allocation3 + $0x20] sm:$0xff] %v584
    %607 = vst [vmem:[#allocation3 + $0x28] sm:$0xff] %v589
    %608 = vst [vmem:[#allocation3 + $0x30] sm:$0xff] %v594
    %609 = vst [vmem:[#allocation3 + $0x38] sm:$0xff] %v599
    %v610 = vlaneseq
    %v611 = vand.u32 %v610, 127
    %v612 = vld [vmem:[%s0] sm:$0xff]
    %v613 = vld [vmem:[#allocation2] sm:$0xff]
    %v614 = vld [vmem:[#allocation3] sm:$0xff]
    %vm615 = vcmask 523264
    %v617 = vsel %vm615, 0.0, 0
    %619 = vmatprep.subr.mxu0 0.0
    %620 = vmatpush1.msra.mxu0 %v49
    %621 = vmatprep.subr.mxu0 0.0
    %622 = vmatpush1.msra.mxu0 %v50
    %623 = vmatprep.subr.mxu0 0.0
    %624 = vmatpush1.msra.mxu0 %v51
    %625 = vmatprep.subr.mxu0 0.0
    %626 = vmatpush1.msra.mxu0 %v52
    %627 = vmatprep.subr.mxu0 0.0
    %628 = vmatpush1.msra.mxu0 %v53
    %629 = vmatprep.subr.mxu0 0.0
    %630 = vmatpush1.msra.mxu0 %v54
    %631 = vmatprep.subr.mxu0 0.0
    %632 = vmatpush1.msra.mxu0 %v55
    %633 = vmatprep.subr.mxu0 0.0
    %634 = vmatpush1.msra.mxu0 %v56
    %635 = vmatprep.subr.mxu0 0.0
    %636 = vmatpush1.msra.mxu0 0.0
    %637 = vmatprep.subr.mxu0 0.0
    %638 = vmatpush1.msra.mxu0 0.0
    %639 = vmatprep.subr.mxu0 0.0
    %640 = vmatpush1.msra.mxu0 0.0
    %641 = vmatprep.subr.mxu0 0.0
    %642 = vmatpush1.msra.mxu0 0.0
    %643 = vmatprep.subr.mxu0 0.0
    %644 = vmatpush1.msra.mxu0 0.0
    %645 = vmatprep.subr.mxu0 0.0
    %646 = vmatpush1.msra.mxu0 0.0
    %647 = vmatprep.subr.mxu0 0.0
    %648 = vmatpush1.msra.mxu0 0.0
    %649 = vmatprep.subr.mxu0 0.0
    %650 = vmatpush1.msra.mxu0 0.0
    %651 = vmatprep.subr.mxu0 0.0
    %652 = vmatpush1.msra.mxu0 0.0
    %653 = vmatprep.subr.mxu0 0.0
    %654 = vmatpush1.msra.mxu0 0.0
    %655 = vmatprep.subr.mxu0 0.0
    %656 = vmatpush1.msra.mxu0 0.0
    %657 = vmatprep.subr.mxu0 0.0
    %658 = vmatpush1.msra.mxu0 0.0
    %659 = vmatprep.subr.mxu0 0.0
    %660 = vmatpush1.msra.mxu0 0.0
    %661 = vmatprep.subr.mxu0 0.0
    %662 = vmatpush1.msra.mxu0 0.0
    %663 = vmatprep.subr.mxu0 0.0
    %664 = vmatpush1.msra.mxu0 0.0
    %665 = vmatprep.subr.mxu0 0.0
    %666 = vmatpush1.msra.mxu0 0.0
    %667 = vmatprep.subr.mxu0 0.0
    %668 = vmatpush1.msra.mxu0 0.0
    %669 = vmatprep.subr.mxu0 0.0
    %670 = vmatpush1.msra.mxu0 0.0
    %671 = vmatprep.subr.mxu0 0.0
    %672 = vmatpush1.msra.mxu0 0.0
    %673 = vmatprep.subr.mxu0 0.0
    %674 = vmatpush1.msra.mxu0 0.0
    %675 = vmatprep.subr.mxu0 0.0
    %676 = vmatpush1.msra.mxu0 0.0
    %677 = vmatprep.subr.mxu0 0.0
    %678 = vmatpush1.msra.mxu0 0.0
    %679 = vmatprep.subr.mxu0 0.0
    %680 = vmatpush1.msra.mxu0 0.0
    %681 = vmatprep.subr.mxu0 0.0
    %682 = vmatpush1.msra.mxu0 0.0
    %683 = vmatprep.mubr.f32.mxu0 0.0
    %684 = vmatmul.mubr.f32.gmra.mrb[0].mxu0 %v617
    %v685 = vpop.f32.mrb[0].mxu0
    %v686 = vadd.f32 %v613, %v685
    %v687 = vpop.f32.mrb[0].mxu0
    %688 = vdwg.mxu0
    %v689 = vtanh.pop %v686
    %v691 = vlaneseq
    %v692 = vshrl.u32 %v691, 7
    %v693 = vsub.s32 0, %v692
    %v694 = vrot.slane %v60, %v693
    %v696 = vmul.f32 %v689, %v694
    %v697 = vsel %vm320, %v696, 0.0
    %698 = vadd.xlane.f32.xlu0 %v697
    %v699 = vpop.xlane.xlu0 %698
    %v700 = vrot.slane %v699, 4
    %v701 = vmax.f32 %v699, %v700
    %v702 = vrot.slane %v701, 2
    %v703 = vmax.f32 %v701, %v702
    %v704 = vrot.slane %v703, 1
    %v705 = vmax.f32 %v703, %v704
    %v706 = vsub.f32 %v699, %v705
    %v707 = vmul.f32 %v706, 1.442695
    %v708 = vpow.pop %v707
    %v709 = vrot.slane %v708, 4
    %v710 = vadd.f32 %v708, %v709
    %v711 = vrot.slane %v710, 2
    %v712 = vadd.f32 %v710, %v711
    %v713 = vrot.slane %v712, 1
    %v714 = vadd.f32 %v712, %v713
    %v715 = vrcp.pop %v714
    %v716 = vmul.f32 %v708, %v715
    %v717 = vmul.f32 %v716, %v612
    %v718 = vsel %vm320, %v717, 0.0
    %v719 = vrot.slane %v718, 4
    %v720 = vadd.f32 %v718, %v719
    %v721 = vrot.slane %v720, 2
    %v722 = vadd.f32 %v720, %v721
    %v723 = vrot.slane %v722, 1
    %v724 = vadd.f32 %v722, %v723
    %v726 = vsel %vm320, %v724, 0
    %728 = vmatprep.subr.mxu0 0.0
    %729 = vmatpush1.msra.mxu0 %v149
    %730 = vmatprep.subr.mxu0 0.0
    %731 = vmatpush1.msra.mxu0 %v154
    %732 = vmatprep.subr.mxu0 0.0
    %733 = vmatpush1.msra.mxu0 0.0
    %734 = vmatprep.subr.mxu0 0.0
    %735 = vmatpush1.msra.mxu0 0.0
    %736 = vmatprep.subr.mxu0 0.0
    %737 = vmatpush1.msra.mxu0 0.0
    %738 = vmatprep.subr.mxu0 0.0
    %739 = vmatpush1.msra.mxu0 0.0
    %740 = vmatprep.subr.mxu0 0.0
    %741 = vmatpush1.msra.mxu0 0.0
    %742 = vmatprep.subr.mxu0 0.0
    %743 = vmatpush1.msra.mxu0 0.0
    %744 = vmatprep.subr.mxu0 0.0
    %745 = vmatpush1.msra.mxu0 0.0
    %746 = vmatprep.subr.mxu0 0.0
    %747 = vmatpush1.msra.mxu0 0.0
    %748 = vmatprep.subr.mxu0 0.0
    %749 = vmatpush1.msra.mxu0 0.0
    %750 = vmatprep.subr.mxu0 0.0
    %751 = vmatpush1.msra.mxu0 0.0
    %752 = vmatprep.subr.mxu0 0.0
    %753 = vmatpush1.msra.mxu0 0.0
    %754 = vmatprep.subr.mxu0 0.0
    %755 = vmatpush1.msra.mxu0 0.0
    %756 = vmatprep.subr.mxu0 0.0
    %757 = vmatpush1.msra.mxu0 0.0
    %758 = vmatprep.subr.mxu0 0.0
    %759 = vmatpush1.msra.mxu0 0.0
    %760 = vmatprep.subr.mxu0 0.0
    %761 = vmatpush1.msra.mxu0 0.0
    %762 = vmatprep.subr.mxu0 0.0
    %763 = vmatpush1.msra.mxu0 0.0
    %764 = vmatprep.subr.mxu0 0.0
    %765 = vmatpush1.msra.mxu0 0.0
    %766 = vmatprep.subr.mxu0 0.0
    %767 = vmatpush1.msra.mxu0 0.0
    %768 = vmatprep.subr.mxu0 0.0
    %769 = vmatpush1.msra.mxu0 0.0
    %770 = vmatprep.subr.mxu0 0.0
    %771 = vmatpush1.msra.mxu0 0.0
    %772 = vmatprep.subr.mxu0 0.0
    %773 = vmatpush1.msra.mxu0 0.0
    %774 = vmatprep.subr.mxu0 0.0
    %775 = vmatpush1.msra.mxu0 0.0
    %776 = vmatprep.subr.mxu0 0.0
    %777 = vmatpush1.msra.mxu0 0.0
    %778 = vmatprep.subr.mxu0 0.0
    %779 = vmatpush1.msra.mxu0 0.0
    %780 = vmatprep.subr.mxu0 0.0
    %781 = vmatpush1.msra.mxu0 0.0
    %782 = vmatprep.subr.mxu0 0.0
    %783 = vmatpush1.msra.mxu0 0.0
    %784 = vmatprep.subr.mxu0 0.0
    %785 = vmatpush1.msra.mxu0 0.0
    %786 = vmatprep.subr.mxu0 0.0
    %787 = vmatpush1.msra.mxu0 0.0
    %788 = vmatprep.subr.mxu0 0.0
    %789 = vmatpush1.msra.mxu0 0.0
    %790 = vmatprep.subr.mxu0 0.0
    %791 = vmatpush1.msra.mxu0 0.0
    %792 = vmatprep.mubr.f32.mxu0 0.0
    %793 = vmatmul.mubr.f32.gmra.mrb[0].mxu0 %v726
    %v794 = vpop.f32.mrb[0].mxu0
    %v795 = vadd.f32 0.0, %v794
    %v796 = vpop.f32.mrb[0].mxu0
    %797 = vdwg.mxu0
    %v798 = vlaneseq
    %v799 = vshrl.u32 %v798, 7
    %v800 = vsub.s32 0, %v799
    %v801 = vrot.slane %v795, %v800
    %v802 = vadd.f32 %v614, %v801
    %vm803 = vcmask 261120
    %v804 = vsel %vm803, 0.0, 0
    %806 = vmatprep.subr.mxu0 0.0
    %807 = vmatpush1.msra.mxu0 %v66
    %808 = vmatprep.subr.mxu0 0.0
    %809 = vmatpush1.msra.mxu0 %v67
    %810 = vmatprep.subr.mxu0 0.0
    %811 = vmatpush1.msra.mxu0 %v68
    %812 = vmatprep.subr.mxu0 0.0
    %813 = vmatpush1.msra.mxu0 %v69
    %814 = vmatprep.subr.mxu0 0.0
    %815 = vmatpush1.msra.mxu0 0.0
    %816 = vmatprep.subr.mxu0 0.0
    %817 = vmatpush1.msra.mxu0 0.0
    %818 = vmatprep.subr.mxu0 0.0
    %819 = vmatpush1.msra.mxu0 0.0
    %820 = vmatprep.subr.mxu0 0.0
    %821 = vmatpush1.msra.mxu0 0.0
    %822 = vmatprep.subr.mxu0 0.0
    %823 = vmatpush1.msra.mxu0 0.0
    %824 = vmatprep.subr.mxu0 0.0
    %825 = vmatpush1.msra.mxu0 0.0
    %826 = vmatprep.subr.mxu0 0.0
    %827 = vmatpush1.msra.mxu0 0.0
    %828 = vmatprep.subr.mxu0 0.0
    %829 = vmatpush1.msra.mxu0 0.0
    %830 = vmatprep.subr.mxu0 0.0
    %831 = vmatpush1.msra.mxu0 0.0
    %832 = vmatprep.subr.mxu0 0.0
    %833 = vmatpush1.msra.mxu0 0.0
    %834 = vmatprep.subr.mxu0 0.0
    %835 = vmatpush1.msra.mxu0 0.0
    %836 = vmatprep.subr.mxu0 0.0
    %837 = vmatpush1.msra.mxu0 0.0
    %838 = vmatprep.subr.mxu0 0.0
    %839 = vmatpush1.msra.mxu0 0.0
    %840 = vmatprep.subr.mxu0 0.0
    %841 = vmatpush1.msra.mxu0 0.0
    %842 = vmatprep.subr.mxu0 0.0
    %843 = vmatpush1.msra.mxu0 0.0
    %844 = vmatprep.subr.mxu0 0.0
    %845 = vmatpush1.msra.mxu0 0.0
    %846 = vmatprep.subr.mxu0 0.0
    %847 = vmatpush1.msra.mxu0 0.0
    %848 = vmatprep.subr.mxu0 0.0
    %849 = vmatpush1.msra.mxu0 0.0
    %850 = vmatprep.subr.mxu0 0.0
    %851 = vmatpush1.msra.mxu0 0.0
    %852 = vmatprep.subr.mxu0 0.0
    %853 = vmatpush1.msra.mxu0 0.0
    %854 = vmatprep.subr.mxu0 0.0
    %855 = vmatpush1.msra.mxu0 0.0
    %856 = vmatprep.subr.mxu0 0.0
    %857 = vmatpush1.msra.mxu0 0.0
    %858 = vmatprep.subr.mxu0 0.0
    %859 = vmatpush1.msra.mxu0 0.0
    %860 = vmatprep.subr.mxu0 0.0
    %861 = vmatpush1.msra.mxu0 0.0
    %862 = vmatprep.subr.mxu0 0.0
    %863 = vmatpush1.msra.mxu0 0.0
    %864 = vmatprep.subr.mxu0 0.0
    %865 = vmatpush1.msra.mxu0 0.0
    %866 = vmatprep.subr.mxu0 0.0
    %867 = vmatpush1.msra.mxu0 0.0
    %868 = vmatprep.subr.mxu0 0.0
    %869 = vmatpush1.msra.mxu0 0.0
    %870 = vmatprep.mubr.f32.mxu0 0.0
    %871 = vmatmul.mubr.f32.gmra.mrb[0].mxu0 %v804
    %v872 = vpop.f32.mrb[0].mxu0
    %v873 = vadd.f32 0.0, %v872
    %v874 = vpop.f32.mrb[0].mxu0
    %875 = vdwg.mxu0
    %v876 = vadd.f32 %v802, %v873
    %v877 = vxor.u32 %v876, 2147483648
    %v878 = vmul.f32 %v877, 1.442695
    %v879 = vpow.pop %v878
    %v880 = vadd.f32 %v879, 1.0
    %v881 = vrcp.pop %v880
    %v882 = vmul.f32 1.0, %v881
    %v883 = vtanh.pop %v876
    %v884 = vmul.f32 %v882, 0.0
    %886 = vrot.lane.b32.xlu0 %v883, 64
    %v887 = vpop.permute.xlu0 %886
    %v889 = vmul.f32 %v882, %v887
    %891 = vrot.lane.b32.xlu0 %v889, 32
    %v892 = vpop.permute.xlu0 %891
    %v894 = vadd.f32 %v884, %v892
    %v895 = vtanh.pop %v894
    %897 = vrot.lane.b32.xlu0 %v895, 64
    %v898 = vpop.permute.xlu0 %897
    %v900 = vmul.f32 %v882, %v898
    %902 = vrot.lane.b32.xlu0 %v900, 32
    %v903 = vpop.permute.xlu0 %902
    %v905 = vsel %vm803, %v903, %v894
    %v907 = vlaneseq
    %v908 = vshrl.u32 %v907, 7
    %v909 = vsub.s32 0, %v908
    %v910 = vrot.slane %v303, %v909
    %911 = vrot.lane.b32.xlu0 %v910, 96
    %v912 = vpop.permute.xlu0 %911
    %v914 = vmul.f32 %v900, %v912
    %916 = vrot.lane.b32.xlu0 %v914, 32
    %v917 = vpop.permute.xlu0 %916
    %v919 = vsel %vm803, %v917, 0.0
    %920 = vadd.xlane.f32.xlu0 %v919
    %v921 = vpop.xlane.xlu0 %920
    %v922 = vmul.f32 %v724, %v304
    %vm923 = vcmask 122880
    %v924 = vsel %vm923, %v922, 0.0
    %925 = vadd.xlane.f32.xlu0 %v924
    %v926 = vpop.xlane.xlu0 %925
    %v927 = vadd.f32 %v926, %v305
    %v928 = vlaneseq
    %v929 = vshrl.u32 %v928, 7
    %v930 = vsub.s32 0, %v929
    %v931 = vrot.slane %v927, %v930
    %v932 = vadd.f32 %v921, %v931
    %vm933 = vcmp.eq.s32.totalorder %v611, 0
    %935 = vset.pattern.permute.xlu0 0
    %936 = vperm.xlu0 %935, %v932
    %v937 = vpop.permute.xlu0 %936
    %v939 = vsel %vm933, %v937, 0.0
    %s940 = scalar_lea.vmem %s0, 8
    %v941 = vld [vmem:[%s940] sm:$0xff]
    %s942 = scalar_lea.vmem [#allocation2], 8
    %v943 = vld [vmem:[%s942] sm:$0xff]
    %s944 = scalar_lea.vmem [#allocation3], 8
    %v945 = vld [vmem:[%s944] sm:$0xff]
    %v947 = vsel %vm615, %v905, 0
    %949 = vmatprep.subr.mxu0 0.0
    %950 = vmatpush1.msra.mxu0 %v49
    %951 = vmatprep.subr.mxu0 0.0
    %952 = vmatpush1.msra.mxu0 %v50
    %953 = vmatprep.subr.mxu0 0.0
    %954 = vmatpush1.msra.mxu0 %v51
    %955 = vmatprep.subr.mxu0 0.0
    %956 = vmatpush1.msra.mxu0 %v52
    %957 = vmatprep.subr.mxu0 0.0
    %958 = vmatpush1.msra.mxu0 %v53
    %959 = vmatprep.subr.mxu0 0.0
    %960 = vmatpush1.msra.mxu0 %v54
    %961 = vmatprep.subr.mxu0 0.0
    %962 = vmatpush1.msra.mxu0 %v55
    %963 = vmatprep.subr.mxu0 0.0
    %964 = vmatpush1.msra.mxu0 %v56
    %965 = vmatprep.subr.mxu0 0.0
    %966 = vmatpush1.msra.mxu0 0.0
    %967 = vmatprep.subr.mxu0 0.0
    %968 = vmatpush1.msra.mxu0 0.0
    %969 = vmatprep.subr.mxu0 0.0
    %970 = vmatpush1.msra.mxu0 0.0
    %971 = vmatprep.subr.mxu0 0.0
    %972 = vmatpush1.msra.mxu0 0.0
    %973 = vmatprep.subr.mxu0 0.0
    %974 = vmatpush1.msra.mxu0 0.0
    %975 = vmatprep.subr.mxu0 0.0
    %976 = vmatpush1.msra.mxu0 0.0
    %977 = vmatprep.subr.mxu0 0.0
    %978 = vmatpush1.msra.mxu0 0.0
    %979 = vmatprep.subr.mxu0 0.0
    %980 = vmatpush1.msra.mxu0 0.0
    %981 = vmatprep.subr.mxu0 0.0
    %982 = vmatpush1.msra.mxu0 0.0
    %983 = vmatprep.subr.mxu0 0.0
    %984 = vmatpush1.msra.mxu0 0.0
    %985 = vmatprep.subr.mxu0 0.0
    %986 = vmatpush1.msra.mxu0 0.0
    %987 = vmatprep.subr.mxu0 0.0
    %988 = vmatpush1.msra.mxu0 0.0
    %989 = vmatprep.subr.mxu0 0.0
    %990 = vmatpush1.msra.mxu0 0.0
    %991 = vmatprep.subr.mxu0 0.0
    %992 = vmatpush1.msra.mxu0 0.0
    %993 = vmatprep.subr.mxu0 0.0
    %994 = vmatpush1.msra.mxu0 0.0
    %995 = vmatprep.subr.mxu0 0.0
    %996 = vmatpush1.msra.mxu0 0.0
    %997 = vmatprep.subr.mxu0 0.0
    %998 = vmatpush1.msra.mxu0 0.0
    %999 = vmatprep.subr.mxu0 0.0
    %1000 = vmatpush1.msra.mxu0 0.0
    %1001 = vmatprep.subr.mxu0 0.0
    %1002 = vmatpush1.msra.mxu0 0.0
    %1003 = vmatprep.subr.mxu0 0.0
    %1004 = vmatpush1.msra.mxu0 0.0
    %1005 = vmatprep.subr.mxu0 0.0
    %1006 = vmatpush1.msra.mxu0 0.0
    %1007 = vmatprep.subr.mxu0 0.0
    %1008 = vmatpush1.msra.mxu0 0.0
    %1009 = vmatprep.subr.mxu0 0.0
    %1010 = vmatpush1.msra.mxu0 0.0
    %1011 = vmatprep.subr.mxu0 0.0
    %1012 = vmatpush1.msra.mxu0 0.0
    %1013 = vmatprep.mubr.f32.mxu0 0.0
    %1014 = vmatmul.mubr.f32.gmra.mrb[0].mxu0 %v947
    %v1015 = vpop.f32.mrb[0].mxu0
    %v1016 = vadd.f32 %v943, %v1015
    %v1017 = vpop.f32.mrb[0].mxu0
    %1018 = vdwg.mxu0
    %v1019 = vtanh.pop %v1016
    %v1020 = vmul.f32 %v1019, %v694
    %v1021 = vsel %vm320, %v1020, 0.0
    %1022 = vadd.xlane.f32.xlu0 %v1021
    %v1023 = vpop.xlane.xlu0 %1022
    %v1024 = vrot.slane %v1023, 4
    %v1025 = vmax.f32 %v1023, %v1024
    %v1026 = vrot.slane %v1025, 2
    %v1027 = vmax.f32 %v1025, %v1026
    %v1028 = vrot.slane %v1027, 1
    %v1029 = vmax.f32 %v1027, %v1028
    %v1030 = vsub.f32 %v1023, %v1029
    %v1031 = vmul.f32 %v1030, 1.442695
    %v1032 = vpow.pop %v1031
    %v1033 = vrot.slane %v1032, 4
    %v1034 = vadd.f32 %v1032, %v1033
    %v1035 = vrot.slane %v1034, 2
    %v1036 = vadd.f32 %v1034, %v1035
    %v1037 = vrot.slane %v1036, 1
    %v1038 = vadd.f32 %v1036, %v1037
    %v1039 = vrcp.pop %v1038
    %v1040 = vmul.f32 %v1032, %v1039
    %v1041 = vmul.f32 %v1040, %v941
    %v1042 = vsel %vm320, %v1041, 0.0
    %v1043 = vrot.slane %v1042, 4
    %v1044 = vadd.f32 %v1042, %v1043
    %v1045 = vrot.slane %v1044, 2
    %v1046 = vadd.f32 %v1044, %v1045
    %v1047 = vrot.slane %v1046, 1
    %v1048 = vadd.f32 %v1046, %v1047
    %v1050 = vsel %vm320, %v1048, 0
    %1052 = vmatprep.subr.mxu0 0.0
    %1053 = vmatpush1.msra.mxu0 %v149
    %1054 = vmatprep.subr.mxu0 0.0
    %1055 = vmatpush1.msra.mxu0 %v154
    %1056 = vmatprep.subr.mxu0 0.0
    %1057 = vmatpush1.msra.mxu0 0.0
    %1058 = vmatprep.subr.mxu0 0.0
    %1059 = vmatpush1.msra.mxu0 0.0
    %1060 = vmatprep.subr.mxu0 0.0
    %1061 = vmatpush1.msra.mxu0 0.0
    %1062 = vmatprep.subr.mxu0 0.0
    %1063 = vmatpush1.msra.mxu0 0.0
    %1064 = vmatprep.subr.mxu0 0.0
    %1065 = vmatpush1.msra.mxu0 0.0
    %1066 = vmatprep.subr.mxu0 0.0
    %1067 = vmatpush1.msra.mxu0 0.0
    %1068 = vmatprep.subr.mxu0 0.0
    %1069 = vmatpush1.msra.mxu0 0.0
    %1070 = vmatprep.subr.mxu0 0.0
    %1071 = vmatpush1.msra.mxu0 0.0
    %1072 = vmatprep.subr.mxu0 0.0
    %1073 = vmatpush1.msra.mxu0 0.0
    %1074 = vmatprep.subr.mxu0 0.0
    %1075 = vmatpush1.msra.mxu0 0.0
    %1076 = vmatprep.subr.mxu0 0.0
    %1077 = vmatpush1.msra.mxu0 0.0
    %1078 = vmatprep.subr.mxu0 0.0
    %1079 = vmatpush1.msra.mxu0 0.0
    %1080 = vmatprep.subr.mxu0 0.0
    %1081 = vmatpush1.msra.mxu0 0.0
    %1082 = vmatprep.subr.mxu0 0.0
    %1083 = vmatpush1.msra.mxu0 0.0
    %1084 = vmatprep.subr.mxu0 0.0
    %1085 = vmatpush1.msra.mxu0 0.0
    %1086 = vmatprep.subr.mxu0 0.0
    %1087 = vmatpush1.msra.mxu0 0.0
    %1088 = vmatprep.subr.mxu0 0.0
    %1089 = vmatpush1.msra.mxu0 0.0
    %1090 = vmatprep.subr.mxu0 0.0
    %1091 = vmatpush1.msra.mxu0 0.0
    %1092 = vmatprep.subr.mxu0 0.0
    %1093 = vmatpush1.msra.mxu0 0.0
    %1094 = vmatprep.subr.mxu0 0.0
    %1095 = vmatpush1.msra.mxu0 0.0
    %1096 = vmatprep.subr.mxu0 0.0
    %1097 = vmatpush1.msra.mxu0 0.0
    %1098 = vmatprep.subr.mxu0 0.0
    %1099 = vmatpush1.msra.mxu0 0.0
    %1100 = vmatprep.subr.mxu0 0.0
    %1101 = vmatpush1.msra.mxu0 0.0
    %1102 = vmatprep.subr.mxu0 0.0
    %1103 = vmatpush1.msra.mxu0 0.0
    %1104 = vmatprep.subr.mxu0 0.0
    %1105 = vmatpush1.msra.mxu0 0.0
    %1106 = vmatprep.subr.mxu0 0.0
    %1107 = vmatpush1.msra.mxu0 0.0
    %1108 = vmatprep.subr.mxu0 0.0
    %1109 = vmatpush1.msra.mxu0 0.0
    %1110 = vmatprep.subr.mxu0 0.0
    %1111 = vmatpush1.msra.mxu0 0.0
    %1112 = vmatprep.subr.mxu0 0.0
    %1113 = vmatpush1.msra.mxu0 0.0
    %1114 = vmatprep.subr.mxu0 0.0
    %1115 = vmatpush1.msra.mxu0 0.0
    %1116 = vmatprep.mubr.f32.mxu0 0.0
    %1117 = vmatmul.mubr.f32.gmra.mrb[0].mxu0 %v1050
    %v1118 = vpop.f32.mrb[0].mxu0
    %v1119 = vadd.f32 0.0, %v1118
    %v1120 = vpop.f32.mrb[0].mxu0
    %1121 = vdwg.mxu0
    %v1122 = vlaneseq
    %v1123 = vshrl.u32 %v1122, 7
    %v1124 = vsub.s32 0, %v1123
    %v1125 = vrot.slane %v1119, %v1124
    %v1126 = vadd.f32 %v945, %v1125
    %v1127 = vsel %vm803, %v905, 0
    %1129 = vmatprep.subr.mxu0 0.0
    %1130 = vmatpush1.msra.mxu0 %v66
    %1131 = vmatprep.subr.mxu0 0.0
    %1132 = vmatpush1.msra.mxu0 %v67
    %1133 = vmatprep.subr.mxu0 0.0
    %1134 = vmatpush1.msra.mxu0 %v68
    %1135 = vmatprep.subr.mxu0 0.0
    %1136 = vmatpush1.msra.mxu0 %v69
    %1137 = vmatprep.subr.mxu0 0.0
    %1138 = vmatpush1.msra.mxu0 0.0
    %1139 = vmatprep.subr.mxu0 0.0
    %1140 = vmatpush1.msra.mxu0 0.0
    %1141 = vmatprep.subr.mxu0 0.0
    %1142 = vmatpush1.msra.mxu0 0.0
    %1143 = vmatprep.subr.mxu0 0.0
    %1144 = vmatpush1.msra.mxu0 0.0
    %1145 = vmatprep.subr.mxu0 0.0
    %1146 = vmatpush1.msra.mxu0 0.0
    %1147 = vmatprep.subr.mxu0 0.0
    %1148 = vmatpush1.msra.mxu0 0.0
    %1149 = vmatprep.subr.mxu0 0.0
    %1150 = vmatpush1.msra.mxu0 0.0
    %1151 = vmatprep.subr.mxu0 0.0
    %1152 = vmatpush1.msra.mxu0 0.0
    %1153 = vmatprep.subr.mxu0 0.0
    %1154 = vmatpush1.msra.mxu0 0.0
    %1155 = vmatprep.subr.mxu0 0.0
    %1156 = vmatpush1.msra.mxu0 0.0
    %1157 = vmatprep.subr.mxu0 0.0
    %1158 = vmatpush1.msra.mxu0 0.0
    %1159 = vmatprep.subr.mxu0 0.0
    %1160 = vmatpush1.msra.mxu0 0.0
    %1161 = vmatprep.subr.mxu0 0.0
    %1162 = vmatpush1.msra.mxu0 0.0
    %1163 = vmatprep.subr.mxu0 0.0
    %1164 = vmatpush1.msra.mxu0 0.0
    %1165 = vmatprep.subr.mxu0 0.0
    %1166 = vmatpush1.msra.mxu0 0.0
    %1167 = vmatprep.subr.mxu0 0.0
    %1168 = vmatpush1.msra.mxu0 0.0
    %1169 = vmatprep.subr.mxu0 0.0
    %1170 = vmatpush1.msra.mxu0 0.0
    %1171 = vmatprep.subr.mxu0 0.0
    %1172 = vmatpush1.msra.mxu0 0.0
    %1173 = vmatprep.subr.mxu0 0.0
    %1174 = vmatpush1.msra.mxu0 0.0
    %1175 = vmatprep.subr.mxu0 0.0
    %1176 = vmatpush1.msra.mxu0 0.0
    %1177 = vmatprep.subr.mxu0 0.0
    %1178 = vmatpush1.msra.mxu0 0.0
    %1179 = vmatprep.subr.mxu0 0.0
    %1180 = vmatpush1.msra.mxu0 0.0
    %1181 = vmatprep.subr.mxu0 0.0
    %1182 = vmatpush1.msra.mxu0 0.0
    %1183 = vmatprep.subr.mxu0 0.0
    %1184 = vmatpush1.msra.mxu0 0.0
    %1185 = vmatprep.subr.mxu0 0.0
    %1186 = vmatpush1.msra.mxu0 0.0
    %1187 = vmatprep.subr.mxu0 0.0
    %1188 = vmatpush1.msra.mxu0 0.0
    %1189 = vmatprep.subr.mxu0 0.0
    %1190 = vmatpush1.msra.mxu0 0.0
    %1191 = vmatprep.subr.mxu0 0.0
    %1192 = vmatpush1.msra.mxu0 0.0
    %1193 = vmatprep.mubr.f32.mxu0 0.0
    %1194 = vmatmul.mubr.f32.gmra.mrb[0].mxu0 %v1127
    %v1195 = vpop.f32.mrb[0].mxu0
    %v1196 = vadd.f32 0.0, %v1195
    %v1197 = vpop.f32.mrb[0].mxu0
    %1198 = vdwg.mxu0
    %v1199 = vadd.f32 %v1126, %v1196
    %v1200 = vxor.u32 %v1199, 2147483648
    %v1201 = vmul.f32 %v1200, 1.442695
    %v1202 = vpow.pop %v1201
    %v1203 = vadd.f32 %v1202, 1.0
    %v1204 = vrcp.pop %v1203
    %v1205 = vmul.f32 1.0, %v1204
    %v1206 = vtanh.pop %v1199
    %v1207 = vmul.f32 %v1205, %v905
    %1209 = vrot.lane.b32.xlu0 %v1206, 64
    %v1210 = vpop.permute.xlu0 %1209
    %v1212 = vmul.f32 %v1205, %v1210
    %1214 = vrot.lane.b32.xlu0 %v1212, 32
    %v1215 = vpop.permute.xlu0 %1214
    %v1217 = vadd.f32 %v1207, %v1215
    %v1218 = vtanh.pop %v1217
    %1220 = vrot.lane.b32.xlu0 %v1218, 64
    %v1221 = vpop.permute.xlu0 %1220
    %v1223 = vmul.f32 %v1205, %v1221
    %1225 = vrot.lane.b32.xlu0 %v1223, 32
    %v1226 = vpop.permute.xlu0 %1225
    %v1228 = vsel %vm803, %v1226, %v1217
    %v1229 = vmul.f32 %v1223, %v912
    %1231 = vrot.lane.b32.xlu0 %v1229, 32
    %v1232 = vpop.permute.xlu0 %1231
    %v1234 = vsel %vm803, %v1232, 0.0
    %1235 = vadd.xlane.f32.xlu0 %v1234
    %v1236 = vpop.xlane.xlu0 %1235
    %v1237 = vmul.f32 %v1048, %v304
    %v1238 = vsel %vm923, %v1237, 0.0
    %1239 = vadd.xlane.f32.xlu0 %v1238
    %v1240 = vpop.xlane.xlu0 %1239
    %v1241 = vadd.f32 %v1240, %v305
    %v1242 = vlaneseq
    %v1243 = vshrl.u32 %v1242, 7
    %v1244 = vsub.s32 0, %v1243
    %v1245 = vrot.slane %v1241, %v1244
    %v1246 = vadd.f32 %v1236, %v1245
    %vm1247 = vcmp.eq.s32.totalorder %v611, 1
    %1249 = vset.pattern.permute.xlu0 0
    %1250 = vperm.xlu0 %1249, %v1246
    %v1251 = vpop.permute.xlu0 %1250
    %v1253 = vsel %vm1247, %v1251, %v939
    %s1254 = scalar_lea.vmem %s0, 16
    %v1255 = vld [vmem:[%s1254] sm:$0xff]
    %s1256 = scalar_lea.vmem [#allocation2], 16
    %v1257 = vld [vmem:[%s1256] sm:$0xff]
    %s1258 = scalar_lea.vmem [#allocation3], 16
    %v1259 = vld [vmem:[%s1258] sm:$0xff]
    %v1261 = vsel %vm615, %v1228, 0
    %1263 = vmatprep.subr.mxu0 0.0
    %1264 = vmatpush1.msra.mxu0 %v49
    %1265 = vmatprep.subr.mxu0 0.0
    %1266 = vmatpush1.msra.mxu0 %v50
    %1267 = vmatprep.subr.mxu0 0.0
    %1268 = vmatpush1.msra.mxu0 %v51
    %1269 = vmatprep.subr.mxu0 0.0
    %1270 = vmatpush1.msra.mxu0 %v52
    %1271 = vmatprep.subr.mxu0 0.0
    %1272 = vmatpush1.msra.mxu0 %v53
    %1273 = vmatprep.subr.mxu0 0.0
    %1274 = vmatpush1.msra.mxu0 %v54
    %1275 = vmatprep.subr.mxu0 0.0
    %1276 = vmatpush1.msra.mxu0 %v55
    %1277 = vmatprep.subr.mxu0 0.0
    %1278 = vmatpush1.msra.mxu0 %v56
    %1279 = vmatprep.subr.mxu0 0.0
    %1280 = vmatpush1.msra.mxu0 0.0
    %1281 = vmatprep.subr.mxu0 0.0
    %1282 = vmatpush1.msra.mxu0 0.0
    %1283 = vmatprep.subr.mxu0 0.0
    %1284 = vmatpush1.msra.mxu0 0.0
    %1285 = vmatprep.subr.mxu0 0.0
    %1286 = vmatpush1.msra.mxu0 0.0
    %1287 = vmatprep.subr.mxu0 0.0
    %1288 = vmatpush1.msra.mxu0 0.0
    %1289 = vmatprep.subr.mxu0 0.0
    %1290 = vmatpush1.msra.mxu0 0.0
    %1291 = vmatprep.subr.mxu0 0.0
    %1292 = vmatpush1.msra.mxu0 0.0
    %1293 = vmatprep.subr.mxu0 0.0
    %1294 = vmatpush1.msra.mxu0 0.0
    %1295 = vmatprep.subr.mxu0 0.0
    %1296 = vmatpush1.msra.mxu0 0.0
    %1297 = vmatprep.subr.mxu0 0.0
    %1298 = vmatpush1.msra.mxu0 0.0
    %1299 = vmatprep.subr.mxu0 0.0
    %1300 = vmatpush1.msra.mxu0 0.0
    %1301 = vmatprep.subr.mxu0 0.0
    %1302 = vmatpush1.msra.mxu0 0.0
    %1303 = vmatprep.subr.mxu0 0.0
    %1304 = vmatpush1.msra.mxu0 0.0
    %1305 = vmatprep.subr.mxu0 0.0
    %1306 = vmatpush1.msra.mxu0 0.0
    %1307 = vmatprep.subr.mxu0 0.0
    %1308 = vmatpush1.msra.mxu0 0.0
    %1309 = vmatprep.subr.mxu0 0.0
    %1310 = vmatpush1.msra.mxu0 0.0
    %1311 = vmatprep.subr.mxu0 0.0
    %1312 = vmatpush1.msra.mxu0 0.0
    %1313 = vmatprep.subr.mxu0 0.0
    %1314 = vmatpush1.msra.mxu0 0.0
    %1315 = vmatprep.subr.mxu0 0.0
    %1316 = vmatpush1.msra.mxu0 0.0
    %1317 = vmatprep.subr.mxu0 0.0
    %1318 = vmatpush1.msra.mxu0 0.0
    %1319 = vmatprep.subr.mxu0 0.0
    %1320 = vmatpush1.msra.mxu0 0.0
    %1321 = vmatprep.subr.mxu0 0.0
    %1322 = vmatpush1.msra.mxu0 0.0
    %1323 = vmatprep.subr.mxu0 0.0
    %1324 = vmatpush1.msra.mxu0 0.0
    %1325 = vmatprep.subr.mxu0 0.0
    %1326 = vmatpush1.msra.mxu0 0.0
    %1327 = vmatprep.mubr.f32.mxu0 0.0
    %1328 = vmatmul.mubr.f32.gmra.mrb[0].mxu0 %v1261
    %v1329 = vpop.f32.mrb[0].mxu0
    %v1330 = vadd.f32 %v1257, %v1329
    %v1331 = vpop.f32.mrb[0].mxu0
    %1332 = vdwg.mxu0
    %v1333 = vtanh.pop %v1330
    %v1334 = vmul.f32 %v1333, %v694
    %v1335 = vsel %vm320, %v1334, 0.0
    %1336 = vadd.xlane.f32.xlu0 %v1335
    %v1337 = vpop.xlane.xlu0 %1336
    %v1338 = vrot.slane %v1337, 4
    %v1339 = vmax.f32 %v1337, %v1338
    %v1340 = vrot.slane %v1339, 2
    %v1341 = vmax.f32 %v1339, %v1340
    %v1342 = vrot.slane %v1341, 1
    %v1343 = vmax.f32 %v1341, %v1342
    %v1344 = vsub.f32 %v1337, %v1343
    %v1345 = vmul.f32 %v1344, 1.442695
    %v1346 = vpow.pop %v1345
    %v1347 = vrot.slane %v1346, 4
    %v1348 = vadd.f32 %v1346, %v1347
    %v1349 = vrot.slane %v1348, 2
    %v1350 = vadd.f32 %v1348, %v1349
    %v1351 = vrot.slane %v1350, 1
    %v1352 = vadd.f32 %v1350, %v1351
    %v1353 = vrcp.pop %v1352
    %v1354 = vmul.f32 %v1346, %v1353
    %v1355 = vmul.f32 %v1354, %v1255
    %v1356 = vsel %vm320, %v1355, 0.0
    %v1357 = vrot.slane %v1356, 4
    %v1358 = vadd.f32 %v1356, %v1357
    %v1359 = vrot.slane %v1358, 2
    %v1360 = vadd.f32 %v1358, %v1359
    %v1361 = vrot.slane %v1360, 1
    %v1362 = vadd.f32 %v1360, %v1361
    %v1364 = vsel %vm320, %v1362, 0
    %1366 = vmatprep.subr.mxu0 0.0
    %1367 = vmatpush1.msra.mxu0 %v149
    %1368 = vmatprep.subr.mxu0 0.0
    %1369 = vmatpush1.msra.mxu0 %v154
    %1370 = vmatprep.subr.mxu0 0.0
    %1371 = vmatpush1.msra.mxu0 0.0
    %1372 = vmatprep.subr.mxu0 0.0
    %1373 = vmatpush1.msra.mxu0 0.0
    %1374 = vmatprep.subr.mxu0 0.0
    %1375 = vmatpush1.msra.mxu0 0.0
    %1376 = vmatprep.subr.mxu0 0.0
    %1377 = vmatpush1.msra.mxu0 0.0
    %1378 = vmatprep.subr.mxu0 0.0
    %1379 = vmatpush1.msra.mxu0 0.0
    %1380 = vmatprep.subr.mxu0 0.0
    %1381 = vmatpush1.msra.mxu0 0.0
    %1382 = vmatprep.subr.mxu0 0.0
    %1383 = vmatpush1.msra.mxu0 0.0
    %1384 = vmatprep.subr.mxu0 0.0
    %1385 = vmatpush1.msra.mxu0 0.0
    %1386 = vmatprep.subr.mxu0 0.0
    %1387 = vmatpush1.msra.mxu0 0.0
    %1388 = vmatprep.subr.mxu0 0.0
    %1389 = vmatpush1.msra.mxu0 0.0
    %1390 = vmatprep.subr.mxu0 0.0
    %1391 = vmatpush1.msra.mxu0 0.0
    %1392 = vmatprep.subr.mxu0 0.0
    %1393 = vmatpush1.msra.mxu0 0.0
    %1394 = vmatprep.subr.mxu0 0.0
    %1395 = vmatpush1.msra.mxu0 0.0
    %1396 = vmatprep.subr.mxu0 0.0
    %1397 = vmatpush1.msra.mxu0 0.0
    %1398 = vmatprep.subr.mxu0 0.0
    %1399 = vmatpush1.msra.mxu0 0.0
    %1400 = vmatprep.subr.mxu0 0.0
    %1401 = vmatpush1.msra.mxu0 0.0
    %1402 = vmatprep.subr.mxu0 0.0
    %1403 = vmatpush1.msra.mxu0 0.0
    %1404 = vmatprep.subr.mxu0 0.0
    %1405 = vmatpush1.msra.mxu0 0.0
    %1406 = vmatprep.subr.mxu0 0.0
    %1407 = vmatpush1.msra.mxu0 0.0
    %1408 = vmatprep.subr.mxu0 0.0
    %1409 = vmatpush1.msra.mxu0 0.0
    %1410 = vmatprep.subr.mxu0 0.0
    %1411 = vmatpush1.msra.mxu0 0.0
    %1412 = vmatprep.subr.mxu0 0.0
    %1413 = vmatpush1.msra.mxu0 0.0
    %1414 = vmatprep.subr.mxu0 0.0
    %1415 = vmatpush1.msra.mxu0 0.0
    %1416 = vmatprep.subr.mxu0 0.0
    %1417 = vmatpush1.msra.mxu0 0.0
    %1418 = vmatprep.subr.mxu0 0.0
    %1419 = vmatpush1.msra.mxu0 0.0
    %1420 = vmatprep.subr.mxu0 0.0
    %1421 = vmatpush1.msra.mxu0 0.0
    %1422 = vmatprep.subr.mxu0 0.0
    %1423 = vmatpush1.msra.mxu0 0.0
    %1424 = vmatprep.subr.mxu0 0.0
    %1425 = vmatpush1.msra.mxu0 0.0
    %1426 = vmatprep.subr.mxu0 0.0
    %1427 = vmatpush1.msra.mxu0 0.0
    %1428 = vmatprep.subr.mxu0 0.0
    %1429 = vmatpush1.msra.mxu0 0.0
    %1430 = vmatprep.mubr.f32.mxu0 0.0
    %1431 = vmatmul.mubr.f32.gmra.mrb[0].mxu0 %v1364
    %v1432 = vpop.f32.mrb[0].mxu0
    %v1433 = vadd.f32 0.0, %v1432
    %v1434 = vpop.f32.mrb[0].mxu0
    %1435 = vdwg.mxu0
    %v1436 = vlaneseq
    %v1437 = vshrl.u32 %v1436, 7
    %v1438 = vsub.s32 0, %v1437
    %v1439 = vrot.slane %v1433, %v1438
    %v1440 = vadd.f32 %v1259, %v1439
    %v1441 = vsel %vm803, %v1228, 0
    %1443 = vmatprep.subr.mxu0 0.0
    %1444 = vmatpush1.msra.mxu0 %v66
    %1445 = vmatprep.subr.mxu0 0.0
    %1446 = vmatpush1.msra.mxu0 %v67
    %1447 = vmatprep.subr.mxu0 0.0
    %1448 = vmatpush1.msra.mxu0 %v68
    %1449 = vmatprep.subr.mxu0 0.0
    %1450 = vmatpush1.msra.mxu0 %v69
    %1451 = vmatprep.subr.mxu0 0.0
    %1452 = vmatpush1.msra.mxu0 0.0
    %1453 = vmatprep.subr.mxu0 0.0
    %1454 = vmatpush1.msra.mxu0 0.0
    %1455 = vmatprep.subr.mxu0 0.0
    %1456 = vmatpush1.msra.mxu0 0.0
    %1457 = vmatprep.subr.mxu0 0.0
    %1458 = vmatpush1.msra.mxu0 0.0
    %1459 = vmatprep.subr.mxu0 0.0
    %1460 = vmatpush1.msra.mxu0 0.0
    %1461 = vmatprep.subr.mxu0 0.0
    %1462 = vmatpush1.msra.mxu0 0.0
    %1463 = vmatprep.subr.mxu0 0.0
    %1464 = vmatpush1.msra.mxu0 0.0
    %1465 = vmatprep.subr.mxu0 0.0
    %1466 = vmatpush1.msra.mxu0 0.0
    %1467 = vmatprep.subr.mxu0 0.0
    %1468 = vmatpush1.msra.mxu0 0.0
    %1469 = vmatprep.subr.mxu0 0.0
    %1470 = vmatpush1.msra.mxu0 0.0
    %1471 = vmatprep.subr.mxu0 0.0
    %1472 = vmatpush1.msra.mxu0 0.0
    %1473 = vmatprep.subr.mxu0 0.0
    %1474 = vmatpush1.msra.mxu0 0.0
    %1475 = vmatprep.subr.mxu0 0.0
    %1476 = vmatpush1.msra.mxu0 0.0
    %1477 = vmatprep.subr.mxu0 0.0
    %1478 = vmatpush1.msra.mxu0 0.0
    %1479 = vmatprep.subr.mxu0 0.0
    %1480 = vmatpush1.msra.mxu0 0.0
    %1481 = vmatprep.subr.mxu0 0.0
    %1482 = vmatpush1.msra.mxu0 0.0
    %1483 = vmatprep.subr.mxu0 0.0
    %1484 = vmatpush1.msra.mxu0 0.0
    %1485 = vmatprep.subr.mxu0 0.0
    %1486 = vmatpush1.msra.mxu0 0.0
    %1487 = vmatprep.subr.mxu0 0.0
    %1488 = vmatpush1.msra.mxu0 0.0
    %1489 = vmatprep.subr.mxu0 0.0
    %1490 = vmatpush1.msra.mxu0 0.0
    %1491 = vmatprep.subr.mxu0 0.0
    %1492 = vmatpush1.msra.mxu0 0.0
    %1493 = vmatprep.subr.mxu0 0.0
    %1494 = vmatpush1.msra.mxu0 0.0
    %1495 = vmatprep.subr.mxu0 0.0
    %1496 = vmatpush1.msra.mxu0 0.0
    %1497 = vmatprep.subr.mxu0 0.0
    %1498 = vmatpush1.msra.mxu0 0.0
    %1499 = vmatprep.subr.mxu0 0.0
    %1500 = vmatpush1.msra.mxu0 0.0
    %1501 = vmatprep.subr.mxu0 0.0
    %1502 = vmatpush1.msra.mxu0 0.0
    %1503 = vmatprep.subr.mxu0 0.0
    %1504 = vmatpush1.msra.mxu0 0.0
    %1505 = vmatprep.subr.mxu0 0.0
    %1506 = vmatpush1.msra.mxu0 0.0
    %1507 = vmatprep.mubr.f32.mxu0 0.0
    %1508 = vmatmul.mubr.f32.gmra.mrb[0].mxu0 %v1441
    %v1509 = vpop.f32.mrb[0].mxu0
    %v1510 = vadd.f32 0.0, %v1509
    %v1511 = vpop.f32.mrb[0].mxu0
    %1512 = vdwg.mxu0
    %v1513 = vadd.f32 %v1440, %v1510
    %v1514 = vxor.u32 %v1513, 2147483648
    %v1515 = vmul.f32 %v1514, 1.442695
    %v1516 = vpow.pop %v1515
    %v1517 = vadd.f32 %v1516, 1.0
    %v1518 = vrcp.pop %v1517
    %v1519 = vmul.f32 1.0, %v1518
    %v1520 = vtanh.pop %v1513
    %v1521 = vmul.f32 %v1519, %v1228
    %1523 = vrot.lane.b32.xlu0 %v1520, 64
    %v1524 = vpop.permute.xlu0 %1523
    %v1526 = vmul.f32 %v1519, %v1524
    %1528 = vrot.lane.b32.xlu0 %v1526, 32
    %v1529 = vpop.permute.xlu0 %1528
    %v1531 = vadd.f32 %v1521, %v1529
    %v1532 = vtanh.pop %v1531
    %1534 = vrot.lane.b32.xlu0 %v1532, 64
    %v1535 = vpop.permute.xlu0 %1534
    %v1537 = vmul.f32 %v1519, %v1535
    %1539 = vrot.lane.b32.xlu0 %v1537, 32
    %v1540 = vpop.permute.xlu0 %1539
    %v1542 = vsel %vm803, %v1540, %v1531
    %v1543 = vmul.f32 %v1537, %v912
    %1545 = vrot.lane.b32.xlu0 %v1543, 32
    %v1546 = vpop.permute.xlu0 %1545
    %v1548 = vsel %vm803, %v1546, 0.0
    %1549 = vadd.xlane.f32.xlu0 %v1548
    %v1550 = vpop.xlane.xlu0 %1549
    %v1551 = vmul.f32 %v1362, %v304
    %v1552 = vsel %vm923, %v1551, 0.0
    %1553 = vadd.xlane.f32.xlu0 %v1552
    %v1554 = vpop.xlane.xlu0 %1553
    %v1555 = vadd.f32 %v1554, %v305
    %v1556 = vlaneseq
    %v1557 = vshrl.u32 %v1556, 7
    %v1558 = vsub.s32 0, %v1557
    %v1559 = vrot.slane %v1555, %v1558
    %v1560 = vadd.f32 %v1550, %v1559
    %vm1561 = vcmp.eq.s32.totalorder %v611, 2
    %1563 = vset.pattern.permute.xlu0 0
    %1564 = vperm.xlu0 %1563, %v1560
    %v1565 = vpop.permute.xlu0 %1564
    %v1567 = vsel %vm1561, %v1565, %v1253
    %s1568 = scalar_lea.vmem %s0, 24
    %v1569 = vld [vmem:[%s1568] sm:$0xff]
    %s1570 = scalar_lea.vmem [#allocation2], 24
    %v1571 = vld [vmem:[%s1570] sm:$0xff]
    %s1572 = scalar_lea.vmem [#allocation3], 24
    %v1573 = vld [vmem:[%s1572] sm:$0xff]
    %v1575 = vsel %vm615, %v1542, 0
    %1577 = vmatprep.subr.mxu0 0.0
    %1578 = vmatpush1.msra.mxu0 %v49
    %1579 = vmatprep.subr.mxu0 0.0
    %1580 = vmatpush1.msra.mxu0 %v50
    %1581 = vmatprep.subr.mxu0 0.0
    %1582 = vmatpush1.msra.mxu0 %v51
    %1583 = vmatprep.subr.mxu0 0.0
    %1584 = vmatpush1.msra.mxu0 %v52
    %1585 = vmatprep.subr.mxu0 0.0
    %1586 = vmatpush1.msra.mxu0 %v53
    %1587 = vmatprep.subr.mxu0 0.0
    %1588 = vmatpush1.msra.mxu0 %v54
    %1589 = vmatprep.subr.mxu0 0.0
    %1590 = vmatpush1.msra.mxu0 %v55
    %1591 = vmatprep.subr.mxu0 0.0
    %1592 = vmatpush1.msra.mxu0 %v56
    %1593 = vmatprep.subr.mxu0 0.0
    %1594 = vmatpush1.msra.mxu0 0.0
    %1595 = vmatprep.subr.mxu0 0.0
    %1596 = vmatpush1.msra.mxu0 0.0
    %1597 = vmatprep.subr.mxu0 0.0
    %1598 = vmatpush1.msra.mxu0 0.0
    %1599 = vmatprep.subr.mxu0 0.0
    %1600 = vmatpush1.msra.mxu0 0.0
    %1601 = vmatprep.subr.mxu0 0.0
    %1602 = vmatpush1.msra.mxu0 0.0
    %1603 = vmatprep.subr.mxu0 0.0
    %1604 = vmatpush1.msra.mxu0 0.0
    %1605 = vmatprep.subr.mxu0 0.0
    %1606 = vmatpush1.msra.mxu0 0.0
    %1607 = vmatprep.subr.mxu0 0.0
    %1608 = vmatpush1.msra.mxu0 0.0
    %1609 = vmatprep.subr.mxu0 0.0
    %1610 = vmatpush1.msra.mxu0 0.0
    %1611 = vmatprep.subr.mxu0 0.0
    %1612 = vmatpush1.msra.mxu0 0.0
    %1613 = vmatprep.subr.mxu0 0.0
    %1614 = vmatpush1.msra.mxu0 0.0
    %1615 = vmatprep.subr.mxu0 0.0
    %1616 = vmatpush1.msra.mxu0 0.0
    %1617 = vmatprep.subr.mxu0 0.0
    %1618 = vmatpush1.msra.mxu0 0.0
    %1619 = vmatprep.subr.mxu0 0.0
    %1620 = vmatpush1.msra.mxu0 0.0
    %1621 = vmatprep.subr.mxu0 0.0
    %1622 = vmatpush1.msra.mxu0 0.0
    %1623 = vmatprep.subr.mxu0 0.0
    %1624 = vmatpush1.msra.mxu0 0.0
    %1625 = vmatprep.subr.mxu0 0.0
    %1626 = vmatpush1.msra.mxu0 0.0
    %1627 = vmatprep.subr.mxu0 0.0
    %1628 = vmatpush1.msra.mxu0 0.0
    %1629 = vmatprep.subr.mxu0 0.0
    %1630 = vmatpush1.msra.mxu0 0.0
    %1631 = vmatprep.subr.mxu0 0.0
    %1632 = vmatpush1.msra.mxu0 0.0
    %1633 = vmatprep.subr.mxu0 0.0
    %1634 = vmatpush1.msra.mxu0 0.0
    %1635 = vmatprep.subr.mxu0 0.0
    %1636 = vmatpush1.msra.mxu0 0.0
    %1637 = vmatprep.subr.mxu0 0.0
    %1638 = vmatpush1.msra.mxu0 0.0
    %1639 = vmatprep.subr.mxu0 0.0
    %1640 = vmatpush1.msra.mxu0 0.0
    %1641 = vmatprep.mubr.f32.mxu0 0.0
    %1642 = vmatmul.mubr.f32.gmra.mrb[0].mxu0 %v1575
    %v1643 = vpop.f32.mrb[0].mxu0
    %v1644 = vadd.f32 %v1571, %v1643
    %v1645 = vpop.f32.mrb[0].mxu0
    %1646 = vdwg.mxu0
    %v1647 = vtanh.pop %v1644
    %v1648 = vmul.f32 %v1647, %v694
    %v1649 = vsel %vm320, %v1648, 0.0
    %1650 = vadd.xlane.f32.xlu0 %v1649
    %v1651 = vpop.xlane.xlu0 %1650
    %v1652 = vrot.slane %v1651, 4
    %v1653 = vmax.f32 %v1651, %v1652
    %v1654 = vrot.slane %v1653, 2
    %v1655 = vmax.f32 %v1653, %v1654
    %v1656 = vrot.slane %v1655, 1
    %v1657 = vmax.f32 %v1655, %v1656
    %v1658 = vsub.f32 %v1651, %v1657
    %v1659 = vmul.f32 %v1658, 1.442695
    %v1660 = vpow.pop %v1659
    %v1661 = vrot.slane %v1660, 4
    %v1662 = vadd.f32 %v1660, %v1661
    %v1663 = vrot.slane %v1662, 2
    %v1664 = vadd.f32 %v1662, %v1663
    %v1665 = vrot.slane %v1664, 1
    %v1666 = vadd.f32 %v1664, %v1665
    %v1667 = vrcp.pop %v1666
    %v1668 = vmul.f32 %v1660, %v1667
    %v1669 = vmul.f32 %v1668, %v1569
    %v1670 = vsel %vm320, %v1669, 0.0
    %v1671 = vrot.slane %v1670, 4
    %v1672 = vadd.f32 %v1670, %v1671
    %v1673 = vrot.slane %v1672, 2
    %v1674 = vadd.f32 %v1672, %v1673
    %v1675 = vrot.slane %v1674, 1
    %v1676 = vadd.f32 %v1674, %v1675
    %v1678 = vsel %vm320, %v1676, 0
    %1680 = vmatprep.subr.mxu0 0.0
    %1681 = vmatpush1.msra.mxu0 %v149
    %1682 = vmatprep.subr.mxu0 0.0
    %1683 = vmatpush1.msra.mxu0 %v154
    %1684 = vmatprep.subr.mxu0 0.0
    %1685 = vmatpush1.msra.mxu0 0.0
    %1686 = vmatprep.subr.mxu0 0.0
    %1687 = vmatpush1.msra.mxu0 0.0
    %1688 = vmatprep.subr.mxu0 0.0
    %1689 = vmatpush1.msra.mxu0 0.0
    %1690 = vmatprep.subr.mxu0 0.0
    %1691 = vmatpush1.msra.mxu0 0.0
    %1692 = vmatprep.subr.mxu0 0.0
    %1693 = vmatpush1.msra.mxu0 0.0
    %1694 = vmatprep.subr.mxu0 0.0
    %1695 = vmatpush1.msra.mxu0 0.0
    %1696 = vmatprep.subr.mxu0 0.0
    %1697 = vmatpush1.msra.mxu0 0.0
    %1698 = vmatprep.subr.mxu0 0.0
    %1699 = vmatpush1.msra.mxu0 0.0
    %1700 = vmatprep.subr.mxu0 0.0
    %1701 = vmatpush1.msra.mxu0 0.0
    %1702 = vmatprep.subr.mxu0 0.0
    %1703 = vmatpush1.msra.mxu0 0.0
    %1704 = vmatprep.subr.mxu0 0.0
    %1705 = vmatpush1.msra.mxu0 0.0
    %1706 = vmatprep.subr.mxu0 0.0
    %1707 = vmatpush1.msra.mxu0 0.0
    %1708 = vmatprep.subr.mxu0 0.0
    %1709 = vmatpush1.msra.mxu0 0.0
    %1710 = vmatprep.subr.mxu0 0.0
    %1711 = vmatpush1.msra.mxu0 0.0
    %1712 = vmatprep.subr.mxu0 0.0
    %1713 = vmatpush1.msra.mxu0 0.0
    %1714 = vmatprep.subr.mxu0 0.0
    %1715 = vmatpush1.msra.mxu0 0.0
    %1716 = vmatprep.subr.mxu0 0.0
    %1717 = vmatpush1.msra.mxu0 0.0
    %1718 = vmatprep.subr.mxu0 0.0
    %1719 = vmatpush1.msra.mxu0 0.0
    %1720 = vmatprep.subr.mxu0 0.0
    %1721 = vmatpush1.msra.mxu0 0.0
    %1722 = vmatprep.subr.mxu0 0.0
    %1723 = vmatpush1.msra.mxu0 0.0
    %1724 = vmatprep.subr.mxu0 0.0
    %1725 = vmatpush1.msra.mxu0 0.0
    %1726 = vmatprep.subr.mxu0 0.0
    %1727 = vmatpush1.msra.mxu0 0.0
    %1728 = vmatprep.subr.mxu0 0.0
    %1729 = vmatpush1.msra.mxu0 0.0
    %1730 = vmatprep.subr.mxu0 0.0
    %1731 = vmatpush1.msra.mxu0 0.0
    %1732 = vmatprep.subr.mxu0 0.0
    %1733 = vmatpush1.msra.mxu0 0.0
    %1734 = vmatprep.subr.mxu0 0.0
    %1735 = vmatpush1.msra.mxu0 0.0
    %1736 = vmatprep.subr.mxu0 0.0
    %1737 = vmatpush1.msra.mxu0 0.0
    %1738 = vmatprep.subr.mxu0 0.0
    %1739 = vmatpush1.msra.mxu0 0.0
    %1740 = vmatprep.subr.mxu0 0.0
    %1741 = vmatpush1.msra.mxu0 0.0
    %1742 = vmatprep.subr.mxu0 0.0
    %1743 = vmatpush1.msra.mxu0 0.0
    %1744 = vmatprep.mubr.f32.mxu0 0.0
    %1745 = vmatmul.mubr.f32.gmra.mrb[0].mxu0 %v1678
    %v1746 = vpop.f32.mrb[0].mxu0
    %v1747 = vadd.f32 0.0, %v1746
    %v1748 = vpop.f32.mrb[0].mxu0
    %1749 = vdwg.mxu0
    %v1750 = vlaneseq
    %v1751 = vshrl.u32 %v1750, 7
    %v1752 = vsub.s32 0, %v1751
    %v1753 = vrot.slane %v1747, %v1752
    %v1754 = vadd.f32 %v1573, %v1753
    %v1755 = vsel %vm803, %v1542, 0
    %1757 = vmatprep.subr.mxu0 0.0
    %1758 = vmatpush1.msra.mxu0 %v66
    %1759 = vmatprep.subr.mxu0 0.0
    %1760 = vmatpush1.msra.mxu0 %v67
    %1761 = vmatprep.subr.mxu0 0.0
    %1762 = vmatpush1.msra.mxu0 %v68
    %1763 = vmatprep.subr.mxu0 0.0
    %1764 = vmatpush1.msra.mxu0 %v69
    %1765 = vmatprep.subr.mxu0 0.0
    %1766 = vmatpush1.msra.mxu0 0.0
    %1767 = vmatprep.subr.mxu0 0.0
    %1768 = vmatpush1.msra.mxu0 0.0
    %1769 = vmatprep.subr.mxu0 0.0
    %1770 = vmatpush1.msra.mxu0 0.0
    %1771 = vmatprep.subr.mxu0 0.0
    %1772 = vmatpush1.msra.mxu0 0.0
    %1773 = vmatprep.subr.mxu0 0.0
    %1774 = vmatpush1.msra.mxu0 0.0
    %1775 = vmatprep.subr.mxu0 0.0
    %1776 = vmatpush1.msra.mxu0 0.0
    %1777 = vmatprep.subr.mxu0 0.0
    %1778 = vmatpush1.msra.mxu0 0.0
    %1779 = vmatprep.subr.mxu0 0.0
    %1780 = vmatpush1.msra.mxu0 0.0
    %1781 = vmatprep.subr.mxu0 0.0
    %1782 = vmatpush1.msra.mxu0 0.0
    %1783 = vmatprep.subr.mxu0 0.0
    %1784 = vmatpush1.msra.mxu0 0.0
    %1785 = vmatprep.subr.mxu0 0.0
    %1786 = vmatpush1.msra.mxu0 0.0
    %1787 = vmatprep.subr.mxu0 0.0
    %1788 = vmatpush1.msra.mxu0 0.0
    %1789 = vmatprep.subr.mxu0 0.0
    %1790 = vmatpush1.msra.mxu0 0.0
    %1791 = vmatprep.subr.mxu0 0.0
    %1792 = vmatpush1.msra.mxu0 0.0
    %1793 = vmatprep.subr.mxu0 0.0
    %1794 = vmatpush1.msra.mxu0 0.0
    %1795 = vmatprep.subr.mxu0 0.0
    %1796 = vmatpush1.msra.mxu0 0.0
    %1797 = vmatprep.subr.mxu0 0.0
    %1798 = vmatpush1.msra.mxu0 0.0
    %1799 = vmatprep.subr.mxu0 0.0
    %1800 = vmatpush1.msra.mxu0 0.0
    %1801 = vmatprep.subr.mxu0 0.0
    %1802 = vmatpush1.msra.mxu0 0.0
    %1803 = vmatprep.subr.mxu0 0.0
    %1804 = vmatpush1.msra.mxu0 0.0
    %1805 = vmatprep.subr.mxu0 0.0
    %1806 = vmatpush1.msra.mxu0 0.0
    %1807 = vmatprep.subr.mxu0 0.0
    %1808 = vmatpush1.msra.mxu0 0.0
    %1809 = vmatprep.subr.mxu0 0.0
    %1810 = vmatpush1.msra.mxu0 0.0
    %1811 = vmatprep.subr.mxu0 0.0
    %1812 = vmatpush1.msra.mxu0 0.0
    %1813 = vmatprep.subr.mxu0 0.0
    %1814 = vmatpush1.msra.mxu0 0.0
    %1815 = vmatprep.subr.mxu0 0.0
    %1816 = vmatpush1.msra.mxu0 0.0
    %1817 = vmatprep.subr.mxu0 0.0
    %1818 = vmatpush1.msra.mxu0 0.0
    %1819 = vmatprep.subr.mxu0 0.0
    %1820 = vmatpush1.msra.mxu0 0.0
    %1821 = vmatprep.mubr.f32.mxu0 0.0
    %1822 = vmatmul.mubr.f32.gmra.mrb[0].mxu0 %v1755
    %v1823 = vpop.f32.mrb[0].mxu0
    %v1824 = vadd.f32 0.0, %v1823
    %v1825 = vpop.f32.mrb[0].mxu0
    %1826 = vdwg.mxu0
    %v1827 = vadd.f32 %v1754, %v1824
    %v1828 = vxor.u32 %v1827, 2147483648
    %v1829 = vmul.f32 %v1828, 1.442695
    %v1830 = vpow.pop %v1829
    %v1831 = vadd.f32 %v1830, 1.0
    %v1832 = vrcp.pop %v1831
    %v1833 = vmul.f32 1.0, %v1832
    %v1834 = vtanh.pop %v1827
    %v1835 = vmul.f32 %v1833, %v1542
    %1837 = vrot.lane.b32.xlu0 %v1834, 64
    %v1838 = vpop.permute.xlu0 %1837
    %v1840 = vmul.f32 %v1833, %v1838
    %1842 = vrot.lane.b32.xlu0 %v1840, 32
    %v1843 = vpop.permute.xlu0 %1842
    %v1845 = vadd.f32 %v1835, %v1843
    %v1846 = vtanh.pop %v1845
    %1848 = vrot.lane.b32.xlu0 %v1846, 64
    %v1849 = vpop.permute.xlu0 %1848
    %v1851 = vmul.f32 %v1833, %v1849
    %1853 = vrot.lane.b32.xlu0 %v1851, 32
    %v1854 = vpop.permute.xlu0 %1853
    %v1856 = vsel %vm803, %v1854, %v1845
    %v1857 = vmul.f32 %v1851, %v912
    %1859 = vrot.lane.b32.xlu0 %v1857, 32
    %v1860 = vpop.permute.xlu0 %1859
    %v1862 = vsel %vm803, %v1860, 0.0
    %1863 = vadd.xlane.f32.xlu0 %v1862
    %v1864 = vpop.xlane.xlu0 %1863
    %v1865 = vmul.f32 %v1676, %v304
    %v1866 = vsel %vm923, %v1865, 0.0
    %1867 = vadd.xlane.f32.xlu0 %v1866
    %v1868 = vpop.xlane.xlu0 %1867
    %v1869 = vadd.f32 %v1868, %v305
    %v1870 = vlaneseq
    %v1871 = vshrl.u32 %v1870, 7
    %v1872 = vsub.s32 0, %v1871
    %v1873 = vrot.slane %v1869, %v1872
    %v1874 = vadd.f32 %v1864, %v1873
    %vm1875 = vcmp.eq.s32.totalorder %v611, 3
    %1877 = vset.pattern.permute.xlu0 0
    %1878 = vperm.xlu0 %1877, %v1874
    %v1879 = vpop.permute.xlu0 %1878
    %v1881 = vsel %vm1875, %v1879, %v1567
    %s1882 = scalar_lea.vmem %s0, 32
    %v1883 = vld [vmem:[%s1882] sm:$0xff]
    %s1884 = scalar_lea.vmem [#allocation2], 32
    %v1885 = vld [vmem:[%s1884] sm:$0xff]
    %s1886 = scalar_lea.vmem [#allocation3], 32
    %v1887 = vld [vmem:[%s1886] sm:$0xff]
    %v1889 = vsel %vm615, %v1856, 0
    %1891 = vmatprep.subr.mxu0 0.0
    %1892 = vmatpush1.msra.mxu0 %v49
    %1893 = vmatprep.subr.mxu0 0.0
    %1894 = vmatpush1.msra.mxu0 %v50
    %1895 = vmatprep.subr.mxu0 0.0
    %1896 = vmatpush1.msra.mxu0 %v51
    %1897 = vmatprep.subr.mxu0 0.0
    %1898 = vmatpush1.msra.mxu0 %v52
    %1899 = vmatprep.subr.mxu0 0.0
    %1900 = vmatpush1.msra.mxu0 %v53
    %1901 = vmatprep.subr.mxu0 0.0
    %1902 = vmatpush1.msra.mxu0 %v54
    %1903 = vmatprep.subr.mxu0 0.0
    %1904 = vmatpush1.msra.mxu0 %v55
    %1905 = vmatprep.subr.mxu0 0.0
    %1906 = vmatpush1.msra.mxu0 %v56
    %1907 = vmatprep.subr.mxu0 0.0
    %1908 = vmatpush1.msra.mxu0 0.0
    %1909 = vmatprep.subr.mxu0 0.0
    %1910 = vmatpush1.msra.mxu0 0.0
    %1911 = vmatprep.subr.mxu0 0.0
    %1912 = vmatpush1.msra.mxu0 0.0
    %1913 = vmatprep.subr.mxu0 0.0
    %1914 = vmatpush1.msra.mxu0 0.0
    %1915 = vmatprep.subr.mxu0 0.0
    %1916 = vmatpush1.msra.mxu0 0.0
    %1917 = vmatprep.subr.mxu0 0.0
    %1918 = vmatpush1.msra.mxu0 0.0
    %1919 = vmatprep.subr.mxu0 0.0
    %1920 = vmatpush1.msra.mxu0 0.0
    %1921 = vmatprep.subr.mxu0 0.0
    %1922 = vmatpush1.msra.mxu0 0.0
    %1923 = vmatprep.subr.mxu0 0.0
    %1924 = vmatpush1.msra.mxu0 0.0
    %1925 = vmatprep.subr.mxu0 0.0
    %1926 = vmatpush1.msra.mxu0 0.0
    %1927 = vmatprep.subr.mxu0 0.0
    %1928 = vmatpush1.msra.mxu0 0.0
    %1929 = vmatprep.subr.mxu0 0.0
    %1930 = vmatpush1.msra.mxu0 0.0
    %1931 = vmatprep.subr.mxu0 0.0
    %1932 = vmatpush1.msra.mxu0 0.0
    %1933 = vmatprep.subr.mxu0 0.0
    %1934 = vmatpush1.msra.mxu0 0.0
    %1935 = vmatprep.subr.mxu0 0.0
    %1936 = vmatpush1.msra.mxu0 0.0
    %1937 = vmatprep.subr.mxu0 0.0
    %1938 = vmatpush1.msra.mxu0 0.0
    %1939 = vmatprep.subr.mxu0 0.0
    %1940 = vmatpush1.msra.mxu0 0.0
    %1941 = vmatprep.subr.mxu0 0.0
    %1942 = vmatpush1.msra.mxu0 0.0
    %1943 = vmatprep.subr.mxu0 0.0
    %1944 = vmatpush1.msra.mxu0 0.0
    %1945 = vmatprep.subr.mxu0 0.0
    %1946 = vmatpush1.msra.mxu0 0.0
    %1947 = vmatprep.subr.mxu0 0.0
    %1948 = vmatpush1.msra.mxu0 0.0
    %1949 = vmatprep.subr.mxu0 0.0
    %1950 = vmatpush1.msra.mxu0 0.0
    %1951 = vmatprep.subr.mxu0 0.0
    %1952 = vmatpush1.msra.mxu0 0.0
    %1953 = vmatprep.subr.mxu0 0.0
    %1954 = vmatpush1.msra.mxu0 0.0
    %1955 = vmatprep.mubr.f32.mxu0 0.0
    %1956 = vmatmul.mubr.f32.gmra.mrb[0].mxu0 %v1889
    %v1957 = vpop.f32.mrb[0].mxu0
    %v1958 = vadd.f32 %v1885, %v1957
    %v1959 = vpop.f32.mrb[0].mxu0
    %1960 = vdwg.mxu0
    %v1961 = vtanh.pop %v1958
    %v1962 = vmul.f32 %v1961, %v694
    %v1963 = vsel %vm320, %v1962, 0.0
    %1964 = vadd.xlane.f32.xlu0 %v1963
    %v1965 = vpop.xlane.xlu0 %1964
    %v1966 = vrot.slane %v1965, 4
    %v1967 = vmax.f32 %v1965, %v1966
    %v1968 = vrot.slane %v1967, 2
    %v1969 = vmax.f32 %v1967, %v1968
    %v1970 = vrot.slane %v1969, 1
    %v1971 = vmax.f32 %v1969, %v1970
    %v1972 = vsub.f32 %v1965, %v1971
    %v1973 = vmul.f32 %v1972, 1.442695
    %v1974 = vpow.pop %v1973
    %v1975 = vrot.slane %v1974, 4
    %v1976 = vadd.f32 %v1974, %v1975
    %v1977 = vrot.slane %v1976, 2
    %v1978 = vadd.f32 %v1976, %v1977
    %v1979 = vrot.slane %v1978, 1
    %v1980 = vadd.f32 %v1978, %v1979
    %v1981 = vrcp.pop %v1980
    %v1982 = vmul.f32 %v1974, %v1981
    %v1983 = vmul.f32 %v1982, %v1883
    %v1984 = vsel %vm320, %v1983, 0.0
    %v1985 = vrot.slane %v1984, 4
    %v1986 = vadd.f32 %v1984, %v1985
    %v1987 = vrot.slane %v1986, 2
    %v1988 = vadd.f32 %v1986, %v1987
    %v1989 = vrot.slane %v1988, 1
    %v1990 = vadd.f32 %v1988, %v1989
    %v1992 = vsel %vm320, %v1990, 0
    %1994 = vmatprep.subr.mxu0 0.0
    %1995 = vmatpush1.msra.mxu0 %v149
    %1996 = vmatprep.subr.mxu0 0.0
    %1997 = vmatpush1.msra.mxu0 %v154
    %1998 = vmatprep.subr.mxu0 0.0
    %1999 = vmatpush1.msra.mxu0 0.0
    %2000 = vmatprep.subr.mxu0 0.0
    %2001 = vmatpush1.msra.mxu0 0.0
    %2002 = vmatprep.subr.mxu0 0.0
    %2003 = vmatpush1.msra.mxu0 0.0
    %2004 = vmatprep.subr.mxu0 0.0
    %2005 = vmatpush1.msra.mxu0 0.0
    %2006 = vmatprep.subr.mxu0 0.0
    %2007 = vmatpush1.msra.mxu0 0.0
    %2008 = vmatprep.subr.mxu0 0.0
    %2009 = vmatpush1.msra.mxu0 0.0
    %2010 = vmatprep.subr.mxu0 0.0
    %2011 = vmatpush1.msra.mxu0 0.0
    %2012 = vmatprep.subr.mxu0 0.0
    %2013 = vmatpush1.msra.mxu0 0.0
    %2014 = vmatprep.subr.mxu0 0.0
    %2015 = vmatpush1.msra.mxu0 0.0
    %2016 = vmatprep.subr.mxu0 0.0
    %2017 = vmatpush1.msra.mxu0 0.0
    %2018 = vmatprep.subr.mxu0 0.0
    %2019 = vmatpush1.msra.mxu0 0.0
    %2020 = vmatprep.subr.mxu0 0.0
    %2021 = vmatpush1.msra.mxu0 0.0
    %2022 = vmatprep.subr.mxu0 0.0
    %2023 = vmatpush1.msra.mxu0 0.0
    %2024 = vmatprep.subr.mxu0 0.0
    %2025 = vmatpush1.msra.mxu0 0.0
    %2026 = vmatprep.subr.mxu0 0.0
    %2027 = vmatpush1.msra.mxu0 0.0
    %2028 = vmatprep.subr.mxu0 0.0
    %2029 = vmatpush1.msra.mxu0 0.0
    %2030 = vmatprep.subr.mxu0 0.0
    %2031 = vmatpush1.msra.mxu0 0.0
    %2032 = vmatprep.subr.mxu0 0.0
    %2033 = vmatpush1.msra.mxu0 0.0
    %2034 = vmatprep.subr.mxu0 0.0
    %2035 = vmatpush1.msra.mxu0 0.0
    %2036 = vmatprep.subr.mxu0 0.0
    %2037 = vmatpush1.msra.mxu0 0.0
    %2038 = vmatprep.subr.mxu0 0.0
    %2039 = vmatpush1.msra.mxu0 0.0
    %2040 = vmatprep.subr.mxu0 0.0
    %2041 = vmatpush1.msra.mxu0 0.0
    %2042 = vmatprep.subr.mxu0 0.0
    %2043 = vmatpush1.msra.mxu0 0.0
    %2044 = vmatprep.subr.mxu0 0.0
    %2045 = vmatpush1.msra.mxu0 0.0
    %2046 = vmatprep.subr.mxu0 0.0
    %2047 = vmatpush1.msra.mxu0 0.0
    %2048 = vmatprep.subr.mxu0 0.0
    %2049 = vmatpush1.msra.mxu0 0.0
    %2050 = vmatprep.subr.mxu0 0.0
    %2051 = vmatpush1.msra.mxu0 0.0
    %2052 = vmatprep.subr.mxu0 0.0
    %2053 = vmatpush1.msra.mxu0 0.0
    %2054 = vmatprep.subr.mxu0 0.0
    %2055 = vmatpush1.msra.mxu0 0.0
    %2056 = vmatprep.subr.mxu0 0.0
    %2057 = vmatpush1.msra.mxu0 0.0
    %2058 = vmatprep.mubr.f32.mxu0 0.0
    %2059 = vmatmul.mubr.f32.gmra.mrb[0].mxu0 %v1992
    %v2060 = vpop.f32.mrb[0].mxu0
    %v2061 = vadd.f32 0.0, %v2060
    %v2062 = vpop.f32.mrb[0].mxu0
    %2063 = vdwg.mxu0
    %v2064 = vlaneseq
    %v2065 = vshrl.u32 %v2064, 7
    %v2066 = vsub.s32 0, %v2065
    %v2067 = vrot.slane %v2061, %v2066
    %v2068 = vadd.f32 %v1887, %v2067
    %v2069 = vsel %vm803, %v1856, 0
    %2071 = vmatprep.subr.mxu0 0.0
    %2072 = vmatpush1.msra.mxu0 %v66
    %2073 = vmatprep.subr.mxu0 0.0
    %2074 = vmatpush1.msra.mxu0 %v67
    %2075 = vmatprep.subr.mxu0 0.0
    %2076 = vmatpush1.msra.mxu0 %v68
    %2077 = vmatprep.subr.mxu0 0.0
    %2078 = vmatpush1.msra.mxu0 %v69
    %2079 = vmatprep.subr.mxu0 0.0
    %2080 = vmatpush1.msra.mxu0 0.0
    %2081 = vmatprep.subr.mxu0 0.0
    %2082 = vmatpush1.msra.mxu0 0.0
    %2083 = vmatprep.subr.mxu0 0.0
    %2084 = vmatpush1.msra.mxu0 0.0
    %2085 = vmatprep.subr.mxu0 0.0
    %2086 = vmatpush1.msra.mxu0 0.0
    %2087 = vmatprep.subr.mxu0 0.0
    %2088 = vmatpush1.msra.mxu0 0.0
    %2089 = vmatprep.subr.mxu0 0.0
    %2090 = vmatpush1.msra.mxu0 0.0
    %2091 = vmatprep.subr.mxu0 0.0
    %2092 = vmatpush1.msra.mxu0 0.0
    %2093 = vmatprep.subr.mxu0 0.0
    %2094 = vmatpush1.msra.mxu0 0.0
    %2095 = vmatprep.subr.mxu0 0.0
    %2096 = vmatpush1.msra.mxu0 0.0
    %2097 = vmatprep.subr.mxu0 0.0
    %2098 = vmatpush1.msra.mxu0 0.0
    %2099 = vmatprep.subr.mxu0 0.0
    %2100 = vmatpush1.msra.mxu0 0.0
    %2101 = vmatprep.subr.mxu0 0.0
    %2102 = vmatpush1.msra.mxu0 0.0
    %2103 = vmatprep.subr.mxu0 0.0
    %2104 = vmatpush1.msra.mxu0 0.0
    %2105 = vmatprep.subr.mxu0 0.0
    %2106 = vmatpush1.msra.mxu0 0.0
    %2107 = vmatprep.subr.mxu0 0.0
    %2108 = vmatpush1.msra.mxu0 0.0
    %2109 = vmatprep.subr.mxu0 0.0
    %2110 = vmatpush1.msra.mxu0 0.0
    %2111 = vmatprep.subr.mxu0 0.0
    %2112 = vmatpush1.msra.mxu0 0.0
    %2113 = vmatprep.subr.mxu0 0.0
    %2114 = vmatpush1.msra.mxu0 0.0
    %2115 = vmatprep.subr.mxu0 0.0
    %2116 = vmatpush1.msra.mxu0 0.0
    %2117 = vmatprep.subr.mxu0 0.0
    %2118 = vmatpush1.msra.mxu0 0.0
    %2119 = vmatprep.subr.mxu0 0.0
    %2120 = vmatpush1.msra.mxu0 0.0
    %2121 = vmatprep.subr.mxu0 0.0
    %2122 = vmatpush1.msra.mxu0 0.0
    %2123 = vmatprep.subr.mxu0 0.0
    %2124 = vmatpush1.msra.mxu0 0.0
    %2125 = vmatprep.subr.mxu0 0.0
    %2126 = vmatpush1.msra.mxu0 0.0
    %2127 = vmatprep.subr.mxu0 0.0
    %2128 = vmatpush1.msra.mxu0 0.0
    %2129 = vmatprep.subr.mxu0 0.0
    %2130 = vmatpush1.msra.mxu0 0.0
    %2131 = vmatprep.subr.mxu0 0.0
    %2132 = vmatpush1.msra.mxu0 0.0
    %2133 = vmatprep.subr.mxu0 0.0
    %2134 = vmatpush1.msra.mxu0 0.0
    %2135 = vmatprep.mubr.f32.mxu0 0.0
    %2136 = vmatmul.mubr.f32.gmra.mrb[0].mxu0 %v2069
    %v2137 = vpop.f32.mrb[0].mxu0
    %v2138 = vadd.f32 0.0, %v2137
    %v2139 = vpop.f32.mrb[0].mxu0
    %2140 = vdwg.mxu0
    %v2141 = vadd.f32 %v2068, %v2138
    %v2142 = vxor.u32 %v2141, 2147483648
    %v2143 = vmul.f32 %v2142, 1.442695
    %v2144 = vpow.pop %v2143
    %v2145 = vadd.f32 %v2144, 1.0
    %v2146 = vrcp.pop %v2145
    %v2147 = vmul.f32 1.0, %v2146
    %v2148 = vtanh.pop %v2141
    %v2149 = vmul.f32 %v2147, %v1856
    %2151 = vrot.lane.b32.xlu0 %v2148, 64
    %v2152 = vpop.permute.xlu0 %2151
    %v2154 = vmul.f32 %v2147, %v2152
    %2156 = vrot.lane.b32.xlu0 %v2154, 32
    %v2157 = vpop.permute.xlu0 %2156
    %v2159 = vadd.f32 %v2149, %v2157
    %v2160 = vtanh.pop %v2159
    %2162 = vrot.lane.b32.xlu0 %v2160, 64
    %v2163 = vpop.permute.xlu0 %2162
    %v2165 = vmul.f32 %v2147, %v2163
    %2167 = vrot.lane.b32.xlu0 %v2165, 32
    %v2168 = vpop.permute.xlu0 %2167
    %v2170 = vsel %vm803, %v2168, %v2159
    %v2171 = vmul.f32 %v2165, %v912
    %2173 = vrot.lane.b32.xlu0 %v2171, 32
    %v2174 = vpop.permute.xlu0 %2173
    %v2176 = vsel %vm803, %v2174, 0.0
    %2177 = vadd.xlane.f32.xlu0 %v2176
    %v2178 = vpop.xlane.xlu0 %2177
    %v2179 = vmul.f32 %v1990, %v304
    %v2180 = vsel %vm923, %v2179, 0.0
    %2181 = vadd.xlane.f32.xlu0 %v2180
    %v2182 = vpop.xlane.xlu0 %2181
    %v2183 = vadd.f32 %v2182, %v305
    %v2184 = vlaneseq
    %v2185 = vshrl.u32 %v2184, 7
    %v2186 = vsub.s32 0, %v2185
    %v2187 = vrot.slane %v2183, %v2186
    %v2188 = vadd.f32 %v2178, %v2187
    %vm2189 = vcmp.eq.s32.totalorder %v611, 4
    %2191 = vset.pattern.permute.xlu0 0
    %2192 = vperm.xlu0 %2191, %v2188
    %v2193 = vpop.permute.xlu0 %2192
    %v2195 = vsel %vm2189, %v2193, %v1881
    %s2196 = scalar_lea.vmem %s0, 40
    %v2197 = vld [vmem:[%s2196] sm:$0xff]
    %s2198 = scalar_lea.vmem [#allocation2], 40
    %v2199 = vld [vmem:[%s2198] sm:$0xff]
    %s2200 = scalar_lea.vmem [#allocation3], 40
    %v2201 = vld [vmem:[%s2200] sm:$0xff]
    %v2203 = vsel %vm615, %v2170, 0
    %2205 = vmatprep.subr.mxu0 0.0
    %2206 = vmatpush1.msra.mxu0 %v49
    %2207 = vmatprep.subr.mxu0 0.0
    %2208 = vmatpush1.msra.mxu0 %v50
    %2209 = vmatprep.subr.mxu0 0.0
    %2210 = vmatpush1.msra.mxu0 %v51
    %2211 = vmatprep.subr.mxu0 0.0
    %2212 = vmatpush1.msra.mxu0 %v52
    %2213 = vmatprep.subr.mxu0 0.0
    %2214 = vmatpush1.msra.mxu0 %v53
    %2215 = vmatprep.subr.mxu0 0.0
    %2216 = vmatpush1.msra.mxu0 %v54
    %2217 = vmatprep.subr.mxu0 0.0
    %2218 = vmatpush1.msra.mxu0 %v55
    %2219 = vmatprep.subr.mxu0 0.0
    %2220 = vmatpush1.msra.mxu0 %v56
    %2221 = vmatprep.subr.mxu0 0.0
    %2222 = vmatpush1.msra.mxu0 0.0
    %2223 = vmatprep.subr.mxu0 0.0
    %2224 = vmatpush1.msra.mxu0 0.0
    %2225 = vmatprep.subr.mxu0 0.0
    %2226 = vmatpush1.msra.mxu0 0.0
    %2227 = vmatprep.subr.mxu0 0.0
    %2228 = vmatpush1.msra.mxu0 0.0
    %2229 = vmatprep.subr.mxu0 0.0
    %2230 = vmatpush1.msra.mxu0 0.0
    %2231 = vmatprep.subr.mxu0 0.0
    %2232 = vmatpush1.msra.mxu0 0.0
    %2233 = vmatprep.subr.mxu0 0.0
    %2234 = vmatpush1.msra.mxu0 0.0
    %2235 = vmatprep.subr.mxu0 0.0
    %2236 = vmatpush1.msra.mxu0 0.0
    %2237 = vmatprep.subr.mxu0 0.0
    %2238 = vmatpush1.msra.mxu0 0.0
    %2239 = vmatprep.subr.mxu0 0.0
    %2240 = vmatpush1.msra.mxu0 0.0
    %2241 = vmatprep.subr.mxu0 0.0
    %2242 = vmatpush1.msra.mxu0 0.0
    %2243 = vmatprep.subr.mxu0 0.0
    %2244 = vmatpush1.msra.mxu0 0.0
    %2245 = vmatprep.subr.mxu0 0.0
    %2246 = vmatpush1.msra.mxu0 0.0
    %2247 = vmatprep.subr.mxu0 0.0
    %2248 = vmatpush1.msra.mxu0 0.0
    %2249 = vmatprep.subr.mxu0 0.0
    %2250 = vmatpush1.msra.mxu0 0.0
    %2251 = vmatprep.subr.mxu0 0.0
    %2252 = vmatpush1.msra.mxu0 0.0
    %2253 = vmatprep.subr.mxu0 0.0
    %2254 = vmatpush1.msra.mxu0 0.0
    %2255 = vmatprep.subr.mxu0 0.0
    %2256 = vmatpush1.msra.mxu0 0.0
    %2257 = vmatprep.subr.mxu0 0.0
    %2258 = vmatpush1.msra.mxu0 0.0
    %2259 = vmatprep.subr.mxu0 0.0
    %2260 = vmatpush1.msra.mxu0 0.0
    %2261 = vmatprep.subr.mxu0 0.0
    %2262 = vmatpush1.msra.mxu0 0.0
    %2263 = vmatprep.subr.mxu0 0.0
    %2264 = vmatpush1.msra.mxu0 0.0
    %2265 = vmatprep.subr.mxu0 0.0
    %2266 = vmatpush1.msra.mxu0 0.0
    %2267 = vmatprep.subr.mxu0 0.0
    %2268 = vmatpush1.msra.mxu0 0.0
    %2269 = vmatprep.mubr.f32.mxu0 0.0
    %2270 = vmatmul.mubr.f32.gmra.mrb[0].mxu0 %v2203
    %v2271 = vpop.f32.mrb[0].mxu0
    %v2272 = vadd.f32 %v2199, %v2271
    %v2273 = vpop.f32.mrb[0].mxu0
    %2274 = vdwg.mxu0
    %v2275 = vtanh.pop %v2272
    %v2276 = vmul.f32 %v2275, %v694
    %v2277 = vsel %vm320, %v2276, 0.0
    %2278 = vadd.xlane.f32.xlu0 %v2277
    %v2279 = vpop.xlane.xlu0 %2278
    %v2280 = vrot.slane %v2279, 4
    %v2281 = vmax.f32 %v2279, %v2280
    %v2282 = vrot.slane %v2281, 2
    %v2283 = vmax.f32 %v2281, %v2282
    %v2284 = vrot.slane %v2283, 1
    %v2285 = vmax.f32 %v2283, %v2284
    %v2286 = vsub.f32 %v2279, %v2285
    %v2287 = vmul.f32 %v2286, 1.442695
    %v2288 = vpow.pop %v2287
    %v2289 = vrot.slane %v2288, 4
    %v2290 = vadd.f32 %v2288, %v2289
    %v2291 = vrot.slane %v2290, 2
    %v2292 = vadd.f32 %v2290, %v2291
    %v2293 = vrot.slane %v2292, 1
    %v2294 = vadd.f32 %v2292, %v2293
    %v2295 = vrcp.pop %v2294
    %v2296 = vmul.f32 %v2288, %v2295
    %v2297 = vmul.f32 %v2296, %v2197
    %v2298 = vsel %vm320, %v2297, 0.0
    %v2299 = vrot.slane %v2298, 4
    %v2300 = vadd.f32 %v2298, %v2299
    %v2301 = vrot.slane %v2300, 2
    %v2302 = vadd.f32 %v2300, %v2301
    %v2303 = vrot.slane %v2302, 1
    %v2304 = vadd.f32 %v2302, %v2303
    %v2306 = vsel %vm320, %v2304, 0
    %2308 = vmatprep.subr.mxu0 0.0
    %2309 = vmatpush1.msra.mxu0 %v149
    %2310 = vmatprep.subr.mxu0 0.0
    %2311 = vmatpush1.msra.mxu0 %v154
    %2312 = vmatprep.subr.mxu0 0.0
    %2313 = vmatpush1.msra.mxu0 0.0
    %2314 = vmatprep.subr.mxu0 0.0
    %2315 = vmatpush1.msra.mxu0 0.0
    %2316 = vmatprep.subr.mxu0 0.0
    %2317 = vmatpush1.msra.mxu0 0.0
    %2318 = vmatprep.subr.mxu0 0.0
    %2319 = vmatpush1.msra.mxu0 0.0
    %2320 = vmatprep.subr.mxu0 0.0
    %2321 = vmatpush1.msra.mxu0 0.0
    %2322 = vmatprep.subr.mxu0 0.0
    %2323 = vmatpush1.msra.mxu0 0.0
    %2324 = vmatprep.subr.mxu0 0.0
    %2325 = vmatpush1.msra.mxu0 0.0
    %2326 = vmatprep.subr.mxu0 0.0
    %2327 = vmatpush1.msra.mxu0 0.0
    %2328 = vmatprep.subr.mxu0 0.0
    %2329 = vmatpush1.msra.mxu0 0.0
    %2330 = vmatprep.subr.mxu0 0.0
    %2331 = vmatpush1.msra.mxu0 0.0
    %2332 = vmatprep.subr.mxu0 0.0
    %2333 = vmatpush1.msra.mxu0 0.0
    %2334 = vmatprep.subr.mxu0 0.0
    %2335 = vmatpush1.msra.mxu0 0.0
    %2336 = vmatprep.subr.mxu0 0.0
    %2337 = vmatpush1.msra.mxu0 0.0
    %2338 = vmatprep.subr.mxu0 0.0
    %2339 = vmatpush1.msra.mxu0 0.0
    %2340 = vmatprep.subr.mxu0 0.0
    %2341 = vmatpush1.msra.mxu0 0.0
    %2342 = vmatprep.subr.mxu0 0.0
    %2343 = vmatpush1.msra.mxu0 0.0
    %2344 = vmatprep.subr.mxu0 0.0
    %2345 = vmatpush1.msra.mxu0 0.0
    %2346 = vmatprep.subr.mxu0 0.0
    %2347 = vmatpush1.msra.mxu0 0.0
    %2348 = vmatprep.subr.mxu0 0.0
    %2349 = vmatpush1.msra.mxu0 0.0
    %2350 = vmatprep.subr.mxu0 0.0
    %2351 = vmatpush1.msra.mxu0 0.0
    %2352 = vmatprep.subr.mxu0 0.0
    %2353 = vmatpush1.msra.mxu0 0.0
    %2354 = vmatprep.subr.mxu0 0.0
    %2355 = vmatpush1.msra.mxu0 0.0
    %2356 = vmatprep.subr.mxu0 0.0
    %2357 = vmatpush1.msra.mxu0 0.0
    %2358 = vmatprep.subr.mxu0 0.0
    %2359 = vmatpush1.msra.mxu0 0.0
    %2360 = vmatprep.subr.mxu0 0.0
    %2361 = vmatpush1.msra.mxu0 0.0
    %2362 = vmatprep.subr.mxu0 0.0
    %2363 = vmatpush1.msra.mxu0 0.0
    %2364 = vmatprep.subr.mxu0 0.0
    %2365 = vmatpush1.msra.mxu0 0.0
    %2366 = vmatprep.subr.mxu0 0.0
    %2367 = vmatpush1.msra.mxu0 0.0
    %2368 = vmatprep.subr.mxu0 0.0
    %2369 = vmatpush1.msra.mxu0 0.0
    %2370 = vmatprep.subr.mxu0 0.0
    %2371 = vmatpush1.msra.mxu0 0.0
    %2372 = vmatprep.mubr.f32.mxu0 0.0
    %2373 = vmatmul.mubr.f32.gmra.mrb[0].mxu0 %v2306
    %v2374 = vpop.f32.mrb[0].mxu0
    %v2375 = vadd.f32 0.0, %v2374
    %v2376 = vpop.f32.mrb[0].mxu0
    %2377 = vdwg.mxu0
    %v2378 = vlaneseq
    %v2379 = vshrl.u32 %v2378, 7
    %v2380 = vsub.s32 0, %v2379
    %v2381 = vrot.slane %v2375, %v2380
    %v2382 = vadd.f32 %v2201, %v2381
    %v2383 = vsel %vm803, %v2170, 0
    %2385 = vmatprep.subr.mxu0 0.0
    %2386 = vmatpush1.msra.mxu0 %v66
    %2387 = vmatprep.subr.mxu0 0.0
    %2388 = vmatpush1.msra.mxu0 %v67
    %2389 = vmatprep.subr.mxu0 0.0
    %2390 = vmatpush1.msra.mxu0 %v68
    %2391 = vmatprep.subr.mxu0 0.0
    %2392 = vmatpush1.msra.mxu0 %v69
    %2393 = vmatprep.subr.mxu0 0.0
    %2394 = vmatpush1.msra.mxu0 0.0
    %2395 = vmatprep.subr.mxu0 0.0
    %2396 = vmatpush1.msra.mxu0 0.0
    %2397 = vmatprep.subr.mxu0 0.0
    %2398 = vmatpush1.msra.mxu0 0.0
    %2399 = vmatprep.subr.mxu0 0.0
    %2400 = vmatpush1.msra.mxu0 0.0
    %2401 = vmatprep.subr.mxu0 0.0
    %2402 = vmatpush1.msra.mxu0 0.0
    %2403 = vmatprep.subr.mxu0 0.0
    %2404 = vmatpush1.msra.mxu0 0.0
    %2405 = vmatprep.subr.mxu0 0.0
    %2406 = vmatpush1.msra.mxu0 0.0
    %2407 = vmatprep.subr.mxu0 0.0
    %2408 = vmatpush1.msra.mxu0 0.0
    %2409 = vmatprep.subr.mxu0 0.0
    %2410 = vmatpush1.msra.mxu0 0.0
    %2411 = vmatprep.subr.mxu0 0.0
    %2412 = vmatpush1.msra.mxu0 0.0
    %2413 = vmatprep.subr.mxu0 0.0
    %2414 = vmatpush1.msra.mxu0 0.0
    %2415 = vmatprep.subr.mxu0 0.0
    %2416 = vmatpush1.msra.mxu0 0.0
    %2417 = vmatprep.subr.mxu0 0.0
    %2418 = vmatpush1.msra.mxu0 0.0
    %2419 = vmatprep.subr.mxu0 0.0
    %2420 = vmatpush1.msra.mxu0 0.0
    %2421 = vmatprep.subr.mxu0 0.0
    %2422 = vmatpush1.msra.mxu0 0.0
    %2423 = vmatprep.subr.mxu0 0.0
    %2424 = vmatpush1.msra.mxu0 0.0
    %2425 = vmatprep.subr.mxu0 0.0
    %2426 = vmatpush1.msra.mxu0 0.0
    %2427 = vmatprep.subr.mxu0 0.0
    %2428 = vmatpush1.msra.mxu0 0.0
    %2429 = vmatprep.subr.mxu0 0.0
    %2430 = vmatpush1.msra.mxu0 0.0
    %2431 = vmatprep.subr.mxu0 0.0
    %2432 = vmatpush1.msra.mxu0 0.0
    %2433 = vmatprep.subr.mxu0 0.0
    %2434 = vmatpush1.msra.mxu0 0.0
    %2435 = vmatprep.subr.mxu0 0.0
    %2436 = vmatpush1.msra.mxu0 0.0
    %2437 = vmatprep.subr.mxu0 0.0
    %2438 = vmatpush1.msra.mxu0 0.0
    %2439 = vmatprep.subr.mxu0 0.0
    %2440 = vmatpush1.msra.mxu0 0.0
    %2441 = vmatprep.subr.mxu0 0.0
    %2442 = vmatpush1.msra.mxu0 0.0
    %2443 = vmatprep.subr.mxu0 0.0
    %2444 = vmatpush1.msra.mxu0 0.0
    %2445 = vmatprep.subr.mxu0 0.0
    %2446 = vmatpush1.msra.mxu0 0.0
    %2447 = vmatprep.subr.mxu0 0.0
    %2448 = vmatpush1.msra.mxu0 0.0
    %2449 = vmatprep.mubr.f32.mxu0 0.0
    %2450 = vmatmul.mubr.f32.gmra.mrb[0].mxu0 %v2383
    %v2451 = vpop.f32.mrb[0].mxu0
    %v2452 = vadd.f32 0.0, %v2451
    %v2453 = vpop.f32.mrb[0].mxu0
    %2454 = vdwg.mxu0
    %v2455 = vadd.f32 %v2382, %v2452
    %v2456 = vxor.u32 %v2455, 2147483648
    %v2457 = vmul.f32 %v2456, 1.442695
    %v2458 = vpow.pop %v2457
    %v2459 = vadd.f32 %v2458, 1.0
    %v2460 = vrcp.pop %v2459
    %v2461 = vmul.f32 1.0, %v2460
    %v2462 = vtanh.pop %v2455
    %v2463 = vmul.f32 %v2461, %v2170
    %2465 = vrot.lane.b32.xlu0 %v2462, 64
    %v2466 = vpop.permute.xlu0 %2465
    %v2468 = vmul.f32 %v2461, %v2466
    %2470 = vrot.lane.b32.xlu0 %v2468, 32
    %v2471 = vpop.permute.xlu0 %2470
    %v2473 = vadd.f32 %v2463, %v2471
    %v2474 = vtanh.pop %v2473
    %2476 = vrot.lane.b32.xlu0 %v2474, 64
    %v2477 = vpop.permute.xlu0 %2476
    %v2479 = vmul.f32 %v2461, %v2477
    %2481 = vrot.lane.b32.xlu0 %v2479, 32
    %v2482 = vpop.permute.xlu0 %2481
    %v2484 = vsel %vm803, %v2482, %v2473
    %v2485 = vmul.f32 %v2479, %v912
    %2487 = vrot.lane.b32.xlu0 %v2485, 32
    %v2488 = vpop.permute.xlu0 %2487
    %v2490 = vsel %vm803, %v2488, 0.0
    %2491 = vadd.xlane.f32.xlu0 %v2490
    %v2492 = vpop.xlane.xlu0 %2491
    %v2493 = vmul.f32 %v2304, %v304
    %v2494 = vsel %vm923, %v2493, 0.0
    %2495 = vadd.xlane.f32.xlu0 %v2494
    %v2496 = vpop.xlane.xlu0 %2495
    %v2497 = vadd.f32 %v2496, %v305
    %v2498 = vlaneseq
    %v2499 = vshrl.u32 %v2498, 7
    %v2500 = vsub.s32 0, %v2499
    %v2501 = vrot.slane %v2497, %v2500
    %v2502 = vadd.f32 %v2492, %v2501
    %vm2503 = vcmp.eq.s32.totalorder %v611, 5
    %2505 = vset.pattern.permute.xlu0 0
    %2506 = vperm.xlu0 %2505, %v2502
    %v2507 = vpop.permute.xlu0 %2506
    %v2509 = vsel %vm2503, %v2507, %v2195
    %s2510 = scalar_lea.vmem %s0, 48
    %v2511 = vld [vmem:[%s2510] sm:$0xff]
    %s2512 = scalar_lea.vmem [#allocation2], 48
    %v2513 = vld [vmem:[%s2512] sm:$0xff]
    %s2514 = scalar_lea.vmem [#allocation3], 48
    %v2515 = vld [vmem:[%s2514] sm:$0xff]
    %v2517 = vsel %vm615, %v2484, 0
    %2519 = vmatprep.subr.mxu0 0.0
    %2520 = vmatpush1.msra.mxu0 %v49
    %2521 = vmatprep.subr.mxu0 0.0
    %2522 = vmatpush1.msra.mxu0 %v50
    %2523 = vmatprep.subr.mxu0 0.0
    %2524 = vmatpush1.msra.mxu0 %v51
    %2525 = vmatprep.subr.mxu0 0.0
    %2526 = vmatpush1.msra.mxu0 %v52
    %2527 = vmatprep.subr.mxu0 0.0
    %2528 = vmatpush1.msra.mxu0 %v53
    %2529 = vmatprep.subr.mxu0 0.0
    %2530 = vmatpush1.msra.mxu0 %v54
    %2531 = vmatprep.subr.mxu0 0.0
    %2532 = vmatpush1.msra.mxu0 %v55
    %2533 = vmatprep.subr.mxu0 0.0
    %2534 = vmatpush1.msra.mxu0 %v56
    %2535 = vmatprep.subr.mxu0 0.0
    %2536 = vmatpush1.msra.mxu0 0.0
    %2537 = vmatprep.subr.mxu0 0.0
    %2538 = vmatpush1.msra.mxu0 0.0
    %2539 = vmatprep.subr.mxu0 0.0
    %2540 = vmatpush1.msra.mxu0 0.0
    %2541 = vmatprep.subr.mxu0 0.0
    %2542 = vmatpush1.msra.mxu0 0.0
    %2543 = vmatprep.subr.mxu0 0.0
    %2544 = vmatpush1.msra.mxu0 0.0
    %2545 = vmatprep.subr.mxu0 0.0
    %2546 = vmatpush1.msra.mxu0 0.0
    %2547 = vmatprep.subr.mxu0 0.0
    %2548 = vmatpush1.msra.mxu0 0.0
    %2549 = vmatprep.subr.mxu0 0.0
    %2550 = vmatpush1.msra.mxu0 0.0
    %2551 = vmatprep.subr.mxu0 0.0
    %2552 = vmatpush1.msra.mxu0 0.0
    %2553 = vmatprep.subr.mxu0 0.0
    %2554 = vmatpush1.msra.mxu0 0.0
    %2555 = vmatprep.subr.mxu0 0.0
    %2556 = vmatpush1.msra.mxu0 0.0
    %2557 = vmatprep.subr.mxu0 0.0
    %2558 = vmatpush1.msra.mxu0 0.0
    %2559 = vmatprep.subr.mxu0 0.0
    %2560 = vmatpush1.msra.mxu0 0.0
    %2561 = vmatprep.subr.mxu0 0.0
    %2562 = vmatpush1.msra.mxu0 0.0
    %2563 = vmatprep.subr.mxu0 0.0
    %2564 = vmatpush1.msra.mxu0 0.0
    %2565 = vmatprep.subr.mxu0 0.0
    %2566 = vmatpush1.msra.mxu0 0.0
    %2567 = vmatprep.subr.mxu0 0.0
    %2568 = vmatpush1.msra.mxu0 0.0
    %2569 = vmatprep.subr.mxu0 0.0
    %2570 = vmatpush1.msra.mxu0 0.0
    %2571 = vmatprep.subr.mxu0 0.0
    %2572 = vmatpush1.msra.mxu0 0.0
    %2573 = vmatprep.subr.mxu0 0.0
    %2574 = vmatpush1.msra.mxu0 0.0
    %2575 = vmatprep.subr.mxu0 0.0
    %2576 = vmatpush1.msra.mxu0 0.0
    %2577 = vmatprep.subr.mxu0 0.0
    %2578 = vmatpush1.msra.mxu0 0.0
    %2579 = vmatprep.subr.mxu0 0.0
    %2580 = vmatpush1.msra.mxu0 0.0
    %2581 = vmatprep.subr.mxu0 0.0
    %2582 = vmatpush1.msra.mxu0 0.0
    %2583 = vmatprep.mubr.f32.mxu0 0.0
    %2584 = vmatmul.mubr.f32.gmra.mrb[0].mxu0 %v2517
    %v2585 = vpop.f32.mrb[0].mxu0
    %v2586 = vadd.f32 %v2513, %v2585
    %v2587 = vpop.f32.mrb[0].mxu0
    %2588 = vdwg.mxu0
    %v2589 = vtanh.pop %v2586
    %v2590 = vmul.f32 %v2589, %v694
    %v2591 = vsel %vm320, %v2590, 0.0
    %2592 = vadd.xlane.f32.xlu0 %v2591
    %v2593 = vpop.xlane.xlu0 %2592
    %v2594 = vrot.slane %v2593, 4
    %v2595 = vmax.f32 %v2593, %v2594
    %v2596 = vrot.slane %v2595, 2
    %v2597 = vmax.f32 %v2595, %v2596
    %v2598 = vrot.slane %v2597, 1
    %v2599 = vmax.f32 %v2597, %v2598
    %v2600 = vsub.f32 %v2593, %v2599
    %v2601 = vmul.f32 %v2600, 1.442695
    %v2602 = vpow.pop %v2601
    %v2603 = vrot.slane %v2602, 4
    %v2604 = vadd.f32 %v2602, %v2603
    %v2605 = vrot.slane %v2604, 2
    %v2606 = vadd.f32 %v2604, %v2605
    %v2607 = vrot.slane %v2606, 1
    %v2608 = vadd.f32 %v2606, %v2607
    %v2609 = vrcp.pop %v2608
    %v2610 = vmul.f32 %v2602, %v2609
    %v2611 = vmul.f32 %v2610, %v2511
    %v2612 = vsel %vm320, %v2611, 0.0
    %v2613 = vrot.slane %v2612, 4
    %v2614 = vadd.f32 %v2612, %v2613
    %v2615 = vrot.slane %v2614, 2
    %v2616 = vadd.f32 %v2614, %v2615
    %v2617 = vrot.slane %v2616, 1
    %v2618 = vadd.f32 %v2616, %v2617
    %v2620 = vsel %vm320, %v2618, 0
    %2622 = vmatprep.subr.mxu0 0.0
    %2623 = vmatpush1.msra.mxu0 %v149
    %2624 = vmatprep.subr.mxu0 0.0
    %2625 = vmatpush1.msra.mxu0 %v154
    %2626 = vmatprep.subr.mxu0 0.0
    %2627 = vmatpush1.msra.mxu0 0.0
    %2628 = vmatprep.subr.mxu0 0.0
    %2629 = vmatpush1.msra.mxu0 0.0
    %2630 = vmatprep.subr.mxu0 0.0
    %2631 = vmatpush1.msra.mxu0 0.0
    %2632 = vmatprep.subr.mxu0 0.0
    %2633 = vmatpush1.msra.mxu0 0.0
    %2634 = vmatprep.subr.mxu0 0.0
    %2635 = vmatpush1.msra.mxu0 0.0
    %2636 = vmatprep.subr.mxu0 0.0
    %2637 = vmatpush1.msra.mxu0 0.0
    %2638 = vmatprep.subr.mxu0 0.0
    %2639 = vmatpush1.msra.mxu0 0.0
    %2640 = vmatprep.subr.mxu0 0.0
    %2641 = vmatpush1.msra.mxu0 0.0
    %2642 = vmatprep.subr.mxu0 0.0
    %2643 = vmatpush1.msra.mxu0 0.0
    %2644 = vmatprep.subr.mxu0 0.0
    %2645 = vmatpush1.msra.mxu0 0.0
    %2646 = vmatprep.subr.mxu0 0.0
    %2647 = vmatpush1.msra.mxu0 0.0
    %2648 = vmatprep.subr.mxu0 0.0
    %2649 = vmatpush1.msra.mxu0 0.0
    %2650 = vmatprep.subr.mxu0 0.0
    %2651 = vmatpush1.msra.mxu0 0.0
    %2652 = vmatprep.subr.mxu0 0.0
    %2653 = vmatpush1.msra.mxu0 0.0
    %2654 = vmatprep.subr.mxu0 0.0
    %2655 = vmatpush1.msra.mxu0 0.0
    %2656 = vmatprep.subr.mxu0 0.0
    %2657 = vmatpush1.msra.mxu0 0.0
    %2658 = vmatprep.subr.mxu0 0.0
    %2659 = vmatpush1.msra.mxu0 0.0
    %2660 = vmatprep.subr.mxu0 0.0
    %2661 = vmatpush1.msra.mxu0 0.0
    %2662 = vmatprep.subr.mxu0 0.0
    %2663 = vmatpush1.msra.mxu0 0.0
    %2664 = vmatprep.subr.mxu0 0.0
    %2665 = vmatpush1.msra.mxu0 0.0
    %2666 = vmatprep.subr.mxu0 0.0
    %2667 = vmatpush1.msra.mxu0 0.0
    %2668 = vmatprep.subr.mxu0 0.0
    %2669 = vmatpush1.msra.mxu0 0.0
    %2670 = vmatprep.subr.mxu0 0.0
    %2671 = vmatpush1.msra.mxu0 0.0
    %2672 = vmatprep.subr.mxu0 0.0
    %2673 = vmatpush1.msra.mxu0 0.0
    %2674 = vmatprep.subr.mxu0 0.0
    %2675 = vmatpush1.msra.mxu0 0.0
    %2676 = vmatprep.subr.mxu0 0.0
    %2677 = vmatpush1.msra.mxu0 0.0
    %2678 = vmatprep.subr.mxu0 0.0
    %2679 = vmatpush1.msra.mxu0 0.0
    %2680 = vmatprep.subr.mxu0 0.0
    %2681 = vmatpush1.msra.mxu0 0.0
    %2682 = vmatprep.subr.mxu0 0.0
    %2683 = vmatpush1.msra.mxu0 0.0
    %2684 = vmatprep.subr.mxu0 0.0
    %2685 = vmatpush1.msra.mxu0 0.0
    %2686 = vmatprep.mubr.f32.mxu0 0.0
    %2687 = vmatmul.mubr.f32.gmra.mrb[0].mxu0 %v2620
    %v2688 = vpop.f32.mrb[0].mxu0
    %v2689 = vadd.f32 0.0, %v2688
    %v2690 = vpop.f32.mrb[0].mxu0
    %2691 = vdwg.mxu0
    %v2692 = vlaneseq
    %v2693 = vshrl.u32 %v2692, 7
    %v2694 = vsub.s32 0, %v2693
    %v2695 = vrot.slane %v2689, %v2694
    %v2696 = vadd.f32 %v2515, %v2695
    %v2697 = vsel %vm803, %v2484, 0
    %2699 = vmatprep.subr.mxu0 0.0
    %2700 = vmatpush1.msra.mxu0 %v66
    %2701 = vmatprep.subr.mxu0 0.0
    %2702 = vmatpush1.msra.mxu0 %v67
    %2703 = vmatprep.subr.mxu0 0.0
    %2704 = vmatpush1.msra.mxu0 %v68
    %2705 = vmatprep.subr.mxu0 0.0
    %2706 = vmatpush1.msra.mxu0 %v69
    %2707 = vmatprep.subr.mxu0 0.0
    %2708 = vmatpush1.msra.mxu0 0.0
    %2709 = vmatprep.subr.mxu0 0.0
    %2710 = vmatpush1.msra.mxu0 0.0
    %2711 = vmatprep.subr.mxu0 0.0
    %2712 = vmatpush1.msra.mxu0 0.0
    %2713 = vmatprep.subr.mxu0 0.0
    %2714 = vmatpush1.msra.mxu0 0.0
    %2715 = vmatprep.subr.mxu0 0.0
    %2716 = vmatpush1.msra.mxu0 0.0
    %2717 = vmatprep.subr.mxu0 0.0
    %2718 = vmatpush1.msra.mxu0 0.0
    %2719 = vmatprep.subr.mxu0 0.0
    %2720 = vmatpush1.msra.mxu0 0.0
    %2721 = vmatprep.subr.mxu0 0.0
    %2722 = vmatpush1.msra.mxu0 0.0
    %2723 = vmatprep.subr.mxu0 0.0
    %2724 = vmatpush1.msra.mxu0 0.0
    %2725 = vmatprep.subr.mxu0 0.0
    %2726 = vmatpush1.msra.mxu0 0.0
    %2727 = vmatprep.subr.mxu0 0.0
    %2728 = vmatpush1.msra.mxu0 0.0
    %2729 = vmatprep.subr.mxu0 0.0
    %2730 = vmatpush1.msra.mxu0 0.0
    %2731 = vmatprep.subr.mxu0 0.0
    %2732 = vmatpush1.msra.mxu0 0.0
    %2733 = vmatprep.subr.mxu0 0.0
    %2734 = vmatpush1.msra.mxu0 0.0
    %2735 = vmatprep.subr.mxu0 0.0
    %2736 = vmatpush1.msra.mxu0 0.0
    %2737 = vmatprep.subr.mxu0 0.0
    %2738 = vmatpush1.msra.mxu0 0.0
    %2739 = vmatprep.subr.mxu0 0.0
    %2740 = vmatpush1.msra.mxu0 0.0
    %2741 = vmatprep.subr.mxu0 0.0
    %2742 = vmatpush1.msra.mxu0 0.0
    %2743 = vmatprep.subr.mxu0 0.0
    %2744 = vmatpush1.msra.mxu0 0.0
    %2745 = vmatprep.subr.mxu0 0.0
    %2746 = vmatpush1.msra.mxu0 0.0
    %2747 = vmatprep.subr.mxu0 0.0
    %2748 = vmatpush1.msra.mxu0 0.0
    %2749 = vmatprep.subr.mxu0 0.0
    %2750 = vmatpush1.msra.mxu0 0.0
    %2751 = vmatprep.subr.mxu0 0.0
    %2752 = vmatpush1.msra.mxu0 0.0
    %2753 = vmatprep.subr.mxu0 0.0
    %2754 = vmatpush1.msra.mxu0 0.0
    %2755 = vmatprep.subr.mxu0 0.0
    %2756 = vmatpush1.msra.mxu0 0.0
    %2757 = vmatprep.subr.mxu0 0.0
    %2758 = vmatpush1.msra.mxu0 0.0
    %2759 = vmatprep.subr.mxu0 0.0
    %2760 = vmatpush1.msra.mxu0 0.0
    %2761 = vmatprep.subr.mxu0 0.0
    %2762 = vmatpush1.msra.mxu0 0.0
    %2763 = vmatprep.mubr.f32.mxu0 0.0
    %2764 = vmatmul.mubr.f32.gmra.mrb[0].mxu0 %v2697
    %v2765 = vpop.f32.mrb[0].mxu0
    %v2766 = vadd.f32 0.0, %v2765
    %v2767 = vpop.f32.mrb[0].mxu0
    %2768 = vdwg.mxu0
    %v2769 = vadd.f32 %v2696, %v2766
    %v2770 = vxor.u32 %v2769, 2147483648
    %v2771 = vmul.f32 %v2770, 1.442695
    %v2772 = vpow.pop %v2771
    %v2773 = vadd.f32 %v2772, 1.0
    %v2774 = vrcp.pop %v2773
    %v2775 = vmul.f32 1.0, %v2774
    %v2776 = vtanh.pop %v2769
    %v2777 = vmul.f32 %v2775, %v2484
    %2779 = vrot.lane.b32.xlu0 %v2776, 64
    %v2780 = vpop.permute.xlu0 %2779
    %v2782 = vmul.f32 %v2775, %v2780
    %2784 = vrot.lane.b32.xlu0 %v2782, 32
    %v2785 = vpop.permute.xlu0 %2784
    %v2787 = vadd.f32 %v2777, %v2785
    %v2788 = vtanh.pop %v2787
    %2790 = vrot.lane.b32.xlu0 %v2788, 64
    %v2791 = vpop.permute.xlu0 %2790
    %v2793 = vmul.f32 %v2775, %v2791
    %2795 = vrot.lane.b32.xlu0 %v2793, 32
    %v2796 = vpop.permute.xlu0 %2795
    %v2798 = vsel %vm803, %v2796, %v2787
    %v2799 = vmul.f32 %v2793, %v912
    %2801 = vrot.lane.b32.xlu0 %v2799, 32
    %v2802 = vpop.permute.xlu0 %2801
    %v2804 = vsel %vm803, %v2802, 0.0
    %2805 = vadd.xlane.f32.xlu0 %v2804
    %v2806 = vpop.xlane.xlu0 %2805
    %v2807 = vmul.f32 %v2618, %v304
    %v2808 = vsel %vm923, %v2807, 0.0
    %2809 = vadd.xlane.f32.xlu0 %v2808
    %v2810 = vpop.xlane.xlu0 %2809
    %v2811 = vadd.f32 %v2810, %v305
    %v2812 = vlaneseq
    %v2813 = vshrl.u32 %v2812, 7
    %v2814 = vsub.s32 0, %v2813
    %v2815 = vrot.slane %v2811, %v2814
    %v2816 = vadd.f32 %v2806, %v2815
    %vm2817 = vcmp.eq.s32.totalorder %v611, 6
    %2819 = vset.pattern.permute.xlu0 0
    %2820 = vperm.xlu0 %2819, %v2816
    %v2821 = vpop.permute.xlu0 %2820
    %v2823 = vsel %vm2817, %v2821, %v2509
    %s2824 = scalar_lea.vmem %s0, 56
    %v2825 = vld [vmem:[%s2824] sm:$0xff]
    %s2826 = scalar_lea.vmem [#allocation2], 56
    %v2827 = vld [vmem:[%s2826] sm:$0xff]
    %s2828 = scalar_lea.vmem [#allocation3], 56
    %v2829 = vld [vmem:[%s2828] sm:$0xff]
    %v2831 = vsel %vm615, %v2798, 0
    %2833 = vmatprep.subr.mxu0 0.0
    %2834 = vmatpush1.msra.mxu0 %v49
    %2835 = vmatprep.subr.mxu0 0.0
    %2836 = vmatpush1.msra.mxu0 %v50
    %2837 = vmatprep.subr.mxu0 0.0
    %2838 = vmatpush1.msra.mxu0 %v51
    %2839 = vmatprep.subr.mxu0 0.0
    %2840 = vmatpush1.msra.mxu0 %v52
    %2841 = vmatprep.subr.mxu0 0.0
    %2842 = vmatpush1.msra.mxu0 %v53
    %2843 = vmatprep.subr.mxu0 0.0
    %2844 = vmatpush1.msra.mxu0 %v54
    %2845 = vmatprep.subr.mxu0 0.0
    %2846 = vmatpush1.msra.mxu0 %v55
    %2847 = vmatprep.subr.mxu0 0.0
    %2848 = vmatpush1.msra.mxu0 %v56
    %2849 = vmatprep.subr.mxu0 0.0
    %2850 = vmatpush1.msra.mxu0 0.0
    %2851 = vmatprep.subr.mxu0 0.0
    %2852 = vmatpush1.msra.mxu0 0.0
    %2853 = vmatprep.subr.mxu0 0.0
    %2854 = vmatpush1.msra.mxu0 0.0
    %2855 = vmatprep.subr.mxu0 0.0
    %2856 = vmatpush1.msra.mxu0 0.0
    %2857 = vmatprep.subr.mxu0 0.0
    %2858 = vmatpush1.msra.mxu0 0.0
    %2859 = vmatprep.subr.mxu0 0.0
    %2860 = vmatpush1.msra.mxu0 0.0
    %2861 = vmatprep.subr.mxu0 0.0
    %2862 = vmatpush1.msra.mxu0 0.0
    %2863 = vmatprep.subr.mxu0 0.0
    %2864 = vmatpush1.msra.mxu0 0.0
    %2865 = vmatprep.subr.mxu0 0.0
    %2866 = vmatpush1.msra.mxu0 0.0
    %2867 = vmatprep.subr.mxu0 0.0
    %2868 = vmatpush1.msra.mxu0 0.0
    %2869 = vmatprep.subr.mxu0 0.0
    %2870 = vmatpush1.msra.mxu0 0.0
    %2871 = vmatprep.subr.mxu0 0.0
    %2872 = vmatpush1.msra.mxu0 0.0
    %2873 = vmatprep.subr.mxu0 0.0
    %2874 = vmatpush1.msra.mxu0 0.0
    %2875 = vmatprep.subr.mxu0 0.0
    %2876 = vmatpush1.msra.mxu0 0.0
    %2877 = vmatprep.subr.mxu0 0.0
    %2878 = vmatpush1.msra.mxu0 0.0
    %2879 = vmatprep.subr.mxu0 0.0
    %2880 = vmatpush1.msra.mxu0 0.0
    %2881 = vmatprep.subr.mxu0 0.0
    %2882 = vmatpush1.msra.mxu0 0.0
    %2883 = vmatprep.subr.mxu0 0.0
    %2884 = vmatpush1.msra.mxu0 0.0
    %2885 = vmatprep.subr.mxu0 0.0
    %2886 = vmatpush1.msra.mxu0 0.0
    %2887 = vmatprep.subr.mxu0 0.0
    %2888 = vmatpush1.msra.mxu0 0.0
    %2889 = vmatprep.subr.mxu0 0.0
    %2890 = vmatpush1.msra.mxu0 0.0
    %2891 = vmatprep.subr.mxu0 0.0
    %2892 = vmatpush1.msra.mxu0 0.0
    %2893 = vmatprep.subr.mxu0 0.0
    %2894 = vmatpush1.msra.mxu0 0.0
    %2895 = vmatprep.subr.mxu0 0.0
    %2896 = vmatpush1.msra.mxu0 0.0
    %2897 = vmatprep.mubr.f32.mxu0 0.0
    %2898 = vmatmul.mubr.f32.gmra.mrb[0].mxu0 %v2831
    %v2899 = vpop.f32.mrb[0].mxu0
    %v2900 = vadd.f32 %v2827, %v2899
    %v2901 = vpop.f32.mrb[0].mxu0
    %2902 = vdwg.mxu0
    %v2903 = vtanh.pop %v2900
    %v2904 = vmul.f32 %v2903, %v694
    %v2905 = vsel %vm320, %v2904, 0.0
    %2906 = vadd.xlane.f32.xlu0 %v2905
    %v2907 = vpop.xlane.xlu0 %2906
    %v2908 = vrot.slane %v2907, 4
    %v2909 = vmax.f32 %v2907, %v2908
    %v2910 = vrot.slane %v2909, 2
    %v2911 = vmax.f32 %v2909, %v2910
    %v2912 = vrot.slane %v2911, 1
    %v2913 = vmax.f32 %v2911, %v2912
    %v2914 = vsub.f32 %v2907, %v2913
    %v2915 = vmul.f32 %v2914, 1.442695
    %v2916 = vpow.pop %v2915
    %v2917 = vrot.slane %v2916, 4
    %v2918 = vadd.f32 %v2916, %v2917
    %v2919 = vrot.slane %v2918, 2
    %v2920 = vadd.f32 %v2918, %v2919
    %v2921 = vrot.slane %v2920, 1
    %v2922 = vadd.f32 %v2920, %v2921
    %v2923 = vrcp.pop %v2922
    %v2924 = vmul.f32 %v2916, %v2923
    %v2925 = vmul.f32 %v2924, %v2825
    %v2926 = vsel %vm320, %v2925, 0.0
    %v2927 = vrot.slane %v2926, 4
    %v2928 = vadd.f32 %v2926, %v2927
    %v2929 = vrot.slane %v2928, 2
    %v2930 = vadd.f32 %v2928, %v2929
    %v2931 = vrot.slane %v2930, 1
    %v2932 = vadd.f32 %v2930, %v2931
    %v2934 = vsel %vm320, %v2932, 0
    %2936 = vmatprep.subr.mxu0 0.0
    %2937 = vmatpush1.msra.mxu0 %v149
    %2938 = vmatprep.subr.mxu0 0.0
    %2939 = vmatpush1.msra.mxu0 %v154
    %2940 = vmatprep.subr.mxu0 0.0
    %2941 = vmatpush1.msra.mxu0 0.0
    %2942 = vmatprep.subr.mxu0 0.0
    %2943 = vmatpush1.msra.mxu0 0.0
    %2944 = vmatprep.subr.mxu0 0.0
    %2945 = vmatpush1.msra.mxu0 0.0
    %2946 = vmatprep.subr.mxu0 0.0
    %2947 = vmatpush1.msra.mxu0 0.0
    %2948 = vmatprep.subr.mxu0 0.0
    %2949 = vmatpush1.msra.mxu0 0.0
    %2950 = vmatprep.subr.mxu0 0.0
    %2951 = vmatpush1.msra.mxu0 0.0
    %2952 = vmatprep.subr.mxu0 0.0
    %2953 = vmatpush1.msra.mxu0 0.0
    %2954 = vmatprep.subr.mxu0 0.0
    %2955 = vmatpush1.msra.mxu0 0.0
    %2956 = vmatprep.subr.mxu0 0.0
    %2957 = vmatpush1.msra.mxu0 0.0
    %2958 = vmatprep.subr.mxu0 0.0
    %2959 = vmatpush1.msra.mxu0 0.0
    %2960 = vmatprep.subr.mxu0 0.0
    %2961 = vmatpush1.msra.mxu0 0.0
    %2962 = vmatprep.subr.mxu0 0.0
    %2963 = vmatpush1.msra.mxu0 0.0
    %2964 = vmatprep.subr.mxu0 0.0
    %2965 = vmatpush1.msra.mxu0 0.0
    %2966 = vmatprep.subr.mxu0 0.0
    %2967 = vmatpush1.msra.mxu0 0.0
    %2968 = vmatprep.subr.mxu0 0.0
    %2969 = vmatpush1.msra.mxu0 0.0
    %2970 = vmatprep.subr.mxu0 0.0
    %2971 = vmatpush1.msra.mxu0 0.0
    %2972 = vmatprep.subr.mxu0 0.0
    %2973 = vmatpush1.msra.mxu0 0.0
    %2974 = vmatprep.subr.mxu0 0.0
    %2975 = vmatpush1.msra.mxu0 0.0
    %2976 = vmatprep.subr.mxu0 0.0
    %2977 = vmatpush1.msra.mxu0 0.0
    %2978 = vmatprep.subr.mxu0 0.0
    %2979 = vmatpush1.msra.mxu0 0.0
    %2980 = vmatprep.subr.mxu0 0.0
    %2981 = vmatpush1.msra.mxu0 0.0
    %2982 = vmatprep.subr.mxu0 0.0
    %2983 = vmatpush1.msra.mxu0 0.0
    %2984 = vmatprep.subr.mxu0 0.0
    %2985 = vmatpush1.msra.mxu0 0.0
    %2986 = vmatprep.subr.mxu0 0.0
    %2987 = vmatpush1.msra.mxu0 0.0
    %2988 = vmatprep.subr.mxu0 0.0
    %2989 = vmatpush1.msra.mxu0 0.0
    %2990 = vmatprep.subr.mxu0 0.0
    %2991 = vmatpush1.msra.mxu0 0.0
    %2992 = vmatprep.subr.mxu0 0.0
    %2993 = vmatpush1.msra.mxu0 0.0
    %2994 = vmatprep.subr.mxu0 0.0
    %2995 = vmatpush1.msra.mxu0 0.0
    %2996 = vmatprep.subr.mxu0 0.0
    %2997 = vmatpush1.msra.mxu0 0.0
    %2998 = vmatprep.subr.mxu0 0.0
    %2999 = vmatpush1.msra.mxu0 0.0
    %3000 = vmatprep.mubr.f32.mxu0 0.0
    %3001 = vmatmul.mubr.f32.gmra.mrb[0].mxu0 %v2934
    %v3002 = vpop.f32.mrb[0].mxu0
    %v3003 = vadd.f32 0.0, %v3002
    %v3004 = vpop.f32.mrb[0].mxu0
    %3005 = vdwg.mxu0
    %v3006 = vlaneseq
    %v3007 = vshrl.u32 %v3006, 7
    %v3008 = vsub.s32 0, %v3007
    %v3009 = vrot.slane %v3003, %v3008
    %v3010 = vadd.f32 %v2829, %v3009
    %v3011 = vsel %vm803, %v2798, 0
    %3013 = vmatprep.subr.mxu0 0.0
    %3014 = vmatpush1.msra.mxu0 %v66
    %3015 = vmatprep.subr.mxu0 0.0
    %3016 = vmatpush1.msra.mxu0 %v67
    %3017 = vmatprep.subr.mxu0 0.0
    %3018 = vmatpush1.msra.mxu0 %v68
    %3019 = vmatprep.subr.mxu0 0.0
    %3020 = vmatpush1.msra.mxu0 %v69
    %3021 = vmatprep.subr.mxu0 0.0
    %3022 = vmatpush1.msra.mxu0 0.0
    %3023 = vmatprep.subr.mxu0 0.0
    %3024 = vmatpush1.msra.mxu0 0.0
    %3025 = vmatprep.subr.mxu0 0.0
    %3026 = vmatpush1.msra.mxu0 0.0
    %3027 = vmatprep.subr.mxu0 0.0
    %3028 = vmatpush1.msra.mxu0 0.0
    %3029 = vmatprep.subr.mxu0 0.0
    %3030 = vmatpush1.msra.mxu0 0.0
    %3031 = vmatprep.subr.mxu0 0.0
    %3032 = vmatpush1.msra.mxu0 0.0
    %3033 = vmatprep.subr.mxu0 0.0
    %3034 = vmatpush1.msra.mxu0 0.0
    %3035 = vmatprep.subr.mxu0 0.0
    %3036 = vmatpush1.msra.mxu0 0.0
    %3037 = vmatprep.subr.mxu0 0.0
    %3038 = vmatpush1.msra.mxu0 0.0
    %3039 = vmatprep.subr.mxu0 0.0
    %3040 = vmatpush1.msra.mxu0 0.0
    %3041 = vmatprep.subr.mxu0 0.0
    %3042 = vmatpush1.msra.mxu0 0.0
    %3043 = vmatprep.subr.mxu0 0.0
    %3044 = vmatpush1.msra.mxu0 0.0
    %3045 = vmatprep.subr.mxu0 0.0
    %3046 = vmatpush1.msra.mxu0 0.0
    %3047 = vmatprep.subr.mxu0 0.0
    %3048 = vmatpush1.msra.mxu0 0.0
    %3049 = vmatprep.subr.mxu0 0.0
    %3050 = vmatpush1.msra.mxu0 0.0
    %3051 = vmatprep.subr.mxu0 0.0
    %3052 = vmatpush1.msra.mxu0 0.0
    %3053 = vmatprep.subr.mxu0 0.0
    %3054 = vmatpush1.msra.mxu0 0.0
    %3055 = vmatprep.subr.mxu0 0.0
    %3056 = vmatpush1.msra.mxu0 0.0
    %3057 = vmatprep.subr.mxu0 0.0
    %3058 = vmatpush1.msra.mxu0 0.0
    %3059 = vmatprep.subr.mxu0 0.0
    %3060 = vmatpush1.msra.mxu0 0.0
    %3061 = vmatprep.subr.mxu0 0.0
    %3062 = vmatpush1.msra.mxu0 0.0
    %3063 = vmatprep.subr.mxu0 0.0
    %3064 = vmatpush1.msra.mxu0 0.0
    %3065 = vmatprep.subr.mxu0 0.0
    %3066 = vmatpush1.msra.mxu0 0.0
    %3067 = vmatprep.subr.mxu0 0.0
    %3068 = vmatpush1.msra.mxu0 0.0
    %3069 = vmatprep.subr.mxu0 0.0
    %3070 = vmatpush1.msra.mxu0 0.0
    %3071 = vmatprep.subr.mxu0 0.0
    %3072 = vmatpush1.msra.mxu0 0.0
    %3073 = vmatprep.subr.mxu0 0.0
    %3074 = vmatpush1.msra.mxu0 0.0
    %3075 = vmatprep.subr.mxu0 0.0
    %3076 = vmatpush1.msra.mxu0 0.0
    %3077 = vmatprep.mubr.f32.mxu0 0.0
    %3078 = vmatmul.mubr.f32.gmra.mrb[0].mxu0 %v3011
    %v3079 = vpop.f32.mrb[0].mxu0
    %v3080 = vadd.f32 0.0, %v3079
    %v3081 = vpop.f32.mrb[0].mxu0
    %3082 = vdwg.mxu0
    %v3083 = vadd.f32 %v3010, %v3080
    %v3084 = vxor.u32 %v3083, 2147483648
    %v3085 = vmul.f32 %v3084, 1.442695
    %v3086 = vpow.pop %v3085
    %v3087 = vadd.f32 %v3086, 1.0
    %v3088 = vrcp.pop %v3087
    %v3089 = vmul.f32 1.0, %v3088
    %v3090 = vtanh.pop %v3083
    %v3091 = vmul.f32 %v3089, %v2798
    %3093 = vrot.lane.b32.xlu0 %v3090, 64
    %v3094 = vpop.permute.xlu0 %3093
    %v3096 = vmul.f32 %v3089, %v3094
    %3098 = vrot.lane.b32.xlu0 %v3096, 32
    %v3099 = vpop.permute.xlu0 %3098
    %v3101 = vadd.f32 %v3091, %v3099
    %v3102 = vtanh.pop %v3101
    %3104 = vrot.lane.b32.xlu0 %v3102, 64
    %v3105 = vpop.permute.xlu0 %3104
    %v3107 = vmul.f32 %v3089, %v3105
    %v3108 = vmul.f32 %v3107, %v912
    %3110 = vrot.lane.b32.xlu0 %v3108, 32
    %v3111 = vpop.permute.xlu0 %3110
    %v3113 = vsel %vm803, %v3111, 0.0
    %3114 = vadd.xlane.f32.xlu0 %v3113
    %v3115 = vpop.xlane.xlu0 %3114
    %v3116 = vmul.f32 %v2932, %v304
    %v3117 = vsel %vm923, %v3116, 0.0
    %3118 = vadd.xlane.f32.xlu0 %v3117
    %v3119 = vpop.xlane.xlu0 %3118
    %v3120 = vadd.f32 %v3119, %v305
    %v3121 = vlaneseq
    %v3122 = vshrl.u32 %v3121, 7
    %v3123 = vsub.s32 0, %v3122
    %v3124 = vrot.slane %v3120, %v3123
    %v3125 = vadd.f32 %v3115, %v3124
    %vm3126 = vcmp.eq.s32.totalorder %v611, 7
    %3128 = vset.pattern.permute.xlu0 0
    %3129 = vperm.xlu0 %3128, %v3125
    %v3130 = vpop.permute.xlu0 %3129
    %v3132 = vsel %vm3126, %v3130, %v2823
    %vm3133 = vcmask 64512
    %3134 = vst.msk [vmem:[#allocation6] sm:$0xff] %vm3133, %v3132
    // Predicated region
    $region54: #{tpu_custom_call.1} parent=1 // pred_check
      _
    $region55: #{tpu_custom_call.1} parent=1 // pred_check_branch
      %3136 = sbr.rel (0) target = $region57
    $region56: #{tpu_custom_call.1} parent=1 // pred_region
      %s3138 = ssub.s32 128, 128
      %3139 = vsyncadd [#allocation7], %s3138
      %s3141 = sshll.u32 [#allocation6], 4
      %s3142 = int_to_ptr.vmem [resolvable:$true] %s3141
      %3144 = dma.vmem_to_hbm [thread:$0]  %s3142, 128, %s13, [#allocation7]
    $region57: #{tpu_custom_call.1} parent=1 // pred_fallthru
      _
    // Predicated region
    $region58: #{tpu_custom_call.1} parent=1 // pred_check
      _
    $region59: #{tpu_custom_call.1} parent=1 // pred_check_branch
      %3146 = sbr.rel (0) target = $region61
    $region60: #{tpu_custom_call.1} parent=1 // pred_region
      %3147 = dma.done [#allocation7], 128
    $region61: #{tpu_custom_call.1} parent=1 // pred_fallthru
      _
    %3148 = vsyncpa [#allocation7], 1

</llo_original>
